<compile_context>
chip_gen: v7x
topology: tpu7x:2x2x1
jax: 0.10.0
libtpu: 0.0.40
codegen_flags: <defaults>
</compile_context>

<pallas_src>
import math
from functools import partial

import jax
import jax.numpy as jnp
from jax.experimental import pallas as pl

# ---------------- small synthetic BERT config ----------------
BATCH = 2
SEQ = 8
HIDDEN = 32
NUM_HEADS = 4
HEAD_DIM = HIDDEN // NUM_HEADS
INTERMEDIATE = 64
NUM_LAYERS = 2
VOCAB = 50
MAX_POS = 16
TYPE_VOCAB = 2
NUM_CLASSES = 1
LOGITS_PAD = 128          # lane-dense output slab; real logits = columns [:NUM_CLASSES]
LN_EPS = 1e-12


def _layer_norm(x, g, b):
    mu = jnp.mean(x, axis=-1, keepdims=True)
    var = jnp.mean(jnp.square(x - mu), axis=-1, keepdims=True)
    return (x - mu) * jax.lax.rsqrt(var + LN_EPS) * g + b


def _gelu(x):
    # TODO(synk): BERT uses the exact erf-based GELU; tanh approximation used
    # here for a guaranteed Mosaic lowering (difference ~1e-3).
    return 0.5 * x * (1.0 + jnp.tanh(0.7978845608028654 * (x + 0.044715 * x * x * x)))


# ---------------- single fused Pallas kernel ----------------
def bert_fused_kernel(data_ref, lp_ref, gp_ref,
                      wqkv_ref, wo_ref, w1_ref, w2_ref, wp_ref, wf_ref,
                      o_ref, *, num_layers, num_heads, batch, seq, hidden, inter):
    H = hidden
    B = batch
    M = B * seq
    DH = H // num_heads
    scale = 1.0 / math.sqrt(DH)

    gp = gp_ref[...]                      # (8, 128) f32 global slab
    data = data_ref[...]                  # (M + B, H) f32: activations + packed mask rows

    # Embedding LayerNorm (f32) and additive attention-mask bias.
    x = _layer_norm(data[0:M, :], gp[0:1, :H], gp[1:2, :H])          # (M, H)
    mask = data[M:M + B, 0:seq].reshape(B, 1, seq)                   # (B, 1, S)

    # Static layer loop: all stacked weights stay resident in VMEM.
    for l in range(num_layers):
        lp = lp_ref[l]                    # (8, 128) f32 per-layer slab
        bqkv = lp[0:1, 0:3 * H]
        bo = lp[1:2, 0:H]
        ln1g = lp[2:3, 0:H]
        ln1b = lp[3:4, 0:H]
        b1 = lp[4:5, 0:inter]
        b2 = lp[5:6, 0:H]
        ln2g = lp[6:7, 0:H]
        ln2b = lp[7:8, 0:H]

        # Fused QKV: one 2D matmul, K=H=32, N=3H=96 live lanes.
        x_bf = x.astype(jnp.bfloat16)
        qkv = jnp.dot(x_bf, wqkv_ref[l], preferred_element_type=jnp.float32) + bqkv
        qkv = qkv.astype(jnp.bfloat16).reshape(B, seq, 3 * H)        # leading split only

        # Attention batched over B; static unroll over the 4 heads with lane
        # slices of the loaded qkv value (no sublane slices, no broadcast of x).
        ctx_heads = []
        for n in range(num_heads):
            qn = qkv[:, :, n * DH:(n + 1) * DH]                      # (B, S, DH) bf16
            kn = qkv[:, :, H + n * DH:H + (n + 1) * DH]
            vn = qkv[:, :, 2 * H + n * DH:2 * H + (n + 1) * DH]

            s = jnp.einsum('bqd,bkd->bqk', qn, kn,
                           preferred_element_type=jnp.float32) * scale + mask
            s = s - jnp.max(s, axis=-1, keepdims=True)
            p = jnp.exp(s)
            p = p / jnp.sum(p, axis=-1, keepdims=True)               # exact softmax
            ctx_heads.append(jnp.einsum('bqk,bkd->bqd', p.astype(jnp.bfloat16), vn,
                                        preferred_element_type=jnp.float32))

        ctx = jnp.concatenate(ctx_heads, axis=-1).reshape(M, H)      # (M, H) f32

        # Single output projection, K=H=32 (replaces NH K=8 matmuls + head-sum).
        attn = jnp.dot(ctx.astype(jnp.bfloat16), wo_ref[l],
                       preferred_element_type=jnp.float32) + bo
        h1 = _layer_norm(x + attn, ln1g, ln1b)

        f = _gelu(jnp.dot(h1.astype(jnp.bfloat16), w1_ref[l],
                          preferred_element_type=jnp.float32) + b1)
        f2 = jnp.dot(f.astype(jnp.bfloat16), w2_ref[l],
                     preferred_element_type=jnp.float32) + b2
        x = _layer_norm(h1 + f2, ln2g, ln2b)

    # [CLS] rows via one strided view -> BertPooler -> classifier head.
    cls = x.reshape(B, seq, H)[:, 0, :]                              # (B, H)
    pooled = jnp.tanh(jnp.dot(cls.astype(jnp.bfloat16), wp_ref[...],
                              preferred_element_type=jnp.float32) + gp[2:3, :H])
    # Lane-dense (B, 128) output slab; real logits are columns [:NUM_CLASSES].
    o_ref[...] = jnp.dot(pooled.astype(jnp.bfloat16), wf_ref[...],
                         preferred_element_type=jnp.float32) + gp[3:4, :]


# ---------------- wrapper ----------------
def fused_bert_pallas(data, params, batch):
    kernel = partial(bert_fused_kernel, num_layers=NUM_LAYERS, num_heads=NUM_HEADS,
                     batch=batch, seq=SEQ, hidden=HIDDEN, inter=INTERMEDIATE)
    # Single grid step: whole batch at once; default full-array VMEM blocks.
    return pl.pallas_call(
        kernel,
        out_shape=jax.ShapeDtypeStruct((batch, LOGITS_PAD), jnp.float32),
    )(data, params['lp'], params['gp'],
      params['wqkv'], params['wo'], params['w1'], params['w2'],
      params['pooler_w'], params['fc_w'])


# ---------------- parameters ----------------
def init_params(key):
    scale = 0.02
    keys = iter(jax.random.split(key, 16))

    def nrm(shape, dtype=jnp.bfloat16):
        return (scale * jax.random.normal(next(keys), shape, jnp.float32)).astype(dtype)

    fc_real = scale * jax.random.normal(next(keys), (HIDDEN, NUM_CLASSES), jnp.float32)
    fc_w = (jnp.zeros((HIDDEN, LOGITS_PAD), jnp.float32)
            .at[:, :NUM_CLASSES].set(fc_real).astype(jnp.bfloat16))

    # Per-layer tiny f32 params packed into one lane-dense slab (L, 8, 128):
    # row 0: bqkv(96)  row 1: bo(32)   row 2: ln1_g  row 3: ln1_b
    # row 4: b1(64)    row 5: b2(32)   row 6: ln2_g  row 7: ln2_b
    lp = jnp.zeros((NUM_LAYERS, 8, 128), jnp.float32)
    lp = lp.at[:, 2, :HIDDEN].set(1.0)     # ln1 gamma
    lp = lp.at[:, 6, :HIDDEN].set(1.0)     # ln2 gamma
    # biases / betas stay zero (matches the original init)

    # Global slab (8, 128): row 0 emb_ln_g, row 1 emb_ln_b, row 2 pooler_b, row 3 fc_b
    gp = jnp.zeros((8, 128), jnp.float32)
    gp = gp.at[0, :HIDDEN].set(1.0)        # embedding LN gamma

    params = {
        # embedding tables (gathered outside the kernel, kept f32)
        'word_emb': nrm((VOCAB, HIDDEN), jnp.float32),
        'pos_emb': nrm((MAX_POS, HIDDEN), jnp.float32),
        'type_emb': nrm((TYPE_VOCAB, HIDDEN), jnp.float32),
        # packed tiny-operand slabs
        'lp': lp,
        'gp': gp,
        # stacked per-layer weights (bf16 matmul operands)
        'wqkv': nrm((NUM_LAYERS, HIDDEN, 3 * HIDDEN)),  # columns = [Q | K | V], head-minor
        'wo': nrm((NUM_LAYERS, HIDDEN, HIDDEN)),
        'w1': nrm((NUM_LAYERS, HIDDEN, INTERMEDIATE)),
        'w2': nrm((NUM_LAYERS, INTERMEDIATE, HIDDEN)),
        # pooler + classifier head (fc padded to a 128-lane output slab)
        'pooler_w': nrm((HIDDEN, HIDDEN)),
        'fc_w': fc_w,
    }
    return params


# ---------------- forward (labels=None branch -> logits) ----------------
def bert_multilabel_forward(params, input_ids, token_type_ids=None, attention_mask=None):
    B, S = input_ids.shape
    if token_type_ids is None:
        token_type_ids = jnp.zeros_like(input_ids)
    if attention_mask is None:
        attention_mask = jnp.ones((B, S), jnp.float32)

    # Embedding gathers stay in plain XLA; everything downstream is one kernel.
    # TODO(synk): data-dependent embedding gather is left to XLA (no clean
    # Pallas equivalent at this size).
    emb = (params['word_emb'][input_ids]
           + params['pos_emb'][None, :S, :]
           + params['type_emb'][token_type_ids])                      # (B, S, H) f32

    # Pack the additive attention-mask bias into B extra rows appended below
    # the flattened activations (lanes [0:S]), so it rides the same DMA.
    mask_bias = (1.0 - attention_mask.astype(jnp.float32)) * -10000.0  # (B, S)
    mask_rows = jnp.zeros((B, HIDDEN), jnp.float32).at[:, :S].set(mask_bias)
    data = jnp.concatenate([emb.reshape(B * S, HIDDEN), mask_rows], axis=0)

    logits_pad = fused_bert_pallas(data, params, batch=B)
    # TODO(synk): training path (BCEWithLogitsLoss when labels is not None) not implemented.
    return logits_pad[:, :NUM_CLASSES]


if __name__ == "__main__":
    key = jax.random.PRNGKey(0)
    k_param, k_ids = jax.random.split(key)

    params = init_params(k_param)
    input_ids = jax.random.randint(k_ids, (BATCH, SEQ), 0, VOCAB, dtype=jnp.int32)
    token_type_ids = jnp.concatenate(
        [jnp.zeros((BATCH, SEQ // 2), jnp.int32), jnp.ones((BATCH, SEQ // 2), jnp.int32)],
        axis=1)
    attention_mask = jnp.array(
        [[1] * SEQ, [1] * (SEQ - 2) + [0, 0]], dtype=jnp.float32)

    logits = bert_multilabel_forward(params, input_ids, token_type_ids, attention_mask)
    logits = jax.block_until_ready(logits)
    assert logits.shape == (BATCH, NUM_CLASSES) and logits.dtype == jnp.float32
    assert bool(jnp.all(jnp.isfinite(logits)))
    print("KERNEL_OK")
</pallas_src>

<mosaic_0001>
module attributes {stable_mosaic.version = 11 : i64} {
  func.func @bert_fused_kernel(%arg0: memref<18x32xf32, #tpu.memory_space<vmem>>, %arg1: memref<2x8x128xf32, #tpu.memory_space<vmem>>, %arg2: memref<8x128xf32, #tpu.memory_space<vmem>>, %arg3: memref<2x32x96xbf16, #tpu.memory_space<vmem>>, %arg4: memref<2x32x32xbf16, #tpu.memory_space<vmem>>, %arg5: memref<2x32x64xbf16, #tpu.memory_space<vmem>>, %arg6: memref<2x64x32xbf16, #tpu.memory_space<vmem>>, %arg7: memref<32x32xbf16, #tpu.memory_space<vmem>>, %arg8: memref<32x128xbf16, #tpu.memory_space<vmem>>, %arg9: memref<2x128xf32, #tpu.memory_space<vmem>>) attributes {dimension_semantics = [], scalar_prefetch = 0 : i64, scratch_operands = 0 : i64, tpu.core_type = #tpu.core_type<tc>} {
    %c0 = arith.constant 0 : index
    %c0_0 = arith.constant 0 : index
    %0 = vector.load %arg2[%c0, %c0_0] : memref<8x128xf32, #tpu.memory_space<vmem>>, vector<8x128xf32>
    %c0_1 = arith.constant 0 : index
    %c0_2 = arith.constant 0 : index
    %1 = vector.load %arg0[%c0_1, %c0_2] : memref<18x32xf32, #tpu.memory_space<vmem>>, vector<18x32xf32>
    %2 = vector.extract_strided_slice %1 {offsets = [0, 0], sizes = [16, 32], strides = [1, 1]} : vector<18x32xf32> to vector<16x32xf32>
    %3 = vector.extract_strided_slice %0 {offsets = [0, 0], sizes = [1, 32], strides = [1, 1]} : vector<8x128xf32> to vector<1x32xf32>
    %4 = vector.extract_strided_slice %0 {offsets = [1, 0], sizes = [1, 32], strides = [1, 1]} : vector<8x128xf32> to vector<1x32xf32>
    %cst = arith.constant dense<0.000000e+00> : vector<16xf32>
    %5 = vector.multi_reduction <add>, %2, %cst [1] : vector<16x32xf32> to vector<16xf32>
    %6 = vector.shape_cast %5 : vector<16xf32> to vector<16x1xf32>
    %cst_3 = arith.constant 3.200000e+01 : f32
    %7 = vector.broadcast %cst_3 : f32 to vector<16x1xf32>
    %8 = arith.divf %6, %7 : vector<16x1xf32>
    %9 = vector.broadcast %8 : vector<16x1xf32> to vector<16x32xf32>
    %10 = arith.subf %2, %9 : vector<16x32xf32>
    %11 = arith.mulf %10, %10 : vector<16x32xf32>
    %cst_4 = arith.constant dense<0.000000e+00> : vector<16xf32>
    %12 = vector.multi_reduction <add>, %11, %cst_4 [1] : vector<16x32xf32> to vector<16xf32>
    %13 = vector.shape_cast %12 : vector<16xf32> to vector<16x1xf32>
    %cst_5 = arith.constant 3.200000e+01 : f32
    %14 = vector.broadcast %cst_5 : f32 to vector<16x1xf32>
    %15 = arith.divf %13, %14 : vector<16x1xf32>
    %16 = vector.broadcast %8 : vector<16x1xf32> to vector<16x32xf32>
    %17 = arith.subf %2, %16 : vector<16x32xf32>
    %cst_6 = arith.constant 9.99999996E-13 : f32
    %18 = vector.broadcast %cst_6 : f32 to vector<16x1xf32>
    %19 = arith.addf %15, %18 : vector<16x1xf32>
    %20 = math.rsqrt %19 : vector<16x1xf32>
    %21 = vector.broadcast %20 : vector<16x1xf32> to vector<16x32xf32>
    %22 = arith.mulf %17, %21 : vector<16x32xf32>
    %23 = vector.broadcast %3 : vector<1x32xf32> to vector<16x32xf32>
    %24 = arith.mulf %22, %23 : vector<16x32xf32>
    %25 = vector.broadcast %4 : vector<1x32xf32> to vector<16x32xf32>
    %26 = arith.addf %24, %25 : vector<16x32xf32>
    %27 = vector.extract_strided_slice %1 {offsets = [16, 0], sizes = [2, 8], strides = [1, 1]} : vector<18x32xf32> to vector<2x8xf32>
    %28 = vector.shape_cast %27 : vector<2x8xf32> to vector<2x1x8xf32>
    %c0_7 = arith.constant 0 : index
    %c0_8 = arith.constant 0 : index
    %c0_9 = arith.constant 0 : index
    %29 = vector.load %arg1[%c0_7, %c0_8, %c0_9] : memref<2x8x128xf32, #tpu.memory_space<vmem>>, vector<1x8x128xf32>
    %30 = vector.shape_cast %29 : vector<1x8x128xf32> to vector<8x128xf32>
    %31 = vector.extract_strided_slice %30 {offsets = [0, 0], sizes = [1, 96], strides = [1, 1]} : vector<8x128xf32> to vector<1x96xf32>
    %32 = vector.extract_strided_slice %30 {offsets = [1, 0], sizes = [1, 32], strides = [1, 1]} : vector<8x128xf32> to vector<1x32xf32>
    %33 = vector.extract_strided_slice %30 {offsets = [2, 0], sizes = [1, 32], strides = [1, 1]} : vector<8x128xf32> to vector<1x32xf32>
    %34 = vector.extract_strided_slice %30 {offsets = [3, 0], sizes = [1, 32], strides = [1, 1]} : vector<8x128xf32> to vector<1x32xf32>
    %35 = vector.extract_strided_slice %30 {offsets = [4, 0], sizes = [1, 64], strides = [1, 1]} : vector<8x128xf32> to vector<1x64xf32>
    %36 = vector.extract_strided_slice %30 {offsets = [5, 0], sizes = [1, 32], strides = [1, 1]} : vector<8x128xf32> to vector<1x32xf32>
    %37 = vector.extract_strided_slice %30 {offsets = [6, 0], sizes = [1, 32], strides = [1, 1]} : vector<8x128xf32> to vector<1x32xf32>
    %38 = vector.extract_strided_slice %30 {offsets = [7, 0], sizes = [1, 32], strides = [1, 1]} : vector<8x128xf32> to vector<1x32xf32>
    %39 = arith.truncf %26 : vector<16x32xf32> to vector<16x32xbf16>
    %c0_10 = arith.constant 0 : index
    %c0_11 = arith.constant 0 : index
    %c0_12 = arith.constant 0 : index
    %40 = vector.load %arg3[%c0_10, %c0_11, %c0_12] : memref<2x32x96xbf16, #tpu.memory_space<vmem>>, vector<1x32x96xbf16>
    %41 = vector.shape_cast %40 : vector<1x32x96xbf16> to vector<32x96xbf16>
    %cst_13 = arith.constant dense<0.000000e+00> : vector<16x96xf32>
    %42 = tpu.matmul %39, %41, %cst_13 {dimension_numbers = #tpu.dot_dimension_numbers<[1], [0], [0], [1], [0, 0, 1, 1], [], []>} : vector<16x32xbf16>, vector<32x96xbf16>, vector<16x96xf32> -> vector<16x96xf32>
    %43 = vector.broadcast %31 : vector<1x96xf32> to vector<16x96xf32>
    %44 = arith.addf %42, %43 : vector<16x96xf32>
    %45 = arith.truncf %44 : vector<16x96xf32> to vector<16x96xbf16>
    %46 = vector.shape_cast %45 : vector<16x96xbf16> to vector<2x8x96xbf16>
    %47 = vector.extract_strided_slice %46 {offsets = [0, 0, 0], sizes = [2, 8, 8], strides = [1, 1, 1]} : vector<2x8x96xbf16> to vector<2x8x8xbf16>
    %48 = vector.extract_strided_slice %46 {offsets = [0, 0, 32], sizes = [2, 8, 8], strides = [1, 1, 1]} : vector<2x8x96xbf16> to vector<2x8x8xbf16>
    %49 = vector.extract_strided_slice %46 {offsets = [0, 0, 64], sizes = [2, 8, 8], strides = [1, 1, 1]} : vector<2x8x96xbf16> to vector<2x8x8xbf16>
    "tpu.trace_start"() <{level = 10 : i32, message = "bqd,bkd->bqk"}> : () -> ()
    %cst_14 = arith.constant dense<0.000000e+00> : vector<2x8x8xf32>
    %50 = tpu.matmul %47, %48, %cst_14 {dimension_numbers = #tpu.dot_dimension_numbers<[2], [2], [1], [1], [0, 0, 0, 1, 1, 1], [0], [0]>} : vector<2x8x8xbf16>, vector<2x8x8xbf16>, vector<2x8x8xf32> -> vector<2x8x8xf32>
    "tpu.trace_stop"() : () -> ()
    %cst_15 = arith.constant 0.353553385 : f32
    %51 = vector.broadcast %cst_15 : f32 to vector<2x8x8xf32>
    %52 = arith.mulf %50, %51 : vector<2x8x8xf32>
    %53 = vector.broadcast %28 : vector<2x1x8xf32> to vector<2x8x8xf32>
    %54 = arith.addf %52, %53 : vector<2x8x8xf32>
    %cst_16 = arith.constant dense<0xFF800000> : vector<2x8xf32>
    %55 = vector.multi_reduction <maximumf>, %54, %cst_16 [2] : vector<2x8x8xf32> to vector<2x8xf32>
    %56 = vector.shape_cast %55 : vector<2x8xf32> to vector<2x8x1xf32>
    %57 = vector.broadcast %56 : vector<2x8x1xf32> to vector<2x8x8xf32>
    %58 = arith.subf %54, %57 : vector<2x8x8xf32>
    %59 = math.exp %58 : vector<2x8x8xf32>
    %cst_17 = arith.constant dense<0.000000e+00> : vector<2x8xf32>
    %60 = vector.multi_reduction <add>, %59, %cst_17 [2] : vector<2x8x8xf32> to vector<2x8xf32>
    %61 = vector.shape_cast %60 : vector<2x8xf32> to vector<2x8x1xf32>
    %62 = vector.broadcast %61 : vector<2x8x1xf32> to vector<2x8x8xf32>
    %63 = arith.divf %59, %62 : vector<2x8x8xf32>
    %64 = arith.truncf %63 : vector<2x8x8xf32> to vector<2x8x8xbf16>
    "tpu.trace_start"() <{level = 10 : i32, message = "bqk,bkd->bqd"}> : () -> ()
    %cst_18 = arith.constant dense<0.000000e+00> : vector<2x8x8xf32>
    %65 = tpu.matmul %64, %49, %cst_18 {dimension_numbers = #tpu.dot_dimension_numbers<[2], [1], [1], [2], [0, 0, 0, 1, 1, 2], [0], [0]>} : vector<2x8x8xbf16>, vector<2x8x8xbf16>, vector<2x8x8xf32> -> vector<2x8x8xf32>
    "tpu.trace_stop"() : () -> ()
    %66 = vector.extract_strided_slice %46 {offsets = [0, 0, 8], sizes = [2, 8, 8], strides = [1, 1, 1]} : vector<2x8x96xbf16> to vector<2x8x8xbf16>
    %67 = vector.extract_strided_slice %46 {offsets = [0, 0, 40], sizes = [2, 8, 8], strides = [1, 1, 1]} : vector<2x8x96xbf16> to vector<2x8x8xbf16>
    %68 = vector.extract_strided_slice %46 {offsets = [0, 0, 72], sizes = [2, 8, 8], strides = [1, 1, 1]} : vector<2x8x96xbf16> to vector<2x8x8xbf16>
    "tpu.trace_start"() <{level = 10 : i32, message = "bqd,bkd->bqk"}> : () -> ()
    %cst_19 = arith.constant dense<0.000000e+00> : vector<2x8x8xf32>
    %69 = tpu.matmul %66, %67, %cst_19 {dimension_numbers = #tpu.dot_dimension_numbers<[2], [2], [1], [1], [0, 0, 0, 1, 1, 1], [0], [0]>} : vector<2x8x8xbf16>, vector<2x8x8xbf16>, vector<2x8x8xf32> -> vector<2x8x8xf32>
    "tpu.trace_stop"() : () -> ()
    %cst_20 = arith.constant 0.353553385 : f32
    %70 = vector.broadcast %cst_20 : f32 to vector<2x8x8xf32>
    %71 = arith.mulf %69, %70 : vector<2x8x8xf32>
    %72 = vector.broadcast %28 : vector<2x1x8xf32> to vector<2x8x8xf32>
    %73 = arith.addf %71, %72 : vector<2x8x8xf32>
    %cst_21 = arith.constant dense<0xFF800000> : vector<2x8xf32>
    %74 = vector.multi_reduction <maximumf>, %73, %cst_21 [2] : vector<2x8x8xf32> to vector<2x8xf32>
    %75 = vector.shape_cast %74 : vector<2x8xf32> to vector<2x8x1xf32>
    %76 = vector.broadcast %75 : vector<2x8x1xf32> to vector<2x8x8xf32>
    %77 = arith.subf %73, %76 : vector<2x8x8xf32>
    %78 = math.exp %77 : vector<2x8x8xf32>
    %cst_22 = arith.constant dense<0.000000e+00> : vector<2x8xf32>
    %79 = vector.multi_reduction <add>, %78, %cst_22 [2] : vector<2x8x8xf32> to vector<2x8xf32>
    %80 = vector.shape_cast %79 : vector<2x8xf32> to vector<2x8x1xf32>
    %81 = vector.broadcast %80 : vector<2x8x1xf32> to vector<2x8x8xf32>
    %82 = arith.divf %78, %81 : vector<2x8x8xf32>
    %83 = arith.truncf %82 : vector<2x8x8xf32> to vector<2x8x8xbf16>
    "tpu.trace_start"() <{level = 10 : i32, message = "bqk,bkd->bqd"}> : () -> ()
    %cst_23 = arith.constant dense<0.000000e+00> : vector<2x8x8xf32>
    %84 = tpu.matmul %83, %68, %cst_23 {dimension_numbers = #tpu.dot_dimension_numbers<[2], [1], [1], [2], [0, 0, 0, 1, 1, 2], [0], [0]>} : vector<2x8x8xbf16>, vector<2x8x8xbf16>, vector<2x8x8xf32> -> vector<2x8x8xf32>
    "tpu.trace_stop"() : () -> ()
    %85 = vector.extract_strided_slice %46 {offsets = [0, 0, 16], sizes = [2, 8, 8], strides = [1, 1, 1]} : vector<2x8x96xbf16> to vector<2x8x8xbf16>
    %86 = vector.extract_strided_slice %46 {offsets = [0, 0, 48], sizes = [2, 8, 8], strides = [1, 1, 1]} : vector<2x8x96xbf16> to vector<2x8x8xbf16>
    %87 = vector.extract_strided_slice %46 {offsets = [0, 0, 80], sizes = [2, 8, 8], strides = [1, 1, 1]} : vector<2x8x96xbf16> to vector<2x8x8xbf16>
    "tpu.trace_start"() <{level = 10 : i32, message = "bqd,bkd->bqk"}> : () -> ()
    %cst_24 = arith.constant dense<0.000000e+00> : vector<2x8x8xf32>
    %88 = tpu.matmul %85, %86, %cst_24 {dimension_numbers = #tpu.dot_dimension_numbers<[2], [2], [1], [1], [0, 0, 0, 1, 1, 1], [0], [0]>} : vector<2x8x8xbf16>, vector<2x8x8xbf16>, vector<2x8x8xf32> -> vector<2x8x8xf32>
    "tpu.trace_stop"() : () -> ()
    %cst_25 = arith.constant 0.353553385 : f32
    %89 = vector.broadcast %cst_25 : f32 to vector<2x8x8xf32>
    %90 = arith.mulf %88, %89 : vector<2x8x8xf32>
    %91 = vector.broadcast %28 : vector<2x1x8xf32> to vector<2x8x8xf32>
    %92 = arith.addf %90, %91 : vector<2x8x8xf32>
    %cst_26 = arith.constant dense<0xFF800000> : vector<2x8xf32>
    %93 = vector.multi_reduction <maximumf>, %92, %cst_26 [2] : vector<2x8x8xf32> to vector<2x8xf32>
    %94 = vector.shape_cast %93 : vector<2x8xf32> to vector<2x8x1xf32>
    %95 = vector.broadcast %94 : vector<2x8x1xf32> to vector<2x8x8xf32>
    %96 = arith.subf %92, %95 : vector<2x8x8xf32>
    %97 = math.exp %96 : vector<2x8x8xf32>
    %cst_27 = arith.constant dense<0.000000e+00> : vector<2x8xf32>
    %98 = vector.multi_reduction <add>, %97, %cst_27 [2] : vector<2x8x8xf32> to vector<2x8xf32>
    %99 = vector.shape_cast %98 : vector<2x8xf32> to vector<2x8x1xf32>
    %100 = vector.broadcast %99 : vector<2x8x1xf32> to vector<2x8x8xf32>
    %101 = arith.divf %97, %100 : vector<2x8x8xf32>
    %102 = arith.truncf %101 : vector<2x8x8xf32> to vector<2x8x8xbf16>
    "tpu.trace_start"() <{level = 10 : i32, message = "bqk,bkd->bqd"}> : () -> ()
    %cst_28 = arith.constant dense<0.000000e+00> : vector<2x8x8xf32>
    %103 = tpu.matmul %102, %87, %cst_28 {dimension_numbers = #tpu.dot_dimension_numbers<[2], [1], [1], [2], [0, 0, 0, 1, 1, 2], [0], [0]>} : vector<2x8x8xbf16>, vector<2x8x8xbf16>, vector<2x8x8xf32> -> vector<2x8x8xf32>
    "tpu.trace_stop"() : () -> ()
    %104 = vector.extract_strided_slice %46 {offsets = [0, 0, 24], sizes = [2, 8, 8], strides = [1, 1, 1]} : vector<2x8x96xbf16> to vector<2x8x8xbf16>
    %105 = vector.extract_strided_slice %46 {offsets = [0, 0, 56], sizes = [2, 8, 8], strides = [1, 1, 1]} : vector<2x8x96xbf16> to vector<2x8x8xbf16>
    %106 = vector.extract_strided_slice %46 {offsets = [0, 0, 88], sizes = [2, 8, 8], strides = [1, 1, 1]} : vector<2x8x96xbf16> to vector<2x8x8xbf16>
    "tpu.trace_start"() <{level = 10 : i32, message = "bqd,bkd->bqk"}> : () -> ()
    %cst_29 = arith.constant dense<0.000000e+00> : vector<2x8x8xf32>
    %107 = tpu.matmul %104, %105, %cst_29 {dimension_numbers = #tpu.dot_dimension_numbers<[2], [2], [1], [1], [0, 0, 0, 1, 1, 1], [0], [0]>} : vector<2x8x8xbf16>, vector<2x8x8xbf16>, vector<2x8x8xf32> -> vector<2x8x8xf32>
    "tpu.trace_stop"() : () -> ()
    %cst_30 = arith.constant 0.353553385 : f32
    %108 = vector.broadcast %cst_30 : f32 to vector<2x8x8xf32>
    %109 = arith.mulf %107, %108 : vector<2x8x8xf32>
    %110 = vector.broadcast %28 : vector<2x1x8xf32> to vector<2x8x8xf32>
    %111 = arith.addf %109, %110 : vector<2x8x8xf32>
    %cst_31 = arith.constant dense<0xFF800000> : vector<2x8xf32>
    %112 = vector.multi_reduction <maximumf>, %111, %cst_31 [2] : vector<2x8x8xf32> to vector<2x8xf32>
    %113 = vector.shape_cast %112 : vector<2x8xf32> to vector<2x8x1xf32>
    %114 = vector.broadcast %113 : vector<2x8x1xf32> to vector<2x8x8xf32>
    %115 = arith.subf %111, %114 : vector<2x8x8xf32>
    %116 = math.exp %115 : vector<2x8x8xf32>
    %cst_32 = arith.constant dense<0.000000e+00> : vector<2x8xf32>
    %117 = vector.multi_reduction <add>, %116, %cst_32 [2] : vector<2x8x8xf32> to vector<2x8xf32>
    %118 = vector.shape_cast %117 : vector<2x8xf32> to vector<2x8x1xf32>
    %119 = vector.broadcast %118 : vector<2x8x1xf32> to vector<2x8x8xf32>
    %120 = arith.divf %116, %119 : vector<2x8x8xf32>
    %121 = arith.truncf %120 : vector<2x8x8xf32> to vector<2x8x8xbf16>
    "tpu.trace_start"() <{level = 10 : i32, message = "bqk,bkd->bqd"}> : () -> ()
    %cst_33 = arith.constant dense<0.000000e+00> : vector<2x8x8xf32>
    %122 = tpu.matmul %121, %106, %cst_33 {dimension_numbers = #tpu.dot_dimension_numbers<[2], [1], [1], [2], [0, 0, 0, 1, 1, 2], [0], [0]>} : vector<2x8x8xbf16>, vector<2x8x8xbf16>, vector<2x8x8xf32> -> vector<2x8x8xf32>
    "tpu.trace_stop"() : () -> ()
    %123 = tpu.concatenate %65, %84, %103, %122 in 2 : vector<2x8x8xf32>, vector<2x8x8xf32>, vector<2x8x8xf32>, vector<2x8x8xf32> -> vector<2x8x32xf32>
    %124 = vector.shape_cast %123 : vector<2x8x32xf32> to vector<16x32xf32>
    %125 = arith.truncf %124 : vector<16x32xf32> to vector<16x32xbf16>
    %c0_34 = arith.constant 0 : index
    %c0_35 = arith.constant 0 : index
    %c0_36 = arith.constant 0 : index
    %126 = vector.load %arg4[%c0_34, %c0_35, %c0_36] : memref<2x32x32xbf16, #tpu.memory_space<vmem>>, vector<1x32x32xbf16>
    %127 = vector.shape_cast %126 : vector<1x32x32xbf16> to vector<32x32xbf16>
    %cst_37 = arith.constant dense<0.000000e+00> : vector<16x32xf32>
    %128 = tpu.matmul %125, %127, %cst_37 {dimension_numbers = #tpu.dot_dimension_numbers<[1], [0], [0], [1], [0, 0, 1, 1], [], []>} : vector<16x32xbf16>, vector<32x32xbf16>, vector<16x32xf32> -> vector<16x32xf32>
    %129 = vector.broadcast %32 : vector<1x32xf32> to vector<16x32xf32>
    %130 = arith.addf %128, %129 : vector<16x32xf32>
    %131 = arith.addf %26, %130 : vector<16x32xf32>
    %cst_38 = arith.constant dense<0.000000e+00> : vector<16xf32>
    %132 = vector.multi_reduction <add>, %131, %cst_38 [1] : vector<16x32xf32> to vector<16xf32>
    %133 = vector.shape_cast %132 : vector<16xf32> to vector<16x1xf32>
    %cst_39 = arith.constant 3.200000e+01 : f32
    %134 = vector.broadcast %cst_39 : f32 to vector<16x1xf32>
    %135 = arith.divf %133, %134 : vector<16x1xf32>
    %136 = vector.broadcast %135 : vector<16x1xf32> to vector<16x32xf32>
    %137 = arith.subf %131, %136 : vector<16x32xf32>
    %138 = arith.mulf %137, %137 : vector<16x32xf32>
    %cst_40 = arith.constant dense<0.000000e+00> : vector<16xf32>
    %139 = vector.multi_reduction <add>, %138, %cst_40 [1] : vector<16x32xf32> to vector<16xf32>
    %140 = vector.shape_cast %139 : vector<16xf32> to vector<16x1xf32>
    %cst_41 = arith.constant 3.200000e+01 : f32
    %141 = vector.broadcast %cst_41 : f32 to vector<16x1xf32>
    %142 = arith.divf %140, %141 : vector<16x1xf32>
    %143 = vector.broadcast %135 : vector<16x1xf32> to vector<16x32xf32>
    %144 = arith.subf %131, %143 : vector<16x32xf32>
    %cst_42 = arith.constant 9.99999996E-13 : f32
    %145 = vector.broadcast %cst_42 : f32 to vector<16x1xf32>
    %146 = arith.addf %142, %145 : vector<16x1xf32>
    %147 = math.rsqrt %146 : vector<16x1xf32>
    %148 = vector.broadcast %147 : vector<16x1xf32> to vector<16x32xf32>
    %149 = arith.mulf %144, %148 : vector<16x32xf32>
    %150 = vector.broadcast %33 : vector<1x32xf32> to vector<16x32xf32>
    %151 = arith.mulf %149, %150 : vector<16x32xf32>
    %152 = vector.broadcast %34 : vector<1x32xf32> to vector<16x32xf32>
    %153 = arith.addf %151, %152 : vector<16x32xf32>
    %154 = arith.truncf %153 : vector<16x32xf32> to vector<16x32xbf16>
    %c0_43 = arith.constant 0 : index
    %c0_44 = arith.constant 0 : index
    %c0_45 = arith.constant 0 : index
    %155 = vector.load %arg5[%c0_43, %c0_44, %c0_45] : memref<2x32x64xbf16, #tpu.memory_space<vmem>>, vector<1x32x64xbf16>
    %156 = vector.shape_cast %155 : vector<1x32x64xbf16> to vector<32x64xbf16>
    %cst_46 = arith.constant dense<0.000000e+00> : vector<16x64xf32>
    %157 = tpu.matmul %154, %156, %cst_46 {dimension_numbers = #tpu.dot_dimension_numbers<[1], [0], [0], [1], [0, 0, 1, 1], [], []>} : vector<16x32xbf16>, vector<32x64xbf16>, vector<16x64xf32> -> vector<16x64xf32>
    %158 = vector.broadcast %35 : vector<1x64xf32> to vector<16x64xf32>
    %159 = arith.addf %157, %158 : vector<16x64xf32>
    %cst_47 = arith.constant 5.000000e-01 : f32
    %160 = vector.broadcast %cst_47 : f32 to vector<16x64xf32>
    %161 = arith.mulf %160, %159 : vector<16x64xf32>
    %cst_48 = arith.constant 4.471500e-02 : f32
    %162 = vector.broadcast %cst_48 : f32 to vector<16x64xf32>
    %163 = arith.mulf %162, %159 : vector<16x64xf32>
    %164 = arith.mulf %163, %159 : vector<16x64xf32>
    %165 = arith.mulf %164, %159 : vector<16x64xf32>
    %166 = arith.addf %159, %165 : vector<16x64xf32>
    %cst_49 = arith.constant 0.797884583 : f32
    %167 = vector.broadcast %cst_49 : f32 to vector<16x64xf32>
    %168 = arith.mulf %167, %166 : vector<16x64xf32>
    %169 = math.tanh %168 : vector<16x64xf32>
    %cst_50 = arith.constant 1.000000e+00 : f32
    %170 = vector.broadcast %cst_50 : f32 to vector<16x64xf32>
    %171 = arith.addf %170, %169 : vector<16x64xf32>
    %172 = arith.mulf %161, %171 : vector<16x64xf32>
    %173 = arith.truncf %172 : vector<16x64xf32> to vector<16x64xbf16>
    %c0_51 = arith.constant 0 : index
    %c0_52 = arith.constant 0 : index
    %c0_53 = arith.constant 0 : index
    %174 = vector.load %arg6[%c0_51, %c0_52, %c0_53] : memref<2x64x32xbf16, #tpu.memory_space<vmem>>, vector<1x64x32xbf16>
    %175 = vector.shape_cast %174 : vector<1x64x32xbf16> to vector<64x32xbf16>
    %cst_54 = arith.constant dense<0.000000e+00> : vector<16x32xf32>
    %176 = tpu.matmul %173, %175, %cst_54 {dimension_numbers = #tpu.dot_dimension_numbers<[1], [0], [0], [1], [0, 0, 1, 1], [], []>} : vector<16x64xbf16>, vector<64x32xbf16>, vector<16x32xf32> -> vector<16x32xf32>
    %177 = vector.broadcast %36 : vector<1x32xf32> to vector<16x32xf32>
    %178 = arith.addf %176, %177 : vector<16x32xf32>
    %179 = arith.addf %153, %178 : vector<16x32xf32>
    %cst_55 = arith.constant dense<0.000000e+00> : vector<16xf32>
    %180 = vector.multi_reduction <add>, %179, %cst_55 [1] : vector<16x32xf32> to vector<16xf32>
    %181 = vector.shape_cast %180 : vector<16xf32> to vector<16x1xf32>
    %cst_56 = arith.constant 3.200000e+01 : f32
    %182 = vector.broadcast %cst_56 : f32 to vector<16x1xf32>
    %183 = arith.divf %181, %182 : vector<16x1xf32>
    %184 = vector.broadcast %183 : vector<16x1xf32> to vector<16x32xf32>
    %185 = arith.subf %179, %184 : vector<16x32xf32>
    %186 = arith.mulf %185, %185 : vector<16x32xf32>
    %cst_57 = arith.constant dense<0.000000e+00> : vector<16xf32>
    %187 = vector.multi_reduction <add>, %186, %cst_57 [1] : vector<16x32xf32> to vector<16xf32>
    %188 = vector.shape_cast %187 : vector<16xf32> to vector<16x1xf32>
    %cst_58 = arith.constant 3.200000e+01 : f32
    %189 = vector.broadcast %cst_58 : f32 to vector<16x1xf32>
    %190 = arith.divf %188, %189 : vector<16x1xf32>
    %191 = vector.broadcast %183 : vector<16x1xf32> to vector<16x32xf32>
    %192 = arith.subf %179, %191 : vector<16x32xf32>
    %cst_59 = arith.constant 9.99999996E-13 : f32
    %193 = vector.broadcast %cst_59 : f32 to vector<16x1xf32>
    %194 = arith.addf %190, %193 : vector<16x1xf32>
    %195 = math.rsqrt %194 : vector<16x1xf32>
    %196 = vector.broadcast %195 : vector<16x1xf32> to vector<16x32xf32>
    %197 = arith.mulf %192, %196 : vector<16x32xf32>
    %198 = vector.broadcast %37 : vector<1x32xf32> to vector<16x32xf32>
    %199 = arith.mulf %197, %198 : vector<16x32xf32>
    %200 = vector.broadcast %38 : vector<1x32xf32> to vector<16x32xf32>
    %201 = arith.addf %199, %200 : vector<16x32xf32>
    %c1 = arith.constant 1 : index
    %c0_60 = arith.constant 0 : index
    %c0_61 = arith.constant 0 : index
    %202 = vector.load %arg1[%c1, %c0_60, %c0_61] : memref<2x8x128xf32, #tpu.memory_space<vmem>>, vector<1x8x128xf32>
    %203 = vector.shape_cast %202 : vector<1x8x128xf32> to vector<8x128xf32>
    %204 = vector.extract_strided_slice %203 {offsets = [0, 0], sizes = [1, 96], strides = [1, 1]} : vector<8x128xf32> to vector<1x96xf32>
    %205 = vector.extract_strided_slice %203 {offsets = [1, 0], sizes = [1, 32], strides = [1, 1]} : vector<8x128xf32> to vector<1x32xf32>
    %206 = vector.extract_strided_slice %203 {offsets = [2, 0], sizes = [1, 32], strides = [1, 1]} : vector<8x128xf32> to vector<1x32xf32>
    %207 = vector.extract_strided_slice %203 {offsets = [3, 0], sizes = [1, 32], strides = [1, 1]} : vector<8x128xf32> to vector<1x32xf32>
    %208 = vector.extract_strided_slice %203 {offsets = [4, 0], sizes = [1, 64], strides = [1, 1]} : vector<8x128xf32> to vector<1x64xf32>
    %209 = vector.extract_strided_slice %203 {offsets = [5, 0], sizes = [1, 32], strides = [1, 1]} : vector<8x128xf32> to vector<1x32xf32>
    %210 = vector.extract_strided_slice %203 {offsets = [6, 0], sizes = [1, 32], strides = [1, 1]} : vector<8x128xf32> to vector<1x32xf32>
    %211 = vector.extract_strided_slice %203 {offsets = [7, 0], sizes = [1, 32], strides = [1, 1]} : vector<8x128xf32> to vector<1x32xf32>
    %212 = arith.truncf %201 : vector<16x32xf32> to vector<16x32xbf16>
    %c1_62 = arith.constant 1 : index
    %c0_63 = arith.constant 0 : index
    %c0_64 = arith.constant 0 : index
    %213 = vector.load %arg3[%c1_62, %c0_63, %c0_64] : memref<2x32x96xbf16, #tpu.memory_space<vmem>>, vector<1x32x96xbf16>
    %214 = vector.shape_cast %213 : vector<1x32x96xbf16> to vector<32x96xbf16>
    %cst_65 = arith.constant dense<0.000000e+00> : vector<16x96xf32>
    %215 = tpu.matmul %212, %214, %cst_65 {dimension_numbers = #tpu.dot_dimension_numbers<[1], [0], [0], [1], [0, 0, 1, 1], [], []>} : vector<16x32xbf16>, vector<32x96xbf16>, vector<16x96xf32> -> vector<16x96xf32>
    %216 = vector.broadcast %204 : vector<1x96xf32> to vector<16x96xf32>
    %217 = arith.addf %215, %216 : vector<16x96xf32>
    %218 = arith.truncf %217 : vector<16x96xf32> to vector<16x96xbf16>
    %219 = vector.shape_cast %218 : vector<16x96xbf16> to vector<2x8x96xbf16>
    %220 = vector.extract_strided_slice %219 {offsets = [0, 0, 0], sizes = [2, 8, 8], strides = [1, 1, 1]} : vector<2x8x96xbf16> to vector<2x8x8xbf16>
    %221 = vector.extract_strided_slice %219 {offsets = [0, 0, 32], sizes = [2, 8, 8], strides = [1, 1, 1]} : vector<2x8x96xbf16> to vector<2x8x8xbf16>
    %222 = vector.extract_strided_slice %219 {offsets = [0, 0, 64], sizes = [2, 8, 8], strides = [1, 1, 1]} : vector<2x8x96xbf16> to vector<2x8x8xbf16>
    "tpu.trace_start"() <{level = 10 : i32, message = "bqd,bkd->bqk"}> : () -> ()
    %cst_66 = arith.constant dense<0.000000e+00> : vector<2x8x8xf32>
    %223 = tpu.matmul %220, %221, %cst_66 {dimension_numbers = #tpu.dot_dimension_numbers<[2], [2], [1], [1], [0, 0, 0, 1, 1, 1], [0], [0]>} : vector<2x8x8xbf16>, vector<2x8x8xbf16>, vector<2x8x8xf32> -> vector<2x8x8xf32>
    "tpu.trace_stop"() : () -> ()
    %cst_67 = arith.constant 0.353553385 : f32
    %224 = vector.broadcast %cst_67 : f32 to vector<2x8x8xf32>
    %225 = arith.mulf %223, %224 : vector<2x8x8xf32>
    %226 = vector.broadcast %28 : vector<2x1x8xf32> to vector<2x8x8xf32>
    %227 = arith.addf %225, %226 : vector<2x8x8xf32>
    %cst_68 = arith.constant dense<0xFF800000> : vector<2x8xf32>
    %228 = vector.multi_reduction <maximumf>, %227, %cst_68 [2] : vector<2x8x8xf32> to vector<2x8xf32>
    %229 = vector.shape_cast %228 : vector<2x8xf32> to vector<2x8x1xf32>
    %230 = vector.broadcast %229 : vector<2x8x1xf32> to vector<2x8x8xf32>
    %231 = arith.subf %227, %230 : vector<2x8x8xf32>
    %232 = math.exp %231 : vector<2x8x8xf32>
    %cst_69 = arith.constant dense<0.000000e+00> : vector<2x8xf32>
    %233 = vector.multi_reduction <add>, %232, %cst_69 [2] : vector<2x8x8xf32> to vector<2x8xf32>
    %234 = vector.shape_cast %233 : vector<2x8xf32> to vector<2x8x1xf32>
    %235 = vector.broadcast %234 : vector<2x8x1xf32> to vector<2x8x8xf32>
    %236 = arith.divf %232, %235 : vector<2x8x8xf32>
    %237 = arith.truncf %236 : vector<2x8x8xf32> to vector<2x8x8xbf16>
    "tpu.trace_start"() <{level = 10 : i32, message = "bqk,bkd->bqd"}> : () -> ()
    %cst_70 = arith.constant dense<0.000000e+00> : vector<2x8x8xf32>
    %238 = tpu.matmul %237, %222, %cst_70 {dimension_numbers = #tpu.dot_dimension_numbers<[2], [1], [1], [2], [0, 0, 0, 1, 1, 2], [0], [0]>} : vector<2x8x8xbf16>, vector<2x8x8xbf16>, vector<2x8x8xf32> -> vector<2x8x8xf32>
    "tpu.trace_stop"() : () -> ()
    %239 = vector.extract_strided_slice %219 {offsets = [0, 0, 8], sizes = [2, 8, 8], strides = [1, 1, 1]} : vector<2x8x96xbf16> to vector<2x8x8xbf16>
    %240 = vector.extract_strided_slice %219 {offsets = [0, 0, 40], sizes = [2, 8, 8], strides = [1, 1, 1]} : vector<2x8x96xbf16> to vector<2x8x8xbf16>
    %241 = vector.extract_strided_slice %219 {offsets = [0, 0, 72], sizes = [2, 8, 8], strides = [1, 1, 1]} : vector<2x8x96xbf16> to vector<2x8x8xbf16>
    "tpu.trace_start"() <{level = 10 : i32, message = "bqd,bkd->bqk"}> : () -> ()
    %cst_71 = arith.constant dense<0.000000e+00> : vector<2x8x8xf32>
    %242 = tpu.matmul %239, %240, %cst_71 {dimension_numbers = #tpu.dot_dimension_numbers<[2], [2], [1], [1], [0, 0, 0, 1, 1, 1], [0], [0]>} : vector<2x8x8xbf16>, vector<2x8x8xbf16>, vector<2x8x8xf32> -> vector<2x8x8xf32>
    "tpu.trace_stop"() : () -> ()
    %cst_72 = arith.constant 0.353553385 : f32
    %243 = vector.broadcast %cst_72 : f32 to vector<2x8x8xf32>
    %244 = arith.mulf %242, %243 : vector<2x8x8xf32>
    %245 = vector.broadcast %28 : vector<2x1x8xf32> to vector<2x8x8xf32>
    %246 = arith.addf %244, %245 : vector<2x8x8xf32>
    %cst_73 = arith.constant dense<0xFF800000> : vector<2x8xf32>
    %247 = vector.multi_reduction <maximumf>, %246, %cst_73 [2] : vector<2x8x8xf32> to vector<2x8xf32>
    %248 = vector.shape_cast %247 : vector<2x8xf32> to vector<2x8x1xf32>
    %249 = vector.broadcast %248 : vector<2x8x1xf32> to vector<2x8x8xf32>
    %250 = arith.subf %246, %249 : vector<2x8x8xf32>
    %251 = math.exp %250 : vector<2x8x8xf32>
    %cst_74 = arith.constant dense<0.000000e+00> : vector<2x8xf32>
    %252 = vector.multi_reduction <add>, %251, %cst_74 [2] : vector<2x8x8xf32> to vector<2x8xf32>
    %253 = vector.shape_cast %252 : vector<2x8xf32> to vector<2x8x1xf32>
    %254 = vector.broadcast %253 : vector<2x8x1xf32> to vector<2x8x8xf32>
    %255 = arith.divf %251, %254 : vector<2x8x8xf32>
    %256 = arith.truncf %255 : vector<2x8x8xf32> to vector<2x8x8xbf16>
    "tpu.trace_start"() <{level = 10 : i32, message = "bqk,bkd->bqd"}> : () -> ()
    %cst_75 = arith.constant dense<0.000000e+00> : vector<2x8x8xf32>
    %257 = tpu.matmul %256, %241, %cst_75 {dimension_numbers = #tpu.dot_dimension_numbers<[2], [1], [1], [2], [0, 0, 0, 1, 1, 2], [0], [0]>} : vector<2x8x8xbf16>, vector<2x8x8xbf16>, vector<2x8x8xf32> -> vector<2x8x8xf32>
    "tpu.trace_stop"() : () -> ()
    %258 = vector.extract_strided_slice %219 {offsets = [0, 0, 16], sizes = [2, 8, 8], strides = [1, 1, 1]} : vector<2x8x96xbf16> to vector<2x8x8xbf16>
    %259 = vector.extract_strided_slice %219 {offsets = [0, 0, 48], sizes = [2, 8, 8], strides = [1, 1, 1]} : vector<2x8x96xbf16> to vector<2x8x8xbf16>
    %260 = vector.extract_strided_slice %219 {offsets = [0, 0, 80], sizes = [2, 8, 8], strides = [1, 1, 1]} : vector<2x8x96xbf16> to vector<2x8x8xbf16>
    "tpu.trace_start"() <{level = 10 : i32, message = "bqd,bkd->bqk"}> : () -> ()
    %cst_76 = arith.constant dense<0.000000e+00> : vector<2x8x8xf32>
    %261 = tpu.matmul %258, %259, %cst_76 {dimension_numbers = #tpu.dot_dimension_numbers<[2], [2], [1], [1], [0, 0, 0, 1, 1, 1], [0], [0]>} : vector<2x8x8xbf16>, vector<2x8x8xbf16>, vector<2x8x8xf32> -> vector<2x8x8xf32>
    "tpu.trace_stop"() : () -> ()
    %cst_77 = arith.constant 0.353553385 : f32
    %262 = vector.broadcast %cst_77 : f32 to vector<2x8x8xf32>
    %263 = arith.mulf %261, %262 : vector<2x8x8xf32>
    %264 = vector.broadcast %28 : vector<2x1x8xf32> to vector<2x8x8xf32>
    %265 = arith.addf %263, %264 : vector<2x8x8xf32>
    %cst_78 = arith.constant dense<0xFF800000> : vector<2x8xf32>
    %266 = vector.multi_reduction <maximumf>, %265, %cst_78 [2] : vector<2x8x8xf32> to vector<2x8xf32>
    %267 = vector.shape_cast %266 : vector<2x8xf32> to vector<2x8x1xf32>
    %268 = vector.broadcast %267 : vector<2x8x1xf32> to vector<2x8x8xf32>
    %269 = arith.subf %265, %268 : vector<2x8x8xf32>
    %270 = math.exp %269 : vector<2x8x8xf32>
    %cst_79 = arith.constant dense<0.000000e+00> : vector<2x8xf32>
    %271 = vector.multi_reduction <add>, %270, %cst_79 [2] : vector<2x8x8xf32> to vector<2x8xf32>
    %272 = vector.shape_cast %271 : vector<2x8xf32> to vector<2x8x1xf32>
    %273 = vector.broadcast %272 : vector<2x8x1xf32> to vector<2x8x8xf32>
    %274 = arith.divf %270, %273 : vector<2x8x8xf32>
    %275 = arith.truncf %274 : vector<2x8x8xf32> to vector<2x8x8xbf16>
    "tpu.trace_start"() <{level = 10 : i32, message = "bqk,bkd->bqd"}> : () -> ()
    %cst_80 = arith.constant dense<0.000000e+00> : vector<2x8x8xf32>
    %276 = tpu.matmul %275, %260, %cst_80 {dimension_numbers = #tpu.dot_dimension_numbers<[2], [1], [1], [2], [0, 0, 0, 1, 1, 2], [0], [0]>} : vector<2x8x8xbf16>, vector<2x8x8xbf16>, vector<2x8x8xf32> -> vector<2x8x8xf32>
    "tpu.trace_stop"() : () -> ()
    %277 = vector.extract_strided_slice %219 {offsets = [0, 0, 24], sizes = [2, 8, 8], strides = [1, 1, 1]} : vector<2x8x96xbf16> to vector<2x8x8xbf16>
    %278 = vector.extract_strided_slice %219 {offsets = [0, 0, 56], sizes = [2, 8, 8], strides = [1, 1, 1]} : vector<2x8x96xbf16> to vector<2x8x8xbf16>
    %279 = vector.extract_strided_slice %219 {offsets = [0, 0, 88], sizes = [2, 8, 8], strides = [1, 1, 1]} : vector<2x8x96xbf16> to vector<2x8x8xbf16>
    "tpu.trace_start"() <{level = 10 : i32, message = "bqd,bkd->bqk"}> : () -> ()
    %cst_81 = arith.constant dense<0.000000e+00> : vector<2x8x8xf32>
    %280 = tpu.matmul %277, %278, %cst_81 {dimension_numbers = #tpu.dot_dimension_numbers<[2], [2], [1], [1], [0, 0, 0, 1, 1, 1], [0], [0]>} : vector<2x8x8xbf16>, vector<2x8x8xbf16>, vector<2x8x8xf32> -> vector<2x8x8xf32>
    "tpu.trace_stop"() : () -> ()
    %cst_82 = arith.constant 0.353553385 : f32
    %281 = vector.broadcast %cst_82 : f32 to vector<2x8x8xf32>
    %282 = arith.mulf %280, %281 : vector<2x8x8xf32>
    %283 = vector.broadcast %28 : vector<2x1x8xf32> to vector<2x8x8xf32>
    %284 = arith.addf %282, %283 : vector<2x8x8xf32>
    %cst_83 = arith.constant dense<0xFF800000> : vector<2x8xf32>
    %285 = vector.multi_reduction <maximumf>, %284, %cst_83 [2] : vector<2x8x8xf32> to vector<2x8xf32>
    %286 = vector.shape_cast %285 : vector<2x8xf32> to vector<2x8x1xf32>
    %287 = vector.broadcast %286 : vector<2x8x1xf32> to vector<2x8x8xf32>
    %288 = arith.subf %284, %287 : vector<2x8x8xf32>
    %289 = math.exp %288 : vector<2x8x8xf32>
    %cst_84 = arith.constant dense<0.000000e+00> : vector<2x8xf32>
    %290 = vector.multi_reduction <add>, %289, %cst_84 [2] : vector<2x8x8xf32> to vector<2x8xf32>
    %291 = vector.shape_cast %290 : vector<2x8xf32> to vector<2x8x1xf32>
    %292 = vector.broadcast %291 : vector<2x8x1xf32> to vector<2x8x8xf32>
    %293 = arith.divf %289, %292 : vector<2x8x8xf32>
    %294 = arith.truncf %293 : vector<2x8x8xf32> to vector<2x8x8xbf16>
    "tpu.trace_start"() <{level = 10 : i32, message = "bqk,bkd->bqd"}> : () -> ()
    %cst_85 = arith.constant dense<0.000000e+00> : vector<2x8x8xf32>
    %295 = tpu.matmul %294, %279, %cst_85 {dimension_numbers = #tpu.dot_dimension_numbers<[2], [1], [1], [2], [0, 0, 0, 1, 1, 2], [0], [0]>} : vector<2x8x8xbf16>, vector<2x8x8xbf16>, vector<2x8x8xf32> -> vector<2x8x8xf32>
    "tpu.trace_stop"() : () -> ()
    %296 = tpu.concatenate %238, %257, %276, %295 in 2 : vector<2x8x8xf32>, vector<2x8x8xf32>, vector<2x8x8xf32>, vector<2x8x8xf32> -> vector<2x8x32xf32>
    %297 = vector.shape_cast %296 : vector<2x8x32xf32> to vector<16x32xf32>
    %298 = arith.truncf %297 : vector<16x32xf32> to vector<16x32xbf16>
    %c1_86 = arith.constant 1 : index
    %c0_87 = arith.constant 0 : index
    %c0_88 = arith.constant 0 : index
    %299 = vector.load %arg4[%c1_86, %c0_87, %c0_88] : memref<2x32x32xbf16, #tpu.memory_space<vmem>>, vector<1x32x32xbf16>
    %300 = vector.shape_cast %299 : vector<1x32x32xbf16> to vector<32x32xbf16>
    %cst_89 = arith.constant dense<0.000000e+00> : vector<16x32xf32>
    %301 = tpu.matmul %298, %300, %cst_89 {dimension_numbers = #tpu.dot_dimension_numbers<[1], [0], [0], [1], [0, 0, 1, 1], [], []>} : vector<16x32xbf16>, vector<32x32xbf16>, vector<16x32xf32> -> vector<16x32xf32>
    %302 = vector.broadcast %205 : vector<1x32xf32> to vector<16x32xf32>
    %303 = arith.addf %301, %302 : vector<16x32xf32>
    %304 = arith.addf %201, %303 : vector<16x32xf32>
    %cst_90 = arith.constant dense<0.000000e+00> : vector<16xf32>
    %305 = vector.multi_reduction <add>, %304, %cst_90 [1] : vector<16x32xf32> to vector<16xf32>
    %306 = vector.shape_cast %305 : vector<16xf32> to vector<16x1xf32>
    %cst_91 = arith.constant 3.200000e+01 : f32
    %307 = vector.broadcast %cst_91 : f32 to vector<16x1xf32>
    %308 = arith.divf %306, %307 : vector<16x1xf32>
    %309 = vector.broadcast %308 : vector<16x1xf32> to vector<16x32xf32>
    %310 = arith.subf %304, %309 : vector<16x32xf32>
    %311 = arith.mulf %310, %310 : vector<16x32xf32>
    %cst_92 = arith.constant dense<0.000000e+00> : vector<16xf32>
    %312 = vector.multi_reduction <add>, %311, %cst_92 [1] : vector<16x32xf32> to vector<16xf32>
    %313 = vector.shape_cast %312 : vector<16xf32> to vector<16x1xf32>
    %cst_93 = arith.constant 3.200000e+01 : f32
    %314 = vector.broadcast %cst_93 : f32 to vector<16x1xf32>
    %315 = arith.divf %313, %314 : vector<16x1xf32>
    %316 = vector.broadcast %308 : vector<16x1xf32> to vector<16x32xf32>
    %317 = arith.subf %304, %316 : vector<16x32xf32>
    %cst_94 = arith.constant 9.99999996E-13 : f32
    %318 = vector.broadcast %cst_94 : f32 to vector<16x1xf32>
    %319 = arith.addf %315, %318 : vector<16x1xf32>
    %320 = math.rsqrt %319 : vector<16x1xf32>
    %321 = vector.broadcast %320 : vector<16x1xf32> to vector<16x32xf32>
    %322 = arith.mulf %317, %321 : vector<16x32xf32>
    %323 = vector.broadcast %206 : vector<1x32xf32> to vector<16x32xf32>
    %324 = arith.mulf %322, %323 : vector<16x32xf32>
    %325 = vector.broadcast %207 : vector<1x32xf32> to vector<16x32xf32>
    %326 = arith.addf %324, %325 : vector<16x32xf32>
    %327 = arith.truncf %326 : vector<16x32xf32> to vector<16x32xbf16>
    %c1_95 = arith.constant 1 : index
    %c0_96 = arith.constant 0 : index
    %c0_97 = arith.constant 0 : index
    %328 = vector.load %arg5[%c1_95, %c0_96, %c0_97] : memref<2x32x64xbf16, #tpu.memory_space<vmem>>, vector<1x32x64xbf16>
    %329 = vector.shape_cast %328 : vector<1x32x64xbf16> to vector<32x64xbf16>
    %cst_98 = arith.constant dense<0.000000e+00> : vector<16x64xf32>
    %330 = tpu.matmul %327, %329, %cst_98 {dimension_numbers = #tpu.dot_dimension_numbers<[1], [0], [0], [1], [0, 0, 1, 1], [], []>} : vector<16x32xbf16>, vector<32x64xbf16>, vector<16x64xf32> -> vector<16x64xf32>
    %331 = vector.broadcast %208 : vector<1x64xf32> to vector<16x64xf32>
    %332 = arith.addf %330, %331 : vector<16x64xf32>
    %cst_99 = arith.constant 5.000000e-01 : f32
    %333 = vector.broadcast %cst_99 : f32 to vector<16x64xf32>
    %334 = arith.mulf %333, %332 : vector<16x64xf32>
    %cst_100 = arith.constant 4.471500e-02 : f32
    %335 = vector.broadcast %cst_100 : f32 to vector<16x64xf32>
    %336 = arith.mulf %335, %332 : vector<16x64xf32>
    %337 = arith.mulf %336, %332 : vector<16x64xf32>
    %338 = arith.mulf %337, %332 : vector<16x64xf32>
    %339 = arith.addf %332, %338 : vector<16x64xf32>
    %cst_101 = arith.constant 0.797884583 : f32
    %340 = vector.broadcast %cst_101 : f32 to vector<16x64xf32>
    %341 = arith.mulf %340, %339 : vector<16x64xf32>
    %342 = math.tanh %341 : vector<16x64xf32>
    %cst_102 = arith.constant 1.000000e+00 : f32
    %343 = vector.broadcast %cst_102 : f32 to vector<16x64xf32>
    %344 = arith.addf %343, %342 : vector<16x64xf32>
    %345 = arith.mulf %334, %344 : vector<16x64xf32>
    %346 = arith.truncf %345 : vector<16x64xf32> to vector<16x64xbf16>
    %c1_103 = arith.constant 1 : index
    %c0_104 = arith.constant 0 : index
    %c0_105 = arith.constant 0 : index
    %347 = vector.load %arg6[%c1_103, %c0_104, %c0_105] : memref<2x64x32xbf16, #tpu.memory_space<vmem>>, vector<1x64x32xbf16>
    %348 = vector.shape_cast %347 : vector<1x64x32xbf16> to vector<64x32xbf16>
    %cst_106 = arith.constant dense<0.000000e+00> : vector<16x32xf32>
    %349 = tpu.matmul %346, %348, %cst_106 {dimension_numbers = #tpu.dot_dimension_numbers<[1], [0], [0], [1], [0, 0, 1, 1], [], []>} : vector<16x64xbf16>, vector<64x32xbf16>, vector<16x32xf32> -> vector<16x32xf32>
    %350 = vector.broadcast %209 : vector<1x32xf32> to vector<16x32xf32>
    %351 = arith.addf %349, %350 : vector<16x32xf32>
    %352 = arith.addf %326, %351 : vector<16x32xf32>
    %cst_107 = arith.constant dense<0.000000e+00> : vector<16xf32>
    %353 = vector.multi_reduction <add>, %352, %cst_107 [1] : vector<16x32xf32> to vector<16xf32>
    %354 = vector.shape_cast %353 : vector<16xf32> to vector<16x1xf32>
    %cst_108 = arith.constant 3.200000e+01 : f32
    %355 = vector.broadcast %cst_108 : f32 to vector<16x1xf32>
    %356 = arith.divf %354, %355 : vector<16x1xf32>
    %357 = vector.broadcast %356 : vector<16x1xf32> to vector<16x32xf32>
    %358 = arith.subf %352, %357 : vector<16x32xf32>
    %359 = arith.mulf %358, %358 : vector<16x32xf32>
    %cst_109 = arith.constant dense<0.000000e+00> : vector<16xf32>
    %360 = vector.multi_reduction <add>, %359, %cst_109 [1] : vector<16x32xf32> to vector<16xf32>
    %361 = vector.shape_cast %360 : vector<16xf32> to vector<16x1xf32>
    %cst_110 = arith.constant 3.200000e+01 : f32
    %362 = vector.broadcast %cst_110 : f32 to vector<16x1xf32>
    %363 = arith.divf %361, %362 : vector<16x1xf32>
    %364 = vector.broadcast %356 : vector<16x1xf32> to vector<16x32xf32>
    %365 = arith.subf %352, %364 : vector<16x32xf32>
    %cst_111 = arith.constant 9.99999996E-13 : f32
    %366 = vector.broadcast %cst_111 : f32 to vector<16x1xf32>
    %367 = arith.addf %363, %366 : vector<16x1xf32>
    %368 = math.rsqrt %367 : vector<16x1xf32>
    %369 = vector.broadcast %368 : vector<16x1xf32> to vector<16x32xf32>
    %370 = arith.mulf %365, %369 : vector<16x32xf32>
    %371 = vector.broadcast %210 : vector<1x32xf32> to vector<16x32xf32>
    %372 = arith.mulf %370, %371 : vector<16x32xf32>
    %373 = vector.broadcast %211 : vector<1x32xf32> to vector<16x32xf32>
    %374 = arith.addf %372, %373 : vector<16x32xf32>
    %375 = vector.shape_cast %374 : vector<16x32xf32> to vector<2x8x32xf32>
    %376 = vector.extract_strided_slice %375 {offsets = [0, 0, 0], sizes = [2, 1, 32], strides = [1, 1, 1]} : vector<2x8x32xf32> to vector<2x1x32xf32>
    %377 = vector.shape_cast %376 : vector<2x1x32xf32> to vector<2x32xf32>
    %378 = arith.truncf %377 : vector<2x32xf32> to vector<2x32xbf16>
    %c0_112 = arith.constant 0 : index
    %c0_113 = arith.constant 0 : index
    %379 = vector.load %arg7[%c0_112, %c0_113] : memref<32x32xbf16, #tpu.memory_space<vmem>>, vector<32x32xbf16>
    %cst_114 = arith.constant dense<0.000000e+00> : vector<2x32xf32>
    %380 = tpu.matmul %378, %379, %cst_114 {dimension_numbers = #tpu.dot_dimension_numbers<[1], [0], [0], [1], [0, 0, 1, 1], [], []>} : vector<2x32xbf16>, vector<32x32xbf16>, vector<2x32xf32> -> vector<2x32xf32>
    %381 = vector.extract_strided_slice %0 {offsets = [2, 0], sizes = [1, 32], strides = [1, 1]} : vector<8x128xf32> to vector<1x32xf32>
    %382 = vector.broadcast %381 : vector<1x32xf32> to vector<2x32xf32>
    %383 = arith.addf %380, %382 : vector<2x32xf32>
    %384 = math.tanh %383 : vector<2x32xf32>
    %385 = arith.truncf %384 : vector<2x32xf32> to vector<2x32xbf16>
    %c0_115 = arith.constant 0 : index
    %c0_116 = arith.constant 0 : index
    %386 = vector.load %arg8[%c0_115, %c0_116] : memref<32x128xbf16, #tpu.memory_space<vmem>>, vector<32x128xbf16>
    %cst_117 = arith.constant dense<0.000000e+00> : vector<2x128xf32>
    %387 = tpu.matmul %385, %386, %cst_117 {dimension_numbers = #tpu.dot_dimension_numbers<[1], [0], [0], [1], [0, 0, 1, 1], [], []>} : vector<2x32xbf16>, vector<32x128xbf16>, vector<2x128xf32> -> vector<2x128xf32>
    %388 = vector.extract_strided_slice %0 {offsets = [3, 0], sizes = [1, 128], strides = [1, 1]} : vector<8x128xf32> to vector<1x128xf32>
    %389 = vector.broadcast %388 : vector<1x128xf32> to vector<2x128xf32>
    %390 = arith.addf %387, %389 : vector<2x128xf32>
    %c0_118 = arith.constant 0 : index
    %c0_119 = arith.constant 0 : index
    %391 = vector.load %arg9[%c0_118, %c0_119] : memref<2x128xf32, #tpu.memory_space<vmem>>, vector<2x128xf32>
    tpu.vector_store %arg9[%c0_118, %c0_119], %390 {strides = array<i32>} : memref<2x128xf32, #tpu.memory_space<vmem>>, vector<2x128xf32>,
    return
  }
}

</mosaic_0001>

<llo_original>
// kernel: tpu_custom_call.1
$region0: #{tpu_custom_call.1}
  #allocation0 [shape = 'u32[]', space=smem, size = 0x4, offset = 0x4, fixed_abs, tag = 'smem constant byte address 0x4 - core index']
  #allocation1 [shape = 'u32[144,128]{1,0:T(1,128)}', space=vmem, size = 0x12000, scoped, tag = 'internal scratch']
  %s0 = inlined_call_operand.hbm [shape: f32[18,32], index: 0, kind: input, shape index: {}]
  %s1 = inlined_call_operand.hbm [shape: f32[2,8,128], index: 1, kind: input, shape index: {}]
  %s2 = inlined_call_operand.hbm [shape: f32[8,128], index: 2, kind: input, shape index: {}]
  %s3 = inlined_call_operand.vmem [shape: bf16[2,32,96], index: 3, kind: input, shape index: {}]
  %s4 = inlined_call_operand.vmem [shape: bf16[2,32,32], index: 4, kind: input, shape index: {}]
  %s5 = inlined_call_operand.vmem [shape: bf16[2,32,64], index: 5, kind: input, shape index: {}]
  %s6 = inlined_call_operand.vmem [shape: bf16[2,64,32], index: 6, kind: input, shape index: {}]
  %s7 = inlined_call_operand.vmem [shape: bf16[32,32], index: 7, kind: input, shape index: {}]
  %s8 = inlined_call_operand.hbm [shape: bf16[32,128], index: 8, kind: input, shape index: {}]
  %s9 = inlined_call_operand.hbm [shape: f32[2,128], index: 9, kind: output, shape index: {}]
  %s10 = sld [smem:[#allocation0]]
  $region62: #{tpu_custom_call.1} parent=0
    _
  %s12 = ssub.s32 1, %s10
  %s13 = scalar_select 0, %s12, %s10
  $region1: #{tpu_custom_call.1} parent=0
    #allocation2 [shape = 'u8[12288]{0}', space=vmem, size = 0x3000, scoped, tag = 'input window, operand 0, single buffered']
    #allocation3 [shape = 's32[1]{0}', space=sflag, size = 0x4, scoped, tag = 'scoped memory for tpu_custom_call.1']
    #allocation4 [shape = 's32[1]{0}', space=sflag, size = 0x4, scoped, tag = 'scoped memory for tpu_custom_call.1']
    #allocation5 [shape = 'u8[8192]{0}', space=vmem, size = 0x2000, scoped, tag = 'input window, operand 1, single buffered']
    #allocation6 [shape = 's32[1]{0}', space=sflag, size = 0x4, scoped, tag = 'scoped memory for tpu_custom_call.1']
    #allocation7 [shape = 'u8[4096]{0}', space=vmem, size = 0x1000, scoped, tag = 'input window, operand 2, single buffered']
    #allocation8 [shape = 'u8[8192]{0}', space=vmem, size = 0x2000, scoped, tag = 'input window, operand 8, single buffered']
    #allocation9 [shape = 's32[1]{0}', space=sflag, size = 0x4, scoped, tag = 'scoped memory for tpu_custom_call.1']
    #allocation10 [shape = 'u8[1024]{0}', space=vmem, size = 0x400, scoped, tag = 'output window, operand 0, single buffered']
    %14 = vsyncpa [#allocation3], 0
    %15 = vsyncpa [#allocation6], 0
    %16 = vsyncpa [#allocation9], 0
    %17 = vsyncpa [#allocation4], 0
    // Predicated region
    $region2: #{tpu_custom_call.1} parent=1 // pred_check
      _
    $region3: #{tpu_custom_call.1} parent=1 // pred_check_branch
      %19 = sbr.rel (0) target = $region5
    $region4: #{tpu_custom_call.1} parent=1 // pred_region
      %s21 = ssub.s32 384, 384
      %22 = vsyncadd [#allocation3], %s21
      %s23 = sshll.u32 [#allocation2], 4
      %s24 = int_to_ptr.vmem [resolvable:$true] %s23
      %29 = dma.hbm_to_vmem [thread:$0]  %s0, 384, %s24, [#allocation3], 128, 128, 8
    $region5: #{tpu_custom_call.1} parent=1 // pred_fallthru
      _
    // Predicated region
    $region6: #{tpu_custom_call.1} parent=1 // pred_check
      _
    $region7: #{tpu_custom_call.1} parent=1 // pred_check_branch
      %31 = sbr.rel (0) target = $region9
    $region8: #{tpu_custom_call.1} parent=1 // pred_region
      %s33 = ssub.s32 256, 256
      %34 = vsyncadd [#allocation6], %s33
      %s35 = sshll.u32 [#allocation5], 4
      %s36 = int_to_ptr.vmem [resolvable:$true] %s35
      %41 = dma.hbm_to_vmem [thread:$0]  %s1, 256, %s36, [#allocation6], 128, 128, 8
    $region9: #{tpu_custom_call.1} parent=1 // pred_fallthru
      _
    // Predicated region
    $region10: #{tpu_custom_call.1} parent=1 // pred_check
      _
    $region11: #{tpu_custom_call.1} parent=1 // pred_check_branch
      %43 = sbr.rel (0) target = $region13
    $region12: #{tpu_custom_call.1} parent=1 // pred_region
      %s45 = ssub.s32 128, 128
      %46 = vsyncadd [#allocation6], %s45
      %s48 = sshll.u32 [#allocation7], 4
      %s49 = int_to_ptr.vmem [resolvable:$true] %s48
      %51 = dma.hbm_to_vmem [thread:$0]  %s2, 128, %s49, [#allocation6]
    $region13: #{tpu_custom_call.1} parent=1 // pred_fallthru
      _
    // Predicated region
    $region14: #{tpu_custom_call.1} parent=1 // pred_check
      _
    $region15: #{tpu_custom_call.1} parent=1 // pred_check_branch
      %53 = sbr.rel (0) target = $region17
    $region16: #{tpu_custom_call.1} parent=1 // pred_region
      _
    $region17: #{tpu_custom_call.1} parent=1 // pred_fallthru
      _
    // Predicated region
    $region18: #{tpu_custom_call.1} parent=1 // pred_check
      _
    $region19: #{tpu_custom_call.1} parent=1 // pred_check_branch
      %55 = sbr.rel (0) target = $region21
    $region20: #{tpu_custom_call.1} parent=1 // pred_region
      _
    $region21: #{tpu_custom_call.1} parent=1 // pred_fallthru
      _
    // Predicated region
    $region22: #{tpu_custom_call.1} parent=1 // pred_check
      _
    $region23: #{tpu_custom_call.1} parent=1 // pred_check_branch
      %57 = sbr.rel (0) target = $region25
    $region24: #{tpu_custom_call.1} parent=1 // pred_region
      _
    $region25: #{tpu_custom_call.1} parent=1 // pred_fallthru
      _
    // Predicated region
    $region26: #{tpu_custom_call.1} parent=1 // pred_check
      _
    $region27: #{tpu_custom_call.1} parent=1 // pred_check_branch
      %59 = sbr.rel (0) target = $region29
    $region28: #{tpu_custom_call.1} parent=1 // pred_region
      _
    $region29: #{tpu_custom_call.1} parent=1 // pred_fallthru
      _
    // Predicated region
    $region30: #{tpu_custom_call.1} parent=1 // pred_check
      _
    $region31: #{tpu_custom_call.1} parent=1 // pred_check_branch
      %61 = sbr.rel (0) target = $region33
    $region32: #{tpu_custom_call.1} parent=1 // pred_region
      _
    $region33: #{tpu_custom_call.1} parent=1 // pred_fallthru
      _
    // Predicated region
    $region34: #{tpu_custom_call.1} parent=1 // pred_check
      _
    $region35: #{tpu_custom_call.1} parent=1 // pred_check_branch
      %63 = sbr.rel (0) target = $region37
    $region36: #{tpu_custom_call.1} parent=1 // pred_region
      %s65 = ssub.s32 256, 256
      %66 = vsyncadd [#allocation9], %s65
      %s67 = sshll.u32 [#allocation8], 4
      %s68 = int_to_ptr.vmem [resolvable:$true] %s67
      %73 = dma.hbm_to_vmem [thread:$0]  %s8, 256, %s68, [#allocation9], 64, 64, 4
    $region37: #{tpu_custom_call.1} parent=1 // pred_fallthru
      _
    // Predicated region
    $region38: #{tpu_custom_call.1} parent=1 // pred_check
      _
    $region39: #{tpu_custom_call.1} parent=1 // pred_check_branch
      %75 = sbr.rel (0) target = $region41
    $region40: #{tpu_custom_call.1} parent=1 // pred_region
      %76 = dma.done [#allocation3], 384
    $region41: #{tpu_custom_call.1} parent=1 // pred_fallthru
      _
    // Predicated region
    $region42: #{tpu_custom_call.1} parent=1 // pred_check
      _
    $region43: #{tpu_custom_call.1} parent=1 // pred_check_branch
      %78 = sbr.rel (0) target = $region45
    $region44: #{tpu_custom_call.1} parent=1 // pred_region
      %79 = dma.done [#allocation6], 256
    $region45: #{tpu_custom_call.1} parent=1 // pred_fallthru
      _
    // Predicated region
    $region46: #{tpu_custom_call.1} parent=1 // pred_check
      _
    $region47: #{tpu_custom_call.1} parent=1 // pred_check_branch
      %81 = sbr.rel (0) target = $region49
    $region48: #{tpu_custom_call.1} parent=1 // pred_region
      %82 = dma.done [#allocation6], 128
    $region49: #{tpu_custom_call.1} parent=1 // pred_fallthru
      _
    // Predicated region
    $region50: #{tpu_custom_call.1} parent=1 // pred_check
      _
    $region51: #{tpu_custom_call.1} parent=1 // pred_check_branch
      %84 = sbr.rel (0) target = $region53
    $region52: #{tpu_custom_call.1} parent=1 // pred_region
      %85 = dma.done [#allocation9], 256
    $region53: #{tpu_custom_call.1} parent=1 // pred_fallthru
      _
    %v87 = vld [vmem:[#allocation7] sm:$0xff]
    %v88 = vld [vmem:[#allocation2] sm:$0xff]
    %v89 = vld [vmem:[#allocation2 + $0x8] sm:$0xff]
    %v90 = vld [vmem:[#allocation2 + $0x10] sm:$0x3]
    %vm91 = vcmask 261120
    %v92 = vsel %vm91, %v88, 0.0
    %93 = vadd.xlane.f32.xlu0 %v92
    %v94 = vpop.xlane.xlu0 %93
    %v95 = vsel %vm91, %v89, 0.0
    %96 = vadd.xlane.f32.xlu0 %v95
    %v97 = vpop.xlane.xlu0 %96
    %v98 = vrcp.pop 32.0
    %v99 = vmul.f32 %v94, %v98
    %v100 = vmul.f32 %v97, %v98
    %v101 = vsub.f32 %v88, %v99
    %v102 = vsub.f32 %v89, %v100
    %v103 = vmul.f32 %v101, %v101
    %v104 = vmul.f32 %v102, %v102
    %v105 = vsel %vm91, %v103, 0.0
    %106 = vadd.xlane.f32.xlu0 %v105
    %v107 = vpop.xlane.xlu0 %106
    %v108 = vsel %vm91, %v104, 0.0
    %109 = vadd.xlane.f32.xlu0 %v108
    %v110 = vpop.xlane.xlu0 %109
    %v111 = vmul.f32 %v107, %v98
    %v112 = vmul.f32 %v110, %v98
    %v113 = vadd.f32 %v111, 1e-12
    %v114 = vadd.f32 %v112, 1e-12
    %v115 = vrsqrt.pop %v113
    %v116 = vrsqrt.pop %v114
    %v117 = vmul.f32 %v101, %v115
    %v118 = vmul.f32 %v102, %v116
    %v119 = vlaneseq
    %v120 = vshrl.u32 %v119, 7
    %v121 = vsub.s32 0, %v120
    %v122 = vrot.slane %v87, %v121
    %v123 = vmul.f32 %v117, %v122
    %v124 = vmul.f32 %v118, %v122
    %v125 = vlaneseq
    %v126 = vshrl.u32 %v125, 7
    %v127 = vsub.s32 1, %v126
    %v128 = vrot.slane %v87, %v127
    %v129 = vadd.f32 %v123, %v128
    %v130 = vadd.f32 %v124, %v128
    %v133 = vunpack.c.l.s4 1966171168
    %v134 = vunpack.c.0.s8 %v133
    %v135 = vlaneseq
    %v136 = vshrl.u32 %v135, 7
    %v137 = vsub.s32 %v134, %v136
    %v138 = vrot.slane %v90, %v137
    %v139 = vcombine.high %v138, %v138
    %v141 = vunpack.c.l.s4 1966171168
    %v142 = vunpack.c.0.s8 %v141
    %v143 = vlaneseq
    %v144 = vshrl.u32 %v143, 7
    %v145 = vsub.s32 %v142, %v144
    %v146 = vrot.slane %v138, %v145
    %v148 = vunpack.c.l.s4 1966171168
    %v149 = vunpack.c.0.s8 %v148
    %v150 = vlaneseq
    %v151 = vshrl.u32 %v150, 7
    %v152 = vsub.s32 %v149, %v151
    %v153 = vrot.slane %v139, %v152
    %v154 = vld [vmem:[#allocation5] sm:$0xff]
    %v155 = vpack.c.bf16 %v130, %v129
    %v156 = vld [vmem:[%s3] sm:$0xf]
    %v157 = vld [vmem:[%s3 + $0x4] sm:$0xf]
    %v158 = vld [vmem:[%s3 + $0x8] sm:$0xf]
    %v159 = vld [vmem:[%s3 + $0xc] sm:$0xf]
    %v160 = vlaneseq
    %v161 = vshrl.u32 %v160, 7
    %v162 = vsub.s32 0, %v161
    %v163 = vrot.slane %v154, %v162
    %v168 = vunpack.c.l.b16 %v156
    %v169 = vunpack.c.l.b16 %v157
    %v170 = vunpack.c.l.b16 %v158
    %v171 = vunpack.c.l.b16 %v159
    %v172 = vpack.c.b16 %v169, %v168
    %v173 = vpack.c.b16 %v171, %v170
    %v177 = vsel %vm91, %v155, 0
    %179 = vmatprep.subr.bf16.mxu0 0
    %180 = vmatpush1.bf16.msra.mxu0 %v172
    %181 = vmatprep.subr.bf16.mxu0 0
    %182 = vmatpush1.bf16.msra.mxu0 %v173
    %183 = vmatprep.subr.bf16.mxu0 0
    %184 = vmatpush1.bf16.msra.mxu0 0
    %185 = vmatprep.subr.bf16.mxu0 0
    %186 = vmatpush1.bf16.msra.mxu0 0
    %187 = vmatprep.subr.bf16.mxu0 0
    %188 = vmatpush1.bf16.msra.mxu0 0
    %189 = vmatprep.subr.bf16.mxu0 0
    %190 = vmatpush1.bf16.msra.mxu0 0
    %191 = vmatprep.subr.bf16.mxu0 0
    %192 = vmatpush1.bf16.msra.mxu0 0
    %193 = vmatprep.subr.bf16.mxu0 0
    %194 = vmatpush1.bf16.msra.mxu0 0
    %195 = vmatprep.subr.bf16.mxu0 0
    %196 = vmatpush1.bf16.msra.mxu0 0
    %197 = vmatprep.subr.bf16.mxu0 0
    %198 = vmatpush1.bf16.msra.mxu0 0
    %199 = vmatprep.subr.bf16.mxu0 0
    %200 = vmatpush1.bf16.msra.mxu0 0
    %201 = vmatprep.subr.bf16.mxu0 0
    %202 = vmatpush1.bf16.msra.mxu0 0
    %203 = vmatprep.subr.bf16.mxu0 0
    %204 = vmatpush1.bf16.msra.mxu0 0
    %205 = vmatprep.subr.bf16.mxu0 0
    %206 = vmatpush1.bf16.msra.mxu0 0
    %207 = vmatprep.subr.bf16.mxu0 0
    %208 = vmatpush1.bf16.msra.mxu0 0
    %209 = vmatprep.subr.bf16.mxu0 0
    %210 = vmatpush1.bf16.msra.mxu0 0
    %211 = vmatprep.mubr.bf16.mxu0 0
    %212 = vmatmul.mubr.bf16.gmra.mrb[0].mxu0 %v177
    %v213 = vpop.f32.mrb[0].mxu0
    %v214 = vadd.f32 %v163, %v213
    %v215 = vpop.f32.mrb[0].mxu0
    %v216 = vpop.f32.mrb[0].mxu0
    %v217 = vadd.f32 %v163, %v216
    %v218 = vpop.f32.mrb[0].mxu0
    %219 = vdwg.mxu0
    %v220 = vpack.c.bf16 %v217, %v214
    %v222 = vunpack.c.l.b16 %v220
    %v223 = vunpack.c.h.b16 %v220
    %v224 = vpack.c.b16 %v222, %v222
    %v225 = vpack.c.b16 %v223, %v223
    %226 = vrot.lane.b32.xlu0 %v224, 96
    %v227 = vpop.permute.xlu0 %226
    %vm228 = vcmask 64512
    %v230 = vsel %vm228, %v224, 0
    %v233 = vsel %vm228, %v227, 0
    %235 = vmatprep.subr.bf16.mxu0 0
    %236 = vmatpush1.bf16.xpose.msra.mxu0 %v233
    %237 = vmatprep.subr.bf16.mxu0 0
    %238 = vmatpush1.bf16.xpose.msra.mxu0 0
    %239 = vmatprep.subr.bf16.mxu0 0
    %240 = vmatpush1.bf16.xpose.msra.mxu0 0
    %241 = vmatprep.subr.bf16.mxu0 0
    %242 = vmatpush1.bf16.xpose.msra.mxu0 0
    %243 = vmatprep.subr.bf16.mxu0 0
    %244 = vmatpush1.bf16.xpose.msra.mxu0 0
    %245 = vmatprep.subr.bf16.mxu0 0
    %246 = vmatpush1.bf16.xpose.msra.mxu0 0
    %247 = vmatprep.subr.bf16.mxu0 0
    %248 = vmatpush1.bf16.xpose.msra.mxu0 0
    %249 = vmatprep.subr.bf16.mxu0 0
    %250 = vmatpush1.bf16.xpose.msra.mxu0 0
    %251 = vmatprep.subr.bf16.mxu0 0
    %252 = vmatpush1.bf16.xpose.msra.mxu0 0
    %253 = vmatprep.subr.bf16.mxu0 0
    %254 = vmatpush1.bf16.xpose.msra.mxu0 0
    %255 = vmatprep.subr.bf16.mxu0 0
    %256 = vmatpush1.bf16.xpose.msra.mxu0 0
    %257 = vmatprep.subr.bf16.mxu0 0
    %258 = vmatpush1.bf16.xpose.msra.mxu0 0
    %259 = vmatprep.subr.bf16.mxu0 0
    %260 = vmatpush1.bf16.xpose.msra.mxu0 0
    %261 = vmatprep.subr.bf16.mxu0 0
    %262 = vmatpush1.bf16.xpose.msra.mxu0 0
    %263 = vmatprep.subr.bf16.mxu0 0
    %264 = vmatpush1.bf16.xpose.msra.mxu0 0
    %265 = vmatprep.subr.bf16.mxu0 0
    %266 = vmatpush1.bf16.xpose.msra.mxu0 0
    %267 = vmatprep.mubr.bf16.mxu0 0
    %268 = vmatmul.mubr.bf16.gmra.mrb[0].mxu0 %v230
    %v269 = vpop.f32.mrb[0].mxu0
    %v270 = vadd.f32 0.0, %v269
    %v271 = vpop.f32.mrb[0].mxu0
    %v272 = vpop.f32.mrb[0].mxu0
    %v273 = vpop.f32.mrb[0].mxu0
    %274 = vdwg.mxu0
    %275 = vrot.lane.b32.xlu0 %v225, 96
    %v276 = vpop.permute.xlu0 %275
    %v278 = vsel %vm228, %v225, 0
    %v281 = vsel %vm228, %v276, 0
    %283 = vmatprep.subr.bf16.mxu0 0
    %284 = vmatpush1.bf16.xpose.msra.mxu0 %v281
    %285 = vmatprep.subr.bf16.mxu0 0
    %286 = vmatpush1.bf16.xpose.msra.mxu0 0
    %287 = vmatprep.subr.bf16.mxu0 0
    %288 = vmatpush1.bf16.xpose.msra.mxu0 0
    %289 = vmatprep.subr.bf16.mxu0 0
    %290 = vmatpush1.bf16.xpose.msra.mxu0 0
    %291 = vmatprep.subr.bf16.mxu0 0
    %292 = vmatpush1.bf16.xpose.msra.mxu0 0
    %293 = vmatprep.subr.bf16.mxu0 0
    %294 = vmatpush1.bf16.xpose.msra.mxu0 0
    %295 = vmatprep.subr.bf16.mxu0 0
    %296 = vmatpush1.bf16.xpose.msra.mxu0 0
    %297 = vmatprep.subr.bf16.mxu0 0
    %298 = vmatpush1.bf16.xpose.msra.mxu0 0
    %299 = vmatprep.subr.bf16.mxu0 0
    %300 = vmatpush1.bf16.xpose.msra.mxu0 0
    %301 = vmatprep.subr.bf16.mxu0 0
    %302 = vmatpush1.bf16.xpose.msra.mxu0 0
    %303 = vmatprep.subr.bf16.mxu0 0
    %304 = vmatpush1.bf16.xpose.msra.mxu0 0
    %305 = vmatprep.subr.bf16.mxu0 0
    %306 = vmatpush1.bf16.xpose.msra.mxu0 0
    %307 = vmatprep.subr.bf16.mxu0 0
    %308 = vmatpush1.bf16.xpose.msra.mxu0 0
    %309 = vmatprep.subr.bf16.mxu0 0
    %310 = vmatpush1.bf16.xpose.msra.mxu0 0
    %311 = vmatprep.subr.bf16.mxu0 0
    %312 = vmatpush1.bf16.xpose.msra.mxu0 0
    %313 = vmatprep.subr.bf16.mxu0 0
    %314 = vmatpush1.bf16.xpose.msra.mxu0 0
    %315 = vmatprep.mubr.bf16.mxu0 0
    %316 = vmatmul.mubr.bf16.gmra.mrb[0].mxu0 %v278
    %v317 = vpop.f32.mrb[0].mxu0
    %v318 = vadd.f32 0.0, %v317
    %v319 = vpop.f32.mrb[0].mxu0
    %v320 = vpop.f32.mrb[0].mxu0
    %v321 = vpop.f32.mrb[0].mxu0
    %322 = vdwg.mxu0
    %v323 = vmul.f32 %v270, 0.35355338
    %v324 = vmul.f32 %v318, 0.35355338
    %v325 = vlaneseq
    %v326 = vshrl.u32 %v325, 7
    %v327 = vsub.s32 0, %v326
    %v328 = vrot.slane %v146, %v327
    %v329 = vlaneseq
    %v330 = vshrl.u32 %v329, 7
    %v331 = vsub.s32 0, %v330
    %v332 = vrot.slane %v153, %v331
    %v335 = vadd.f32 %v323, %v328
    %v336 = vadd.f32 %v324, %v332
    %v337 = vsel %vm228, %v335, -inf
    %338 = vmax.xlane.f32.xlu0 %v337
    %v339 = vpop.xlane.xlu0 %338
    %v340 = vsel %vm228, %v336, -inf
    %341 = vmax.xlane.f32.xlu0 %v340
    %v342 = vpop.xlane.xlu0 %341
    %v343 = vsub.f32 %v335, %v339
    %v344 = vsub.f32 %v336, %v342
    %v345 = vmul.f32 %v343, 1.442695
    %v346 = vpow.pop %v345
    %v347 = vmul.f32 %v344, 1.442695
    %v348 = vpow.pop %v347
    %v349 = vsel %vm228, %v346, 0.0
    %350 = vadd.xlane.f32.xlu0 %v349
    %v351 = vpop.xlane.xlu0 %350
    %v352 = vsel %vm228, %v348, 0.0
    %353 = vadd.xlane.f32.xlu0 %v352
    %v354 = vpop.xlane.xlu0 %353
    %v355 = vrcp.pop %v351
    %v356 = vmul.f32 %v346, %v355
    %v357 = vrcp.pop %v354
    %v358 = vmul.f32 %v348, %v357
    %v359 = vpack.c.bf16 %v356, %v356
    %v360 = vpack.c.bf16 %v358, %v358
    %361 = vrot.lane.b32.xlu0 %v224, 64
    %v362 = vpop.permute.xlu0 %361
    %v364 = vsel %vm228, %v359, 0
    %vm366 = vcmask 1043456
    %v368 = vsel %vm366, %v362, 0
    %370 = vmatprep.subr.bf16.mxu0 0
    %371 = vmatpush1.bf16.msra.mxu0 %v368
    %372 = vmatprep.subr.bf16.mxu0 0
    %373 = vmatpush1.bf16.msra.mxu0 0
    %374 = vmatprep.subr.bf16.mxu0 0
    %375 = vmatpush1.bf16.msra.mxu0 0
    %376 = vmatprep.subr.bf16.mxu0 0
    %377 = vmatpush1.bf16.msra.mxu0 0
    %378 = vmatprep.subr.bf16.mxu0 0
    %379 = vmatpush1.bf16.msra.mxu0 0
    %380 = vmatprep.subr.bf16.mxu0 0
    %381 = vmatpush1.bf16.msra.mxu0 0
    %382 = vmatprep.subr.bf16.mxu0 0
    %383 = vmatpush1.bf16.msra.mxu0 0
    %384 = vmatprep.subr.bf16.mxu0 0
    %385 = vmatpush1.bf16.msra.mxu0 0
    %386 = vmatprep.subr.bf16.mxu0 0
    %387 = vmatpush1.bf16.msra.mxu0 0
    %388 = vmatprep.subr.bf16.mxu0 0
    %389 = vmatpush1.bf16.msra.mxu0 0
    %390 = vmatprep.subr.bf16.mxu0 0
    %391 = vmatpush1.bf16.msra.mxu0 0
    %392 = vmatprep.subr.bf16.mxu0 0
    %393 = vmatpush1.bf16.msra.mxu0 0
    %394 = vmatprep.subr.bf16.mxu0 0
    %395 = vmatpush1.bf16.msra.mxu0 0
    %396 = vmatprep.subr.bf16.mxu0 0
    %397 = vmatpush1.bf16.msra.mxu0 0
    %398 = vmatprep.subr.bf16.mxu0 0
    %399 = vmatpush1.bf16.msra.mxu0 0
    %400 = vmatprep.subr.bf16.mxu0 0
    %401 = vmatpush1.bf16.msra.mxu0 0
    %402 = vmatprep.mubr.bf16.mxu0 0
    %403 = vmatmul.mubr.bf16.gmra.mrb[0].mxu0 %v364
    %v404 = vpop.f32.mrb[0].mxu0
    %v405 = vadd.f32 0.0, %v404
    %v406 = vpop.f32.mrb[0].mxu0
    %v407 = vpop.f32.mrb[0].mxu0
    %v408 = vpop.f32.mrb[0].mxu0
    %409 = vdwg.mxu0
    %410 = vrot.lane.b32.xlu0 %v225, 64
    %v411 = vpop.permute.xlu0 %410
    %v413 = vsel %vm228, %v360, 0
    %v416 = vsel %vm366, %v411, 0
    %418 = vmatprep.subr.bf16.mxu0 0
    %419 = vmatpush1.bf16.msra.mxu0 %v416
    %420 = vmatprep.subr.bf16.mxu0 0
    %421 = vmatpush1.bf16.msra.mxu0 0
    %422 = vmatprep.subr.bf16.mxu0 0
    %423 = vmatpush1.bf16.msra.mxu0 0
    %424 = vmatprep.subr.bf16.mxu0 0
    %425 = vmatpush1.bf16.msra.mxu0 0
    %426 = vmatprep.subr.bf16.mxu0 0
    %427 = vmatpush1.bf16.msra.mxu0 0
    %428 = vmatprep.subr.bf16.mxu0 0
    %429 = vmatpush1.bf16.msra.mxu0 0
    %430 = vmatprep.subr.bf16.mxu0 0
    %431 = vmatpush1.bf16.msra.mxu0 0
    %432 = vmatprep.subr.bf16.mxu0 0
    %433 = vmatpush1.bf16.msra.mxu0 0
    %434 = vmatprep.subr.bf16.mxu0 0
    %435 = vmatpush1.bf16.msra.mxu0 0
    %436 = vmatprep.subr.bf16.mxu0 0
    %437 = vmatpush1.bf16.msra.mxu0 0
    %438 = vmatprep.subr.bf16.mxu0 0
    %439 = vmatpush1.bf16.msra.mxu0 0
    %440 = vmatprep.subr.bf16.mxu0 0
    %441 = vmatpush1.bf16.msra.mxu0 0
    %442 = vmatprep.subr.bf16.mxu0 0
    %443 = vmatpush1.bf16.msra.mxu0 0
    %444 = vmatprep.subr.bf16.mxu0 0
    %445 = vmatpush1.bf16.msra.mxu0 0
    %446 = vmatprep.subr.bf16.mxu0 0
    %447 = vmatpush1.bf16.msra.mxu0 0
    %448 = vmatprep.subr.bf16.mxu0 0
    %449 = vmatpush1.bf16.msra.mxu0 0
    %450 = vmatprep.mubr.bf16.mxu0 0
    %451 = vmatmul.mubr.bf16.gmra.mrb[0].mxu0 %v413
    %v452 = vpop.f32.mrb[0].mxu0
    %v453 = vadd.f32 0.0, %v452
    %v454 = vpop.f32.mrb[0].mxu0
    %v455 = vpop.f32.mrb[0].mxu0
    %v456 = vpop.f32.mrb[0].mxu0
    %457 = vdwg.mxu0
    %458 = vrot.lane.b32.xlu0 %v224, 120
    %v459 = vpop.permute.xlu0 %458
    %460 = vrot.lane.b32.xlu0 %v224, 88
    %v461 = vpop.permute.xlu0 %460
    %v463 = vsel %vm228, %v459, 0
    %v466 = vsel %vm228, %v461, 0
    %468 = vmatprep.subr.bf16.mxu0 0
    %469 = vmatpush1.bf16.xpose.msra.mxu0 %v466
    %470 = vmatprep.subr.bf16.mxu0 0
    %471 = vmatpush1.bf16.xpose.msra.mxu0 0
    %472 = vmatprep.subr.bf16.mxu0 0
    %473 = vmatpush1.bf16.xpose.msra.mxu0 0
    %474 = vmatprep.subr.bf16.mxu0 0
    %475 = vmatpush1.bf16.xpose.msra.mxu0 0
    %476 = vmatprep.subr.bf16.mxu0 0
    %477 = vmatpush1.bf16.xpose.msra.mxu0 0
    %478 = vmatprep.subr.bf16.mxu0 0
    %479 = vmatpush1.bf16.xpose.msra.mxu0 0
    %480 = vmatprep.subr.bf16.mxu0 0
    %481 = vmatpush1.bf16.xpose.msra.mxu0 0
    %482 = vmatprep.subr.bf16.mxu0 0
    %483 = vmatpush1.bf16.xpose.msra.mxu0 0
    %484 = vmatprep.subr.bf16.mxu0 0
    %485 = vmatpush1.bf16.xpose.msra.mxu0 0
    %486 = vmatprep.subr.bf16.mxu0 0
    %487 = vmatpush1.bf16.xpose.msra.mxu0 0
    %488 = vmatprep.subr.bf16.mxu0 0
    %489 = vmatpush1.bf16.xpose.msra.mxu0 0
    %490 = vmatprep.subr.bf16.mxu0 0
    %491 = vmatpush1.bf16.xpose.msra.mxu0 0
    %492 = vmatprep.subr.bf16.mxu0 0
    %493 = vmatpush1.bf16.xpose.msra.mxu0 0
    %494 = vmatprep.subr.bf16.mxu0 0
    %495 = vmatpush1.bf16.xpose.msra.mxu0 0
    %496 = vmatprep.subr.bf16.mxu0 0
    %497 = vmatpush1.bf16.xpose.msra.mxu0 0
    %498 = vmatprep.subr.bf16.mxu0 0
    %499 = vmatpush1.bf16.xpose.msra.mxu0 0
    %500 = vmatprep.mubr.bf16.mxu0 0
    %501 = vmatmul.mubr.bf16.gmra.mrb[0].mxu0 %v463
    %v502 = vpop.f32.mrb[0].mxu0
    %v503 = vadd.f32 0.0, %v502
    %v504 = vpop.f32.mrb[0].mxu0
    %v505 = vpop.f32.mrb[0].mxu0
    %v506 = vpop.f32.mrb[0].mxu0
    %507 = vdwg.mxu0
    %508 = vrot.lane.b32.xlu0 %v225, 120
    %v509 = vpop.permute.xlu0 %508
    %510 = vrot.lane.b32.xlu0 %v225, 88
    %v511 = vpop.permute.xlu0 %510
    %v513 = vsel %vm228, %v509, 0
    %v516 = vsel %vm228, %v511, 0
    %518 = vmatprep.subr.bf16.mxu0 0
    %519 = vmatpush1.bf16.xpose.msra.mxu0 %v516
    %520 = vmatprep.subr.bf16.mxu0 0
    %521 = vmatpush1.bf16.xpose.msra.mxu0 0
    %522 = vmatprep.subr.bf16.mxu0 0
    %523 = vmatpush1.bf16.xpose.msra.mxu0 0
    %524 = vmatprep.subr.bf16.mxu0 0
    %525 = vmatpush1.bf16.xpose.msra.mxu0 0
    %526 = vmatprep.subr.bf16.mxu0 0
    %527 = vmatpush1.bf16.xpose.msra.mxu0 0
    %528 = vmatprep.subr.bf16.mxu0 0
    %529 = vmatpush1.bf16.xpose.msra.mxu0 0
    %530 = vmatprep.subr.bf16.mxu0 0
    %531 = vmatpush1.bf16.xpose.msra.mxu0 0
    %532 = vmatprep.subr.bf16.mxu0 0
    %533 = vmatpush1.bf16.xpose.msra.mxu0 0
    %534 = vmatprep.subr.bf16.mxu0 0
    %535 = vmatpush1.bf16.xpose.msra.mxu0 0
    %536 = vmatprep.subr.bf16.mxu0 0
    %537 = vmatpush1.bf16.xpose.msra.mxu0 0
    %538 = vmatprep.subr.bf16.mxu0 0
    %539 = vmatpush1.bf16.xpose.msra.mxu0 0
    %540 = vmatprep.subr.bf16.mxu0 0
    %541 = vmatpush1.bf16.xpose.msra.mxu0 0
    %542 = vmatprep.subr.bf16.mxu0 0
    %543 = vmatpush1.bf16.xpose.msra.mxu0 0
    %544 = vmatprep.subr.bf16.mxu0 0
    %545 = vmatpush1.bf16.xpose.msra.mxu0 0
    %546 = vmatprep.subr.bf16.mxu0 0
    %547 = vmatpush1.bf16.xpose.msra.mxu0 0
    %548 = vmatprep.subr.bf16.mxu0 0
    %549 = vmatpush1.bf16.xpose.msra.mxu0 0
    %550 = vmatprep.mubr.bf16.mxu0 0
    %551 = vmatmul.mubr.bf16.gmra.mrb[0].mxu0 %v513
    %v552 = vpop.f32.mrb[0].mxu0
    %v553 = vadd.f32 0.0, %v552
    %v554 = vpop.f32.mrb[0].mxu0
    %v555 = vpop.f32.mrb[0].mxu0
    %v556 = vpop.f32.mrb[0].mxu0
    %557 = vdwg.mxu0
    %v558 = vmul.f32 %v503, 0.35355338
    %v559 = vmul.f32 %v553, 0.35355338
    %v560 = vadd.f32 %v558, %v328
    %v561 = vadd.f32 %v559, %v332
    %v562 = vsel %vm228, %v560, -inf
    %563 = vmax.xlane.f32.xlu0 %v562
    %v564 = vpop.xlane.xlu0 %563
    %v565 = vsel %vm228, %v561, -inf
    %566 = vmax.xlane.f32.xlu0 %v565
    %v567 = vpop.xlane.xlu0 %566
    %v568 = vsub.f32 %v560, %v564
    %v569 = vsub.f32 %v561, %v567
    %v570 = vmul.f32 %v568, 1.442695
    %v571 = vpow.pop %v570
    %v572 = vmul.f32 %v569, 1.442695
    %v573 = vpow.pop %v572
    %v574 = vsel %vm228, %v571, 0.0
    %575 = vadd.xlane.f32.xlu0 %v574
    %v576 = vpop.xlane.xlu0 %575
    %v577 = vsel %vm228, %v573, 0.0
    %578 = vadd.xlane.f32.xlu0 %v577
    %v579 = vpop.xlane.xlu0 %578
    %v580 = vrcp.pop %v576
    %v581 = vmul.f32 %v571, %v580
    %v582 = vrcp.pop %v579
    %v583 = vmul.f32 %v573, %v582
    %v584 = vpack.c.bf16 %v581, %v581
    %v585 = vpack.c.bf16 %v583, %v583
    %586 = vrot.lane.b32.xlu0 %v224, 56
    %v587 = vpop.permute.xlu0 %586
    %v589 = vsel %vm228, %v584, 0
    %v592 = vsel %vm366, %v587, 0
    %594 = vmatprep.subr.bf16.mxu0 0
    %595 = vmatpush1.bf16.msra.mxu0 %v592
    %596 = vmatprep.subr.bf16.mxu0 0
    %597 = vmatpush1.bf16.msra.mxu0 0
    %598 = vmatprep.subr.bf16.mxu0 0
    %599 = vmatpush1.bf16.msra.mxu0 0
    %600 = vmatprep.subr.bf16.mxu0 0
    %601 = vmatpush1.bf16.msra.mxu0 0
    %602 = vmatprep.subr.bf16.mxu0 0
    %603 = vmatpush1.bf16.msra.mxu0 0
    %604 = vmatprep.subr.bf16.mxu0 0
    %605 = vmatpush1.bf16.msra.mxu0 0
    %606 = vmatprep.subr.bf16.mxu0 0
    %607 = vmatpush1.bf16.msra.mxu0 0
    %608 = vmatprep.subr.bf16.mxu0 0
    %609 = vmatpush1.bf16.msra.mxu0 0
    %610 = vmatprep.subr.bf16.mxu0 0
    %611 = vmatpush1.bf16.msra.mxu0 0
    %612 = vmatprep.subr.bf16.mxu0 0
    %613 = vmatpush1.bf16.msra.mxu0 0
    %614 = vmatprep.subr.bf16.mxu0 0
    %615 = vmatpush1.bf16.msra.mxu0 0
    %616 = vmatprep.subr.bf16.mxu0 0
    %617 = vmatpush1.bf16.msra.mxu0 0
    %618 = vmatprep.subr.bf16.mxu0 0
    %619 = vmatpush1.bf16.msra.mxu0 0
    %620 = vmatprep.subr.bf16.mxu0 0
    %621 = vmatpush1.bf16.msra.mxu0 0
    %622 = vmatprep.subr.bf16.mxu0 0
    %623 = vmatpush1.bf16.msra.mxu0 0
    %624 = vmatprep.subr.bf16.mxu0 0
    %625 = vmatpush1.bf16.msra.mxu0 0
    %626 = vmatprep.mubr.bf16.mxu0 0
    %627 = vmatmul.mubr.bf16.gmra.mrb[0].mxu0 %v589
    %v628 = vpop.f32.mrb[0].mxu0
    %v629 = vadd.f32 0.0, %v628
    %v630 = vpop.f32.mrb[0].mxu0
    %v631 = vpop.f32.mrb[0].mxu0
    %v632 = vpop.f32.mrb[0].mxu0
    %633 = vdwg.mxu0
    %634 = vrot.lane.b32.xlu0 %v225, 56
    %v635 = vpop.permute.xlu0 %634
    %v637 = vsel %vm228, %v585, 0
    %v640 = vsel %vm366, %v635, 0
    %642 = vmatprep.subr.bf16.mxu0 0
    %643 = vmatpush1.bf16.msra.mxu0 %v640
    %644 = vmatprep.subr.bf16.mxu0 0
    %645 = vmatpush1.bf16.msra.mxu0 0
    %646 = vmatprep.subr.bf16.mxu0 0
    %647 = vmatpush1.bf16.msra.mxu0 0
    %648 = vmatprep.subr.bf16.mxu0 0
    %649 = vmatpush1.bf16.msra.mxu0 0
    %650 = vmatprep.subr.bf16.mxu0 0
    %651 = vmatpush1.bf16.msra.mxu0 0
    %652 = vmatprep.subr.bf16.mxu0 0
    %653 = vmatpush1.bf16.msra.mxu0 0
    %654 = vmatprep.subr.bf16.mxu0 0
    %655 = vmatpush1.bf16.msra.mxu0 0
    %656 = vmatprep.subr.bf16.mxu0 0
    %657 = vmatpush1.bf16.msra.mxu0 0
    %658 = vmatprep.subr.bf16.mxu0 0
    %659 = vmatpush1.bf16.msra.mxu0 0
    %660 = vmatprep.subr.bf16.mxu0 0
    %661 = vmatpush1.bf16.msra.mxu0 0
    %662 = vmatprep.subr.bf16.mxu0 0
    %663 = vmatpush1.bf16.msra.mxu0 0
    %664 = vmatprep.subr.bf16.mxu0 0
    %665 = vmatpush1.bf16.msra.mxu0 0
    %666 = vmatprep.subr.bf16.mxu0 0
    %667 = vmatpush1.bf16.msra.mxu0 0
    %668 = vmatprep.subr.bf16.mxu0 0
    %669 = vmatpush1.bf16.msra.mxu0 0
    %670 = vmatprep.subr.bf16.mxu0 0
    %671 = vmatpush1.bf16.msra.mxu0 0
    %672 = vmatprep.subr.bf16.mxu0 0
    %673 = vmatpush1.bf16.msra.mxu0 0
    %674 = vmatprep.mubr.bf16.mxu0 0
    %675 = vmatmul.mubr.bf16.gmra.mrb[0].mxu0 %v637
    %v676 = vpop.f32.mrb[0].mxu0
    %v677 = vadd.f32 0.0, %v676
    %v678 = vpop.f32.mrb[0].mxu0
    %v679 = vpop.f32.mrb[0].mxu0
    %v680 = vpop.f32.mrb[0].mxu0
    %681 = vdwg.mxu0
    %682 = vrot.lane.b32.xlu0 %v224, 112
    %v683 = vpop.permute.xlu0 %682
    %684 = vrot.lane.b32.xlu0 %v224, 80
    %v685 = vpop.permute.xlu0 %684
    %v687 = vsel %vm228, %v683, 0
    %v690 = vsel %vm228, %v685, 0
    %692 = vmatprep.subr.bf16.mxu0 0
    %693 = vmatpush1.bf16.xpose.msra.mxu0 %v690
    %694 = vmatprep.subr.bf16.mxu0 0
    %695 = vmatpush1.bf16.xpose.msra.mxu0 0
    %696 = vmatprep.subr.bf16.mxu0 0
    %697 = vmatpush1.bf16.xpose.msra.mxu0 0
    %698 = vmatprep.subr.bf16.mxu0 0
    %699 = vmatpush1.bf16.xpose.msra.mxu0 0
    %700 = vmatprep.subr.bf16.mxu0 0
    %701 = vmatpush1.bf16.xpose.msra.mxu0 0
    %702 = vmatprep.subr.bf16.mxu0 0
    %703 = vmatpush1.bf16.xpose.msra.mxu0 0
    %704 = vmatprep.subr.bf16.mxu0 0
    %705 = vmatpush1.bf16.xpose.msra.mxu0 0
    %706 = vmatprep.subr.bf16.mxu0 0
    %707 = vmatpush1.bf16.xpose.msra.mxu0 0
    %708 = vmatprep.subr.bf16.mxu0 0
    %709 = vmatpush1.bf16.xpose.msra.mxu0 0
    %710 = vmatprep.subr.bf16.mxu0 0
    %711 = vmatpush1.bf16.xpose.msra.mxu0 0
    %712 = vmatprep.subr.bf16.mxu0 0
    %713 = vmatpush1.bf16.xpose.msra.mxu0 0
    %714 = vmatprep.subr.bf16.mxu0 0
    %715 = vmatpush1.bf16.xpose.msra.mxu0 0
    %716 = vmatprep.subr.bf16.mxu0 0
    %717 = vmatpush1.bf16.xpose.msra.mxu0 0
    %718 = vmatprep.subr.bf16.mxu0 0
    %719 = vmatpush1.bf16.xpose.msra.mxu0 0
    %720 = vmatprep.subr.bf16.mxu0 0
    %721 = vmatpush1.bf16.xpose.msra.mxu0 0
    %722 = vmatprep.subr.bf16.mxu0 0
    %723 = vmatpush1.bf16.xpose.msra.mxu0 0
    %724 = vmatprep.mubr.bf16.mxu0 0
    %725 = vmatmul.mubr.bf16.gmra.mrb[0].mxu0 %v687
    %v726 = vpop.f32.mrb[0].mxu0
    %v727 = vadd.f32 0.0, %v726
    %v728 = vpop.f32.mrb[0].mxu0
    %v729 = vpop.f32.mrb[0].mxu0
    %v730 = vpop.f32.mrb[0].mxu0
    %731 = vdwg.mxu0
    %732 = vrot.lane.b32.xlu0 %v225, 112
    %v733 = vpop.permute.xlu0 %732
    %734 = vrot.lane.b32.xlu0 %v225, 80
    %v735 = vpop.permute.xlu0 %734
    %v737 = vsel %vm228, %v733, 0
    %v740 = vsel %vm228, %v735, 0
    %742 = vmatprep.subr.bf16.mxu0 0
    %743 = vmatpush1.bf16.xpose.msra.mxu0 %v740
    %744 = vmatprep.subr.bf16.mxu0 0
    %745 = vmatpush1.bf16.xpose.msra.mxu0 0
    %746 = vmatprep.subr.bf16.mxu0 0
    %747 = vmatpush1.bf16.xpose.msra.mxu0 0
    %748 = vmatprep.subr.bf16.mxu0 0
    %749 = vmatpush1.bf16.xpose.msra.mxu0 0
    %750 = vmatprep.subr.bf16.mxu0 0
    %751 = vmatpush1.bf16.xpose.msra.mxu0 0
    %752 = vmatprep.subr.bf16.mxu0 0
    %753 = vmatpush1.bf16.xpose.msra.mxu0 0
    %754 = vmatprep.subr.bf16.mxu0 0
    %755 = vmatpush1.bf16.xpose.msra.mxu0 0
    %756 = vmatprep.subr.bf16.mxu0 0
    %757 = vmatpush1.bf16.xpose.msra.mxu0 0
    %758 = vmatprep.subr.bf16.mxu0 0
    %759 = vmatpush1.bf16.xpose.msra.mxu0 0
    %760 = vmatprep.subr.bf16.mxu0 0
    %761 = vmatpush1.bf16.xpose.msra.mxu0 0
    %762 = vmatprep.subr.bf16.mxu0 0
    %763 = vmatpush1.bf16.xpose.msra.mxu0 0
    %764 = vmatprep.subr.bf16.mxu0 0
    %765 = vmatpush1.bf16.xpose.msra.mxu0 0
    %766 = vmatprep.subr.bf16.mxu0 0
    %767 = vmatpush1.bf16.xpose.msra.mxu0 0
    %768 = vmatprep.subr.bf16.mxu0 0
    %769 = vmatpush1.bf16.xpose.msra.mxu0 0
    %770 = vmatprep.subr.bf16.mxu0 0
    %771 = vmatpush1.bf16.xpose.msra.mxu0 0
    %772 = vmatprep.subr.bf16.mxu0 0
    %773 = vmatpush1.bf16.xpose.msra.mxu0 0
    %774 = vmatprep.mubr.bf16.mxu0 0
    %775 = vmatmul.mubr.bf16.gmra.mrb[0].mxu0 %v737
    %v776 = vpop.f32.mrb[0].mxu0
    %v777 = vadd.f32 0.0, %v776
    %v778 = vpop.f32.mrb[0].mxu0
    %v779 = vpop.f32.mrb[0].mxu0
    %v780 = vpop.f32.mrb[0].mxu0
    %781 = vdwg.mxu0
    %v782 = vmul.f32 %v727, 0.35355338
    %v783 = vmul.f32 %v777, 0.35355338
    %v784 = vadd.f32 %v782, %v328
    %v785 = vadd.f32 %v783, %v332
    %v786 = vsel %vm228, %v784, -inf
    %787 = vmax.xlane.f32.xlu0 %v786
    %v788 = vpop.xlane.xlu0 %787
    %v789 = vsel %vm228, %v785, -inf
    %790 = vmax.xlane.f32.xlu0 %v789
    %v791 = vpop.xlane.xlu0 %790
    %v792 = vsub.f32 %v784, %v788
    %v793 = vsub.f32 %v785, %v791
    %v794 = vmul.f32 %v792, 1.442695
    %v795 = vpow.pop %v794
    %v796 = vmul.f32 %v793, 1.442695
    %v797 = vpow.pop %v796
    %v798 = vsel %vm228, %v795, 0.0
    %799 = vadd.xlane.f32.xlu0 %v798
    %v800 = vpop.xlane.xlu0 %799
    %v801 = vsel %vm228, %v797, 0.0
    %802 = vadd.xlane.f32.xlu0 %v801
    %v803 = vpop.xlane.xlu0 %802
    %v804 = vrcp.pop %v800
    %v805 = vmul.f32 %v795, %v804
    %v806 = vrcp.pop %v803
    %v807 = vmul.f32 %v797, %v806
    %v808 = vpack.c.bf16 %v805, %v805
    %v809 = vpack.c.bf16 %v807, %v807
    %810 = vrot.lane.b32.xlu0 %v224, 48
    %v811 = vpop.permute.xlu0 %810
    %v813 = vsel %vm228, %v808, 0
    %v816 = vsel %vm366, %v811, 0
    %818 = vmatprep.subr.bf16.mxu0 0
    %819 = vmatpush1.bf16.msra.mxu0 %v816
    %820 = vmatprep.subr.bf16.mxu0 0
    %821 = vmatpush1.bf16.msra.mxu0 0
    %822 = vmatprep.subr.bf16.mxu0 0
    %823 = vmatpush1.bf16.msra.mxu0 0
    %824 = vmatprep.subr.bf16.mxu0 0
    %825 = vmatpush1.bf16.msra.mxu0 0
    %826 = vmatprep.subr.bf16.mxu0 0
    %827 = vmatpush1.bf16.msra.mxu0 0
    %828 = vmatprep.subr.bf16.mxu0 0
    %829 = vmatpush1.bf16.msra.mxu0 0
    %830 = vmatprep.subr.bf16.mxu0 0
    %831 = vmatpush1.bf16.msra.mxu0 0
    %832 = vmatprep.subr.bf16.mxu0 0
    %833 = vmatpush1.bf16.msra.mxu0 0
    %834 = vmatprep.subr.bf16.mxu0 0
    %835 = vmatpush1.bf16.msra.mxu0 0
    %836 = vmatprep.subr.bf16.mxu0 0
    %837 = vmatpush1.bf16.msra.mxu0 0
    %838 = vmatprep.subr.bf16.mxu0 0
    %839 = vmatpush1.bf16.msra.mxu0 0
    %840 = vmatprep.subr.bf16.mxu0 0
    %841 = vmatpush1.bf16.msra.mxu0 0
    %842 = vmatprep.subr.bf16.mxu0 0
    %843 = vmatpush1.bf16.msra.mxu0 0
    %844 = vmatprep.subr.bf16.mxu0 0
    %845 = vmatpush1.bf16.msra.mxu0 0
    %846 = vmatprep.subr.bf16.mxu0 0
    %847 = vmatpush1.bf16.msra.mxu0 0
    %848 = vmatprep.subr.bf16.mxu0 0
    %849 = vmatpush1.bf16.msra.mxu0 0
    %850 = vmatprep.mubr.bf16.mxu0 0
    %851 = vmatmul.mubr.bf16.gmra.mrb[0].mxu0 %v813
    %v852 = vpop.f32.mrb[0].mxu0
    %v853 = vadd.f32 0.0, %v852
    %v854 = vpop.f32.mrb[0].mxu0
    %v855 = vpop.f32.mrb[0].mxu0
    %v856 = vpop.f32.mrb[0].mxu0
    %857 = vdwg.mxu0
    %858 = vrot.lane.b32.xlu0 %v225, 48
    %v859 = vpop.permute.xlu0 %858
    %v861 = vsel %vm228, %v809, 0
    %v864 = vsel %vm366, %v859, 0
    %866 = vmatprep.subr.bf16.mxu0 0
    %867 = vmatpush1.bf16.msra.mxu0 %v864
    %868 = vmatprep.subr.bf16.mxu0 0
    %869 = vmatpush1.bf16.msra.mxu0 0
    %870 = vmatprep.subr.bf16.mxu0 0
    %871 = vmatpush1.bf16.msra.mxu0 0
    %872 = vmatprep.subr.bf16.mxu0 0
    %873 = vmatpush1.bf16.msra.mxu0 0
    %874 = vmatprep.subr.bf16.mxu0 0
    %875 = vmatpush1.bf16.msra.mxu0 0
    %876 = vmatprep.subr.bf16.mxu0 0
    %877 = vmatpush1.bf16.msra.mxu0 0
    %878 = vmatprep.subr.bf16.mxu0 0
    %879 = vmatpush1.bf16.msra.mxu0 0
    %880 = vmatprep.subr.bf16.mxu0 0
    %881 = vmatpush1.bf16.msra.mxu0 0
    %882 = vmatprep.subr.bf16.mxu0 0
    %883 = vmatpush1.bf16.msra.mxu0 0
    %884 = vmatprep.subr.bf16.mxu0 0
    %885 = vmatpush1.bf16.msra.mxu0 0
    %886 = vmatprep.subr.bf16.mxu0 0
    %887 = vmatpush1.bf16.msra.mxu0 0
    %888 = vmatprep.subr.bf16.mxu0 0
    %889 = vmatpush1.bf16.msra.mxu0 0
    %890 = vmatprep.subr.bf16.mxu0 0
    %891 = vmatpush1.bf16.msra.mxu0 0
    %892 = vmatprep.subr.bf16.mxu0 0
    %893 = vmatpush1.bf16.msra.mxu0 0
    %894 = vmatprep.subr.bf16.mxu0 0
    %895 = vmatpush1.bf16.msra.mxu0 0
    %896 = vmatprep.subr.bf16.mxu0 0
    %897 = vmatpush1.bf16.msra.mxu0 0
    %898 = vmatprep.mubr.bf16.mxu0 0
    %899 = vmatmul.mubr.bf16.gmra.mrb[0].mxu0 %v861
    %v900 = vpop.f32.mrb[0].mxu0
    %v901 = vadd.f32 0.0, %v900
    %v902 = vpop.f32.mrb[0].mxu0
    %v903 = vpop.f32.mrb[0].mxu0
    %v904 = vpop.f32.mrb[0].mxu0
    %905 = vdwg.mxu0
    %906 = vrot.lane.b32.xlu0 %v224, 104
    %v907 = vpop.permute.xlu0 %906
    %908 = vrot.lane.b32.xlu0 %v224, 72
    %v909 = vpop.permute.xlu0 %908
    %v911 = vsel %vm228, %v907, 0
    %v914 = vsel %vm228, %v909, 0
    %916 = vmatprep.subr.bf16.mxu0 0
    %917 = vmatpush1.bf16.xpose.msra.mxu0 %v914
    %918 = vmatprep.subr.bf16.mxu0 0
    %919 = vmatpush1.bf16.xpose.msra.mxu0 0
    %920 = vmatprep.subr.bf16.mxu0 0
    %921 = vmatpush1.bf16.xpose.msra.mxu0 0
    %922 = vmatprep.subr.bf16.mxu0 0
    %923 = vmatpush1.bf16.xpose.msra.mxu0 0
    %924 = vmatprep.subr.bf16.mxu0 0
    %925 = vmatpush1.bf16.xpose.msra.mxu0 0
    %926 = vmatprep.subr.bf16.mxu0 0
    %927 = vmatpush1.bf16.xpose.msra.mxu0 0
    %928 = vmatprep.subr.bf16.mxu0 0
    %929 = vmatpush1.bf16.xpose.msra.mxu0 0
    %930 = vmatprep.subr.bf16.mxu0 0
    %931 = vmatpush1.bf16.xpose.msra.mxu0 0
    %932 = vmatprep.subr.bf16.mxu0 0
    %933 = vmatpush1.bf16.xpose.msra.mxu0 0
    %934 = vmatprep.subr.bf16.mxu0 0
    %935 = vmatpush1.bf16.xpose.msra.mxu0 0
    %936 = vmatprep.subr.bf16.mxu0 0
    %937 = vmatpush1.bf16.xpose.msra.mxu0 0
    %938 = vmatprep.subr.bf16.mxu0 0
    %939 = vmatpush1.bf16.xpose.msra.mxu0 0
    %940 = vmatprep.subr.bf16.mxu0 0
    %941 = vmatpush1.bf16.xpose.msra.mxu0 0
    %942 = vmatprep.subr.bf16.mxu0 0
    %943 = vmatpush1.bf16.xpose.msra.mxu0 0
    %944 = vmatprep.subr.bf16.mxu0 0
    %945 = vmatpush1.bf16.xpose.msra.mxu0 0
    %946 = vmatprep.subr.bf16.mxu0 0
    %947 = vmatpush1.bf16.xpose.msra.mxu0 0
    %948 = vmatprep.mubr.bf16.mxu0 0
    %949 = vmatmul.mubr.bf16.gmra.mrb[0].mxu0 %v911
    %v950 = vpop.f32.mrb[0].mxu0
    %v951 = vadd.f32 0.0, %v950
    %v952 = vpop.f32.mrb[0].mxu0
    %v953 = vpop.f32.mrb[0].mxu0
    %v954 = vpop.f32.mrb[0].mxu0
    %955 = vdwg.mxu0
    %956 = vrot.lane.b32.xlu0 %v225, 104
    %v957 = vpop.permute.xlu0 %956
    %958 = vrot.lane.b32.xlu0 %v225, 72
    %v959 = vpop.permute.xlu0 %958
    %v961 = vsel %vm228, %v957, 0
    %v964 = vsel %vm228, %v959, 0
    %966 = vmatprep.subr.bf16.mxu0 0
    %967 = vmatpush1.bf16.xpose.msra.mxu0 %v964
    %968 = vmatprep.subr.bf16.mxu0 0
    %969 = vmatpush1.bf16.xpose.msra.mxu0 0
    %970 = vmatprep.subr.bf16.mxu0 0
    %971 = vmatpush1.bf16.xpose.msra.mxu0 0
    %972 = vmatprep.subr.bf16.mxu0 0
    %973 = vmatpush1.bf16.xpose.msra.mxu0 0
    %974 = vmatprep.subr.bf16.mxu0 0
    %975 = vmatpush1.bf16.xpose.msra.mxu0 0
    %976 = vmatprep.subr.bf16.mxu0 0
    %977 = vmatpush1.bf16.xpose.msra.mxu0 0
    %978 = vmatprep.subr.bf16.mxu0 0
    %979 = vmatpush1.bf16.xpose.msra.mxu0 0
    %980 = vmatprep.subr.bf16.mxu0 0
    %981 = vmatpush1.bf16.xpose.msra.mxu0 0
    %982 = vmatprep.subr.bf16.mxu0 0
    %983 = vmatpush1.bf16.xpose.msra.mxu0 0
    %984 = vmatprep.subr.bf16.mxu0 0
    %985 = vmatpush1.bf16.xpose.msra.mxu0 0
    %986 = vmatprep.subr.bf16.mxu0 0
    %987 = vmatpush1.bf16.xpose.msra.mxu0 0
    %988 = vmatprep.subr.bf16.mxu0 0
    %989 = vmatpush1.bf16.xpose.msra.mxu0 0
    %990 = vmatprep.subr.bf16.mxu0 0
    %991 = vmatpush1.bf16.xpose.msra.mxu0 0
    %992 = vmatprep.subr.bf16.mxu0 0
    %993 = vmatpush1.bf16.xpose.msra.mxu0 0
    %994 = vmatprep.subr.bf16.mxu0 0
    %995 = vmatpush1.bf16.xpose.msra.mxu0 0
    %996 = vmatprep.subr.bf16.mxu0 0
    %997 = vmatpush1.bf16.xpose.msra.mxu0 0
    %998 = vmatprep.mubr.bf16.mxu0 0
    %999 = vmatmul.mubr.bf16.gmra.mrb[0].mxu0 %v961
    %v1000 = vpop.f32.mrb[0].mxu0
    %v1001 = vadd.f32 0.0, %v1000
    %v1002 = vpop.f32.mrb[0].mxu0
    %v1003 = vpop.f32.mrb[0].mxu0
    %v1004 = vpop.f32.mrb[0].mxu0
    %1005 = vdwg.mxu0
    %v1006 = vmul.f32 %v951, 0.35355338
    %v1007 = vmul.f32 %v1001, 0.35355338
    %v1008 = vadd.f32 %v1006, %v328
    %v1009 = vadd.f32 %v1007, %v332
    %v1010 = vsel %vm228, %v1008, -inf
    %1011 = vmax.xlane.f32.xlu0 %v1010
    %v1012 = vpop.xlane.xlu0 %1011
    %v1013 = vsel %vm228, %v1009, -inf
    %1014 = vmax.xlane.f32.xlu0 %v1013
    %v1015 = vpop.xlane.xlu0 %1014
    %v1016 = vsub.f32 %v1008, %v1012
    %v1017 = vsub.f32 %v1009, %v1015
    %v1018 = vmul.f32 %v1016, 1.442695
    %v1019 = vpow.pop %v1018
    %v1020 = vmul.f32 %v1017, 1.442695
    %v1021 = vpow.pop %v1020
    %v1022 = vsel %vm228, %v1019, 0.0
    %1023 = vadd.xlane.f32.xlu0 %v1022
    %v1024 = vpop.xlane.xlu0 %1023
    %v1025 = vsel %vm228, %v1021, 0.0
    %1026 = vadd.xlane.f32.xlu0 %v1025
    %v1027 = vpop.xlane.xlu0 %1026
    %v1028 = vrcp.pop %v1024
    %v1029 = vmul.f32 %v1019, %v1028
    %v1030 = vrcp.pop %v1027
    %v1031 = vmul.f32 %v1021, %v1030
    %v1032 = vpack.c.bf16 %v1029, %v1029
    %v1033 = vpack.c.bf16 %v1031, %v1031
    %1034 = vrot.lane.b32.xlu0 %v224, 40
    %v1035 = vpop.permute.xlu0 %1034
    %v1037 = vsel %vm228, %v1032, 0
    %v1040 = vsel %vm366, %v1035, 0
    %1042 = vmatprep.subr.bf16.mxu0 0
    %1043 = vmatpush1.bf16.msra.mxu0 %v1040
    %1044 = vmatprep.subr.bf16.mxu0 0
    %1045 = vmatpush1.bf16.msra.mxu0 0
    %1046 = vmatprep.subr.bf16.mxu0 0
    %1047 = vmatpush1.bf16.msra.mxu0 0
    %1048 = vmatprep.subr.bf16.mxu0 0
    %1049 = vmatpush1.bf16.msra.mxu0 0
    %1050 = vmatprep.subr.bf16.mxu0 0
    %1051 = vmatpush1.bf16.msra.mxu0 0
    %1052 = vmatprep.subr.bf16.mxu0 0
    %1053 = vmatpush1.bf16.msra.mxu0 0
    %1054 = vmatprep.subr.bf16.mxu0 0
    %1055 = vmatpush1.bf16.msra.mxu0 0
    %1056 = vmatprep.subr.bf16.mxu0 0
    %1057 = vmatpush1.bf16.msra.mxu0 0
    %1058 = vmatprep.subr.bf16.mxu0 0
    %1059 = vmatpush1.bf16.msra.mxu0 0
    %1060 = vmatprep.subr.bf16.mxu0 0
    %1061 = vmatpush1.bf16.msra.mxu0 0
    %1062 = vmatprep.subr.bf16.mxu0 0
    %1063 = vmatpush1.bf16.msra.mxu0 0
    %1064 = vmatprep.subr.bf16.mxu0 0
    %1065 = vmatpush1.bf16.msra.mxu0 0
    %1066 = vmatprep.subr.bf16.mxu0 0
    %1067 = vmatpush1.bf16.msra.mxu0 0
    %1068 = vmatprep.subr.bf16.mxu0 0
    %1069 = vmatpush1.bf16.msra.mxu0 0
    %1070 = vmatprep.subr.bf16.mxu0 0
    %1071 = vmatpush1.bf16.msra.mxu0 0
    %1072 = vmatprep.subr.bf16.mxu0 0
    %1073 = vmatpush1.bf16.msra.mxu0 0
    %1074 = vmatprep.mubr.bf16.mxu0 0
    %1075 = vmatmul.mubr.bf16.gmra.mrb[0].mxu0 %v1037
    %v1076 = vpop.f32.mrb[0].mxu0
    %v1077 = vadd.f32 0.0, %v1076
    %v1078 = vpop.f32.mrb[0].mxu0
    %v1079 = vpop.f32.mrb[0].mxu0
    %v1080 = vpop.f32.mrb[0].mxu0
    %1081 = vdwg.mxu0
    %1082 = vrot.lane.b32.xlu0 %v225, 40
    %v1083 = vpop.permute.xlu0 %1082
    %v1085 = vsel %vm228, %v1033, 0
    %v1088 = vsel %vm366, %v1083, 0
    %1090 = vmatprep.subr.bf16.mxu0 0
    %1091 = vmatpush1.bf16.msra.mxu0 %v1088
    %1092 = vmatprep.subr.bf16.mxu0 0
    %1093 = vmatpush1.bf16.msra.mxu0 0
    %1094 = vmatprep.subr.bf16.mxu0 0
    %1095 = vmatpush1.bf16.msra.mxu0 0
    %1096 = vmatprep.subr.bf16.mxu0 0
    %1097 = vmatpush1.bf16.msra.mxu0 0
    %1098 = vmatprep.subr.bf16.mxu0 0
    %1099 = vmatpush1.bf16.msra.mxu0 0
    %1100 = vmatprep.subr.bf16.mxu0 0
    %1101 = vmatpush1.bf16.msra.mxu0 0
    %1102 = vmatprep.subr.bf16.mxu0 0
    %1103 = vmatpush1.bf16.msra.mxu0 0
    %1104 = vmatprep.subr.bf16.mxu0 0
    %1105 = vmatpush1.bf16.msra.mxu0 0
    %1106 = vmatprep.subr.bf16.mxu0 0
    %1107 = vmatpush1.bf16.msra.mxu0 0
    %1108 = vmatprep.subr.bf16.mxu0 0
    %1109 = vmatpush1.bf16.msra.mxu0 0
    %1110 = vmatprep.subr.bf16.mxu0 0
    %1111 = vmatpush1.bf16.msra.mxu0 0
    %1112 = vmatprep.subr.bf16.mxu0 0
    %1113 = vmatpush1.bf16.msra.mxu0 0
    %1114 = vmatprep.subr.bf16.mxu0 0
    %1115 = vmatpush1.bf16.msra.mxu0 0
    %1116 = vmatprep.subr.bf16.mxu0 0
    %1117 = vmatpush1.bf16.msra.mxu0 0
    %1118 = vmatprep.subr.bf16.mxu0 0
    %1119 = vmatpush1.bf16.msra.mxu0 0
    %1120 = vmatprep.subr.bf16.mxu0 0
    %1121 = vmatpush1.bf16.msra.mxu0 0
    %1122 = vmatprep.mubr.bf16.mxu0 0
    %1123 = vmatmul.mubr.bf16.gmra.mrb[0].mxu0 %v1085
    %v1124 = vpop.f32.mrb[0].mxu0
    %v1125 = vadd.f32 0.0, %v1124
    %v1126 = vpop.f32.mrb[0].mxu0
    %v1127 = vpop.f32.mrb[0].mxu0
    %v1128 = vpop.f32.mrb[0].mxu0
    %1129 = vdwg.mxu0
    %1132 = vrot.lane.b32.xlu0 %v629, 8
    %v1133 = vpop.permute.xlu0 %1132
    %1134 = vrot.lane.b32.xlu0 %v677, 8
    %v1135 = vpop.permute.xlu0 %1134
    %1140 = vrot.lane.b32.xlu0 %v853, 16
    %v1141 = vpop.permute.xlu0 %1140
    %1142 = vrot.lane.b32.xlu0 %v901, 16
    %v1143 = vpop.permute.xlu0 %1142
    %1148 = vrot.lane.b32.xlu0 %v1077, 24
    %v1149 = vpop.permute.xlu0 %1148
    %1150 = vrot.lane.b32.xlu0 %v1125, 24
    %v1151 = vpop.permute.xlu0 %1150
    %v1154 = vsel %vm228, %v405, %v1133
    %v1155 = vsel %vm228, %v453, %v1135
    %vm1156 = vcmask 130048
    %v1157 = vsel %vm1156, %v1154, %v1141
    %v1158 = vsel %vm1156, %v1155, %v1143
    %vm1159 = vcmask 195584
    %v1160 = vsel %vm1159, %v1157, %v1149
    %v1161 = vsel %vm1159, %v1158, %v1151
    %v1162 = vpack.c.bf16 %v1161, %v1160
    %v1163 = vld [vmem:[%s4] sm:$0xf]
    %v1164 = vld [vmem:[%s4 + $0x4] sm:$0xf]
    %v1165 = vld [vmem:[%s4 + $0x8] sm:$0xf]
    %v1166 = vld [vmem:[%s4 + $0xc] sm:$0xf]
    %v1167 = vlaneseq
    %v1168 = vshrl.u32 %v1167, 7
    %v1169 = vsub.s32 1, %v1168
    %v1170 = vrot.slane %v154, %v1169
    %v1175 = vunpack.c.l.b16 %v1163
    %v1176 = vunpack.c.l.b16 %v1164
    %v1177 = vunpack.c.l.b16 %v1165
    %v1178 = vunpack.c.l.b16 %v1166
    %v1179 = vpack.c.b16 %v1176, %v1175
    %v1180 = vpack.c.b16 %v1178, %v1177
    %v1184 = vsel %vm91, %v1162, 0
    %1186 = vmatprep.subr.bf16.mxu0 0
    %1187 = vmatpush1.bf16.msra.mxu0 %v1179
    %1188 = vmatprep.subr.bf16.mxu0 0
    %1189 = vmatpush1.bf16.msra.mxu0 %v1180
    %1190 = vmatprep.subr.bf16.mxu0 0
    %1191 = vmatpush1.bf16.msra.mxu0 0
    %1192 = vmatprep.subr.bf16.mxu0 0
    %1193 = vmatpush1.bf16.msra.mxu0 0
    %1194 = vmatprep.subr.bf16.mxu0 0
    %1195 = vmatpush1.bf16.msra.mxu0 0
    %1196 = vmatprep.subr.bf16.mxu0 0
    %1197 = vmatpush1.bf16.msra.mxu0 0
    %1198 = vmatprep.subr.bf16.mxu0 0
    %1199 = vmatpush1.bf16.msra.mxu0 0
    %1200 = vmatprep.subr.bf16.mxu0 0
    %1201 = vmatpush1.bf16.msra.mxu0 0
    %1202 = vmatprep.subr.bf16.mxu0 0
    %1203 = vmatpush1.bf16.msra.mxu0 0
    %1204 = vmatprep.subr.bf16.mxu0 0
    %1205 = vmatpush1.bf16.msra.mxu0 0
    %1206 = vmatprep.subr.bf16.mxu0 0
    %1207 = vmatpush1.bf16.msra.mxu0 0
    %1208 = vmatprep.subr.bf16.mxu0 0
    %1209 = vmatpush1.bf16.msra.mxu0 0
    %1210 = vmatprep.subr.bf16.mxu0 0
    %1211 = vmatpush1.bf16.msra.mxu0 0
    %1212 = vmatprep.subr.bf16.mxu0 0
    %1213 = vmatpush1.bf16.msra.mxu0 0
    %1214 = vmatprep.subr.bf16.mxu0 0
    %1215 = vmatpush1.bf16.msra.mxu0 0
    %1216 = vmatprep.subr.bf16.mxu0 0
    %1217 = vmatpush1.bf16.msra.mxu0 0
    %1218 = vmatprep.mubr.bf16.mxu0 0
    %1219 = vmatmul.mubr.bf16.gmra.mrb[0].mxu0 %v1184
    %v1220 = vpop.f32.mrb[0].mxu0
    %v1221 = vadd.f32 %v1170, %v1220
    %v1222 = vpop.f32.mrb[0].mxu0
    %v1223 = vpop.f32.mrb[0].mxu0
    %v1224 = vadd.f32 %v1170, %v1223
    %v1225 = vpop.f32.mrb[0].mxu0
    %1226 = vdwg.mxu0
    %v1227 = vadd.f32 %v129, %v1221
    %v1228 = vadd.f32 %v130, %v1224
    %v1229 = vsel %vm91, %v1227, 0.0
    %1230 = vadd.xlane.f32.xlu0 %v1229
    %v1231 = vpop.xlane.xlu0 %1230
    %v1232 = vsel %vm91, %v1228, 0.0
    %1233 = vadd.xlane.f32.xlu0 %v1232
    %v1234 = vpop.xlane.xlu0 %1233
    %v1235 = vmul.f32 %v1231, %v98
    %v1236 = vmul.f32 %v1234, %v98
    %v1237 = vsub.f32 %v1227, %v1235
    %v1238 = vsub.f32 %v1228, %v1236
    %v1239 = vmul.f32 %v1237, %v1237
    %v1240 = vmul.f32 %v1238, %v1238
    %v1241 = vsel %vm91, %v1239, 0.0
    %1242 = vadd.xlane.f32.xlu0 %v1241
    %v1243 = vpop.xlane.xlu0 %1242
    %v1244 = vsel %vm91, %v1240, 0.0
    %1245 = vadd.xlane.f32.xlu0 %v1244
    %v1246 = vpop.xlane.xlu0 %1245
    %v1247 = vmul.f32 %v1243, %v98
    %v1248 = vmul.f32 %v1246, %v98
    %v1249 = vadd.f32 %v1247, 1e-12
    %v1250 = vadd.f32 %v1248, 1e-12
    %v1251 = vrsqrt.pop %v1249
    %v1252 = vrsqrt.pop %v1250
    %v1253 = vmul.f32 %v1237, %v1251
    %v1254 = vmul.f32 %v1238, %v1252
    %v1255 = vlaneseq
    %v1256 = vshrl.u32 %v1255, 7
    %v1257 = vsub.s32 2, %v1256
    %v1258 = vrot.slane %v154, %v1257
    %v1259 = vmul.f32 %v1253, %v1258
    %v1260 = vmul.f32 %v1254, %v1258
    %v1261 = vlaneseq
    %v1262 = vshrl.u32 %v1261, 7
    %v1263 = vsub.s32 3, %v1262
    %v1264 = vrot.slane %v154, %v1263
    %v1265 = vadd.f32 %v1259, %v1264
    %v1266 = vadd.f32 %v1260, %v1264
    %v1267 = vpack.c.bf16 %v1266, %v1265
    %v1268 = vld [vmem:[%s5] sm:$0xf]
    %v1269 = vld [vmem:[%s5 + $0x4] sm:$0xf]
    %v1270 = vld [vmem:[%s5 + $0x8] sm:$0xf]
    %v1271 = vld [vmem:[%s5 + $0xc] sm:$0xf]
    %v1272 = vlaneseq
    %v1273 = vshrl.u32 %v1272, 7
    %v1274 = vsub.s32 4, %v1273
    %v1275 = vrot.slane %v154, %v1274
    %v1280 = vunpack.c.l.b16 %v1268
    %v1281 = vunpack.c.l.b16 %v1269
    %v1282 = vunpack.c.l.b16 %v1270
    %v1283 = vunpack.c.l.b16 %v1271
    %v1284 = vpack.c.b16 %v1281, %v1280
    %v1285 = vpack.c.b16 %v1283, %v1282
    %v1289 = vsel %vm91, %v1267, 0
    %1291 = vmatprep.subr.bf16.mxu0 0
    %1292 = vmatpush1.bf16.msra.mxu0 %v1284
    %1293 = vmatprep.subr.bf16.mxu0 0
    %1294 = vmatpush1.bf16.msra.mxu0 %v1285
    %1295 = vmatprep.subr.bf16.mxu0 0
    %1296 = vmatpush1.bf16.msra.mxu0 0
    %1297 = vmatprep.subr.bf16.mxu0 0
    %1298 = vmatpush1.bf16.msra.mxu0 0
    %1299 = vmatprep.subr.bf16.mxu0 0
    %1300 = vmatpush1.bf16.msra.mxu0 0
    %1301 = vmatprep.subr.bf16.mxu0 0
    %1302 = vmatpush1.bf16.msra.mxu0 0
    %1303 = vmatprep.subr.bf16.mxu0 0
    %1304 = vmatpush1.bf16.msra.mxu0 0
    %1305 = vmatprep.subr.bf16.mxu0 0
    %1306 = vmatpush1.bf16.msra.mxu0 0
    %1307 = vmatprep.subr.bf16.mxu0 0
    %1308 = vmatpush1.bf16.msra.mxu0 0
    %1309 = vmatprep.subr.bf16.mxu0 0
    %1310 = vmatpush1.bf16.msra.mxu0 0
    %1311 = vmatprep.subr.bf16.mxu0 0
    %1312 = vmatpush1.bf16.msra.mxu0 0
    %1313 = vmatprep.subr.bf16.mxu0 0
    %1314 = vmatpush1.bf16.msra.mxu0 0
    %1315 = vmatprep.subr.bf16.mxu0 0
    %1316 = vmatpush1.bf16.msra.mxu0 0
    %1317 = vmatprep.subr.bf16.mxu0 0
    %1318 = vmatpush1.bf16.msra.mxu0 0
    %1319 = vmatprep.subr.bf16.mxu0 0
    %1320 = vmatpush1.bf16.msra.mxu0 0
    %1321 = vmatprep.subr.bf16.mxu0 0
    %1322 = vmatpush1.bf16.msra.mxu0 0
    %1323 = vmatprep.mubr.bf16.mxu0 0
    %1324 = vmatmul.mubr.bf16.gmra.mrb[0].mxu0 %v1289
    %v1325 = vpop.f32.mrb[0].mxu0
    %v1326 = vadd.f32 %v1275, %v1325
    %v1327 = vpop.f32.mrb[0].mxu0
    %v1328 = vpop.f32.mrb[0].mxu0
    %v1329 = vadd.f32 %v1275, %v1328
    %v1330 = vpop.f32.mrb[0].mxu0
    %1331 = vdwg.mxu0
    %v1332 = vmul.f32 %v1326, 0.5
    %v1333 = vmul.f32 %v1329, 0.5
    %v1334 = vmul.f32 %v1326, 0.044715
    %v1335 = vmul.f32 %v1329, 0.044715
    %v1336 = vmul.f32 %v1334, %v1326
    %v1337 = vmul.f32 %v1335, %v1329
    %v1338 = vmul.f32 %v1336, %v1326
    %v1339 = vmul.f32 %v1337, %v1329
    %v1340 = vadd.f32 %v1326, %v1338
    %v1341 = vadd.f32 %v1329, %v1339
    %v1342 = vmul.f32 %v1340, 0.7978846
    %v1343 = vmul.f32 %v1341, 0.7978846
    %v1344 = vtanh.pop %v1342
    %v1345 = vtanh.pop %v1343
    %v1346 = vadd.f32 %v1344, 1.0
    %v1347 = vadd.f32 %v1345, 1.0
    %v1348 = vmul.f32 %v1332, %v1346
    %v1349 = vmul.f32 %v1333, %v1347
    %v1350 = vpack.c.bf16 %v1349, %v1348
    %v1351 = vld [vmem:[%s6] sm:$0xf]
    %v1352 = vld [vmem:[%s6 + $0x4] sm:$0xf]
    %v1353 = vld [vmem:[%s6 + $0x8] sm:$0xf]
    %v1354 = vld [vmem:[%s6 + $0xc] sm:$0xf]
    %v1355 = vld [vmem:[%s6 + $0x10] sm:$0xf]
    %v1356 = vld [vmem:[%s6 + $0x14] sm:$0xf]
    %v1357 = vld [vmem:[%s6 + $0x18] sm:$0xf]
    %v1358 = vld [vmem:[%s6 + $0x1c] sm:$0xf]
    %v1359 = vlaneseq
    %v1360 = vshrl.u32 %v1359, 7
    %v1361 = vsub.s32 5, %v1360
    %v1362 = vrot.slane %v154, %v1361
    %v1371 = vunpack.c.l.b16 %v1351
    %v1372 = vunpack.c.l.b16 %v1352
    %v1373 = vunpack.c.l.b16 %v1353
    %v1374 = vunpack.c.l.b16 %v1354
    %v1375 = vunpack.c.l.b16 %v1355
    %v1376 = vunpack.c.l.b16 %v1356
    %v1377 = vunpack.c.l.b16 %v1357
    %v1378 = vunpack.c.l.b16 %v1358
    %v1379 = vpack.c.b16 %v1372, %v1371
    %v1380 = vpack.c.b16 %v1374, %v1373
    %v1381 = vpack.c.b16 %v1376, %v1375
    %v1382 = vpack.c.b16 %v1378, %v1377
    %vm1387 = vcmask 523264
    %v1389 = vsel %vm1387, %v1350, 0
    %1391 = vmatprep.subr.bf16.mxu0 0
    %1392 = vmatpush1.bf16.msra.mxu0 %v1379
    %1393 = vmatprep.subr.bf16.mxu0 0
    %1394 = vmatpush1.bf16.msra.mxu0 %v1380
    %1395 = vmatprep.subr.bf16.mxu0 0
    %1396 = vmatpush1.bf16.msra.mxu0 %v1381
    %1397 = vmatprep.subr.bf16.mxu0 0
    %1398 = vmatpush1.bf16.msra.mxu0 %v1382
    %1399 = vmatprep.subr.bf16.mxu0 0
    %1400 = vmatpush1.bf16.msra.mxu0 0
    %1401 = vmatprep.subr.bf16.mxu0 0
    %1402 = vmatpush1.bf16.msra.mxu0 0
    %1403 = vmatprep.subr.bf16.mxu0 0
    %1404 = vmatpush1.bf16.msra.mxu0 0
    %1405 = vmatprep.subr.bf16.mxu0 0
    %1406 = vmatpush1.bf16.msra.mxu0 0
    %1407 = vmatprep.subr.bf16.mxu0 0
    %1408 = vmatpush1.bf16.msra.mxu0 0
    %1409 = vmatprep.subr.bf16.mxu0 0
    %1410 = vmatpush1.bf16.msra.mxu0 0
    %1411 = vmatprep.subr.bf16.mxu0 0
    %1412 = vmatpush1.bf16.msra.mxu0 0
    %1413 = vmatprep.subr.bf16.mxu0 0
    %1414 = vmatpush1.bf16.msra.mxu0 0
    %1415 = vmatprep.subr.bf16.mxu0 0
    %1416 = vmatpush1.bf16.msra.mxu0 0
    %1417 = vmatprep.subr.bf16.mxu0 0
    %1418 = vmatpush1.bf16.msra.mxu0 0
    %1419 = vmatprep.subr.bf16.mxu0 0
    %1420 = vmatpush1.bf16.msra.mxu0 0
    %1421 = vmatprep.subr.bf16.mxu0 0
    %1422 = vmatpush1.bf16.msra.mxu0 0
    %1423 = vmatprep.mubr.bf16.mxu0 0
    %1424 = vmatmul.mubr.bf16.gmra.mrb[0].mxu0 %v1389
    %v1425 = vpop.f32.mrb[0].mxu0
    %v1426 = vadd.f32 %v1362, %v1425
    %v1427 = vpop.f32.mrb[0].mxu0
    %v1428 = vpop.f32.mrb[0].mxu0
    %v1429 = vadd.f32 %v1362, %v1428
    %v1430 = vpop.f32.mrb[0].mxu0
    %1431 = vdwg.mxu0
    %v1432 = vadd.f32 %v1265, %v1426
    %v1433 = vadd.f32 %v1266, %v1429
    %v1434 = vsel %vm91, %v1432, 0.0
    %1435 = vadd.xlane.f32.xlu0 %v1434
    %v1436 = vpop.xlane.xlu0 %1435
    %v1437 = vsel %vm91, %v1433, 0.0
    %1438 = vadd.xlane.f32.xlu0 %v1437
    %v1439 = vpop.xlane.xlu0 %1438
    %v1440 = vmul.f32 %v1436, %v98
    %v1441 = vmul.f32 %v1439, %v98
    %v1442 = vsub.f32 %v1432, %v1440
    %v1443 = vsub.f32 %v1433, %v1441
    %v1444 = vmul.f32 %v1442, %v1442
    %v1445 = vmul.f32 %v1443, %v1443
    %v1446 = vsel %vm91, %v1444, 0.0
    %1447 = vadd.xlane.f32.xlu0 %v1446
    %v1448 = vpop.xlane.xlu0 %1447
    %v1449 = vsel %vm91, %v1445, 0.0
    %1450 = vadd.xlane.f32.xlu0 %v1449
    %v1451 = vpop.xlane.xlu0 %1450
    %v1452 = vmul.f32 %v1448, %v98
    %v1453 = vmul.f32 %v1451, %v98
    %v1454 = vadd.f32 %v1452, 1e-12
    %v1455 = vadd.f32 %v1453, 1e-12
    %v1456 = vrsqrt.pop %v1454
    %v1457 = vrsqrt.pop %v1455
    %v1458 = vmul.f32 %v1442, %v1456
    %v1459 = vmul.f32 %v1443, %v1457
    %v1460 = vlaneseq
    %v1461 = vshrl.u32 %v1460, 7
    %v1462 = vsub.s32 6, %v1461
    %v1463 = vrot.slane %v154, %v1462
    %v1464 = vmul.f32 %v1458, %v1463
    %v1465 = vmul.f32 %v1459, %v1463
    %v1466 = vlaneseq
    %v1467 = vshrl.u32 %v1466, 7
    %v1468 = vsub.s32 7, %v1467
    %v1469 = vrot.slane %v154, %v1468
    %v1470 = vadd.f32 %v1464, %v1469
    %v1471 = vadd.f32 %v1465, %v1469
    %s1472 = scalar_lea.vmem [#allocation5], 8
    %v1473 = vld [vmem:[%s1472] sm:$0xff]
    %v1474 = vpack.c.bf16 %v1471, %v1470
    %s1475 = scalar_lea.vmem %s3, 16
    %v1476 = vld [vmem:[%s1475] sm:$0xf]
    %v1477 = vld [vmem:[%s1475 + $0x4] sm:$0xf]
    %v1478 = vld [vmem:[%s1475 + $0x8] sm:$0xf]
    %v1479 = vld [vmem:[%s1475 + $0xc] sm:$0xf]
    %v1480 = vlaneseq
    %v1481 = vshrl.u32 %v1480, 7
    %v1482 = vsub.s32 0, %v1481
    %v1483 = vrot.slane %v1473, %v1482
    %v1488 = vunpack.c.l.b16 %v1476
    %v1489 = vunpack.c.l.b16 %v1477
    %v1490 = vunpack.c.l.b16 %v1478
    %v1491 = vunpack.c.l.b16 %v1479
    %v1492 = vpack.c.b16 %v1489, %v1488
    %v1493 = vpack.c.b16 %v1491, %v1490
    %v1497 = vsel %vm91, %v1474, 0
    %1499 = vmatprep.subr.bf16.mxu0 0
    %1500 = vmatpush1.bf16.msra.mxu0 %v1492
    %1501 = vmatprep.subr.bf16.mxu0 0
    %1502 = vmatpush1.bf16.msra.mxu0 %v1493
    %1503 = vmatprep.subr.bf16.mxu0 0
    %1504 = vmatpush1.bf16.msra.mxu0 0
    %1505 = vmatprep.subr.bf16.mxu0 0
    %1506 = vmatpush1.bf16.msra.mxu0 0
    %1507 = vmatprep.subr.bf16.mxu0 0
    %1508 = vmatpush1.bf16.msra.mxu0 0
    %1509 = vmatprep.subr.bf16.mxu0 0
    %1510 = vmatpush1.bf16.msra.mxu0 0
    %1511 = vmatprep.subr.bf16.mxu0 0
    %1512 = vmatpush1.bf16.msra.mxu0 0
    %1513 = vmatprep.subr.bf16.mxu0 0
    %1514 = vmatpush1.bf16.msra.mxu0 0
    %1515 = vmatprep.subr.bf16.mxu0 0
    %1516 = vmatpush1.bf16.msra.mxu0 0
    %1517 = vmatprep.subr.bf16.mxu0 0
    %1518 = vmatpush1.bf16.msra.mxu0 0
    %1519 = vmatprep.subr.bf16.mxu0 0
    %1520 = vmatpush1.bf16.msra.mxu0 0
    %1521 = vmatprep.subr.bf16.mxu0 0
    %1522 = vmatpush1.bf16.msra.mxu0 0
    %1523 = vmatprep.subr.bf16.mxu0 0
    %1524 = vmatpush1.bf16.msra.mxu0 0
    %1525 = vmatprep.subr.bf16.mxu0 0
    %1526 = vmatpush1.bf16.msra.mxu0 0
    %1527 = vmatprep.subr.bf16.mxu0 0
    %1528 = vmatpush1.bf16.msra.mxu0 0
    %1529 = vmatprep.subr.bf16.mxu0 0
    %1530 = vmatpush1.bf16.msra.mxu0 0
    %1531 = vmatprep.mubr.bf16.mxu0 0
    %1532 = vmatmul.mubr.bf16.gmra.mrb[0].mxu0 %v1497
    %v1533 = vpop.f32.mrb[0].mxu0
    %v1534 = vadd.f32 %v1483, %v1533
    %v1535 = vpop.f32.mrb[0].mxu0
    %v1536 = vpop.f32.mrb[0].mxu0
    %v1537 = vadd.f32 %v1483, %v1536
    %v1538 = vpop.f32.mrb[0].mxu0
    %1539 = vdwg.mxu0
    %v1540 = vpack.c.bf16 %v1537, %v1534
    %v1542 = vunpack.c.l.b16 %v1540
    %v1543 = vunpack.c.h.b16 %v1540
    %v1544 = vpack.c.b16 %v1542, %v1542
    %v1545 = vpack.c.b16 %v1543, %v1543
    %1546 = vrot.lane.b32.xlu0 %v1544, 96
    %v1547 = vpop.permute.xlu0 %1546
    %v1549 = vsel %vm228, %v1544, 0
    %v1552 = vsel %vm228, %v1547, 0
    %1554 = vmatprep.subr.bf16.mxu0 0
    %1555 = vmatpush1.bf16.xpose.msra.mxu0 %v1552
    %1556 = vmatprep.subr.bf16.mxu0 0
    %1557 = vmatpush1.bf16.xpose.msra.mxu0 0
    %1558 = vmatprep.subr.bf16.mxu0 0
    %1559 = vmatpush1.bf16.xpose.msra.mxu0 0
    %1560 = vmatprep.subr.bf16.mxu0 0
    %1561 = vmatpush1.bf16.xpose.msra.mxu0 0
    %1562 = vmatprep.subr.bf16.mxu0 0
    %1563 = vmatpush1.bf16.xpose.msra.mxu0 0
    %1564 = vmatprep.subr.bf16.mxu0 0
    %1565 = vmatpush1.bf16.xpose.msra.mxu0 0
    %1566 = vmatprep.subr.bf16.mxu0 0
    %1567 = vmatpush1.bf16.xpose.msra.mxu0 0
    %1568 = vmatprep.subr.bf16.mxu0 0
    %1569 = vmatpush1.bf16.xpose.msra.mxu0 0
    %1570 = vmatprep.subr.bf16.mxu0 0
    %1571 = vmatpush1.bf16.xpose.msra.mxu0 0
    %1572 = vmatprep.subr.bf16.mxu0 0
    %1573 = vmatpush1.bf16.xpose.msra.mxu0 0
    %1574 = vmatprep.subr.bf16.mxu0 0
    %1575 = vmatpush1.bf16.xpose.msra.mxu0 0
    %1576 = vmatprep.subr.bf16.mxu0 0
    %1577 = vmatpush1.bf16.xpose.msra.mxu0 0
    %1578 = vmatprep.subr.bf16.mxu0 0
    %1579 = vmatpush1.bf16.xpose.msra.mxu0 0
    %1580 = vmatprep.subr.bf16.mxu0 0
    %1581 = vmatpush1.bf16.xpose.msra.mxu0 0
    %1582 = vmatprep.subr.bf16.mxu0 0
    %1583 = vmatpush1.bf16.xpose.msra.mxu0 0
    %1584 = vmatprep.subr.bf16.mxu0 0
    %1585 = vmatpush1.bf16.xpose.msra.mxu0 0
    %1586 = vmatprep.mubr.bf16.mxu0 0
    %1587 = vmatmul.mubr.bf16.gmra.mrb[0].mxu0 %v1549
    %v1588 = vpop.f32.mrb[0].mxu0
    %v1589 = vadd.f32 0.0, %v1588
    %v1590 = vpop.f32.mrb[0].mxu0
    %v1591 = vpop.f32.mrb[0].mxu0
    %v1592 = vpop.f32.mrb[0].mxu0
    %1593 = vdwg.mxu0
    %1594 = vrot.lane.b32.xlu0 %v1545, 96
    %v1595 = vpop.permute.xlu0 %1594
    %v1597 = vsel %vm228, %v1545, 0
    %v1600 = vsel %vm228, %v1595, 0
    %1602 = vmatprep.subr.bf16.mxu0 0
    %1603 = vmatpush1.bf16.xpose.msra.mxu0 %v1600
    %1604 = vmatprep.subr.bf16.mxu0 0
    %1605 = vmatpush1.bf16.xpose.msra.mxu0 0
    %1606 = vmatprep.subr.bf16.mxu0 0
    %1607 = vmatpush1.bf16.xpose.msra.mxu0 0
    %1608 = vmatprep.subr.bf16.mxu0 0
    %1609 = vmatpush1.bf16.xpose.msra.mxu0 0
    %1610 = vmatprep.subr.bf16.mxu0 0
    %1611 = vmatpush1.bf16.xpose.msra.mxu0 0
    %1612 = vmatprep.subr.bf16.mxu0 0
    %1613 = vmatpush1.bf16.xpose.msra.mxu0 0
    %1614 = vmatprep.subr.bf16.mxu0 0
    %1615 = vmatpush1.bf16.xpose.msra.mxu0 0
    %1616 = vmatprep.subr.bf16.mxu0 0
    %1617 = vmatpush1.bf16.xpose.msra.mxu0 0
    %1618 = vmatprep.subr.bf16.mxu0 0
    %1619 = vmatpush1.bf16.xpose.msra.mxu0 0
    %1620 = vmatprep.subr.bf16.mxu0 0
    %1621 = vmatpush1.bf16.xpose.msra.mxu0 0
    %1622 = vmatprep.subr.bf16.mxu0 0
    %1623 = vmatpush1.bf16.xpose.msra.mxu0 0
    %1624 = vmatprep.subr.bf16.mxu0 0
    %1625 = vmatpush1.bf16.xpose.msra.mxu0 0
    %1626 = vmatprep.subr.bf16.mxu0 0
    %1627 = vmatpush1.bf16.xpose.msra.mxu0 0
    %1628 = vmatprep.subr.bf16.mxu0 0
    %1629 = vmatpush1.bf16.xpose.msra.mxu0 0
    %1630 = vmatprep.subr.bf16.mxu0 0
    %1631 = vmatpush1.bf16.xpose.msra.mxu0 0
    %1632 = vmatprep.subr.bf16.mxu0 0
    %1633 = vmatpush1.bf16.xpose.msra.mxu0 0
    %1634 = vmatprep.mubr.bf16.mxu0 0
    %1635 = vmatmul.mubr.bf16.gmra.mrb[0].mxu0 %v1597
    %v1636 = vpop.f32.mrb[0].mxu0
    %v1637 = vadd.f32 0.0, %v1636
    %v1638 = vpop.f32.mrb[0].mxu0
    %v1639 = vpop.f32.mrb[0].mxu0
    %v1640 = vpop.f32.mrb[0].mxu0
    %1641 = vdwg.mxu0
    %v1642 = vmul.f32 %v1589, 0.35355338
    %v1643 = vmul.f32 %v1637, 0.35355338
    %v1644 = vadd.f32 %v1642, %v328
    %v1645 = vadd.f32 %v1643, %v332
    %v1646 = vsel %vm228, %v1644, -inf
    %1647 = vmax.xlane.f32.xlu0 %v1646
    %v1648 = vpop.xlane.xlu0 %1647
    %v1649 = vsel %vm228, %v1645, -inf
    %1650 = vmax.xlane.f32.xlu0 %v1649
    %v1651 = vpop.xlane.xlu0 %1650
    %v1652 = vsub.f32 %v1644, %v1648
    %v1653 = vsub.f32 %v1645, %v1651
    %v1654 = vmul.f32 %v1652, 1.442695
    %v1655 = vpow.pop %v1654
    %v1656 = vmul.f32 %v1653, 1.442695
    %v1657 = vpow.pop %v1656
    %v1658 = vsel %vm228, %v1655, 0.0
    %1659 = vadd.xlane.f32.xlu0 %v1658
    %v1660 = vpop.xlane.xlu0 %1659
    %v1661 = vsel %vm228, %v1657, 0.0
    %1662 = vadd.xlane.f32.xlu0 %v1661
    %v1663 = vpop.xlane.xlu0 %1662
    %v1664 = vrcp.pop %v1660
    %v1665 = vmul.f32 %v1655, %v1664
    %v1666 = vrcp.pop %v1663
    %v1667 = vmul.f32 %v1657, %v1666
    %v1668 = vpack.c.bf16 %v1665, %v1665
    %v1669 = vpack.c.bf16 %v1667, %v1667
    %1670 = vrot.lane.b32.xlu0 %v1544, 64
    %v1671 = vpop.permute.xlu0 %1670
    %v1673 = vsel %vm228, %v1668, 0
    %v1676 = vsel %vm366, %v1671, 0
    %1678 = vmatprep.subr.bf16.mxu0 0
    %1679 = vmatpush1.bf16.msra.mxu0 %v1676
    %1680 = vmatprep.subr.bf16.mxu0 0
    %1681 = vmatpush1.bf16.msra.mxu0 0
    %1682 = vmatprep.subr.bf16.mxu0 0
    %1683 = vmatpush1.bf16.msra.mxu0 0
    %1684 = vmatprep.subr.bf16.mxu0 0
    %1685 = vmatpush1.bf16.msra.mxu0 0
    %1686 = vmatprep.subr.bf16.mxu0 0
    %1687 = vmatpush1.bf16.msra.mxu0 0
    %1688 = vmatprep.subr.bf16.mxu0 0
    %1689 = vmatpush1.bf16.msra.mxu0 0
    %1690 = vmatprep.subr.bf16.mxu0 0
    %1691 = vmatpush1.bf16.msra.mxu0 0
    %1692 = vmatprep.subr.bf16.mxu0 0
    %1693 = vmatpush1.bf16.msra.mxu0 0
    %1694 = vmatprep.subr.bf16.mxu0 0
    %1695 = vmatpush1.bf16.msra.mxu0 0
    %1696 = vmatprep.subr.bf16.mxu0 0
    %1697 = vmatpush1.bf16.msra.mxu0 0
    %1698 = vmatprep.subr.bf16.mxu0 0
    %1699 = vmatpush1.bf16.msra.mxu0 0
    %1700 = vmatprep.subr.bf16.mxu0 0
    %1701 = vmatpush1.bf16.msra.mxu0 0
    %1702 = vmatprep.subr.bf16.mxu0 0
    %1703 = vmatpush1.bf16.msra.mxu0 0
    %1704 = vmatprep.subr.bf16.mxu0 0
    %1705 = vmatpush1.bf16.msra.mxu0 0
    %1706 = vmatprep.subr.bf16.mxu0 0
    %1707 = vmatpush1.bf16.msra.mxu0 0
    %1708 = vmatprep.subr.bf16.mxu0 0
    %1709 = vmatpush1.bf16.msra.mxu0 0
    %1710 = vmatprep.mubr.bf16.mxu0 0
    %1711 = vmatmul.mubr.bf16.gmra.mrb[0].mxu0 %v1673
    %v1712 = vpop.f32.mrb[0].mxu0
    %v1713 = vadd.f32 0.0, %v1712
    %v1714 = vpop.f32.mrb[0].mxu0
    %v1715 = vpop.f32.mrb[0].mxu0
    %v1716 = vpop.f32.mrb[0].mxu0
    %1717 = vdwg.mxu0
    %1718 = vrot.lane.b32.xlu0 %v1545, 64
    %v1719 = vpop.permute.xlu0 %1718
    %v1721 = vsel %vm228, %v1669, 0
    %v1724 = vsel %vm366, %v1719, 0
    %1726 = vmatprep.subr.bf16.mxu0 0
    %1727 = vmatpush1.bf16.msra.mxu0 %v1724
    %1728 = vmatprep.subr.bf16.mxu0 0
    %1729 = vmatpush1.bf16.msra.mxu0 0
    %1730 = vmatprep.subr.bf16.mxu0 0
    %1731 = vmatpush1.bf16.msra.mxu0 0
    %1732 = vmatprep.subr.bf16.mxu0 0
    %1733 = vmatpush1.bf16.msra.mxu0 0
    %1734 = vmatprep.subr.bf16.mxu0 0
    %1735 = vmatpush1.bf16.msra.mxu0 0
    %1736 = vmatprep.subr.bf16.mxu0 0
    %1737 = vmatpush1.bf16.msra.mxu0 0
    %1738 = vmatprep.subr.bf16.mxu0 0
    %1739 = vmatpush1.bf16.msra.mxu0 0
    %1740 = vmatprep.subr.bf16.mxu0 0
    %1741 = vmatpush1.bf16.msra.mxu0 0
    %1742 = vmatprep.subr.bf16.mxu0 0
    %1743 = vmatpush1.bf16.msra.mxu0 0
    %1744 = vmatprep.subr.bf16.mxu0 0
    %1745 = vmatpush1.bf16.msra.mxu0 0
    %1746 = vmatprep.subr.bf16.mxu0 0
    %1747 = vmatpush1.bf16.msra.mxu0 0
    %1748 = vmatprep.subr.bf16.mxu0 0
    %1749 = vmatpush1.bf16.msra.mxu0 0
    %1750 = vmatprep.subr.bf16.mxu0 0
    %1751 = vmatpush1.bf16.msra.mxu0 0
    %1752 = vmatprep.subr.bf16.mxu0 0
    %1753 = vmatpush1.bf16.msra.mxu0 0
    %1754 = vmatprep.subr.bf16.mxu0 0
    %1755 = vmatpush1.bf16.msra.mxu0 0
    %1756 = vmatprep.subr.bf16.mxu0 0
    %1757 = vmatpush1.bf16.msra.mxu0 0
    %1758 = vmatprep.mubr.bf16.mxu0 0
    %1759 = vmatmul.mubr.bf16.gmra.mrb[0].mxu0 %v1721
    %v1760 = vpop.f32.mrb[0].mxu0
    %v1761 = vadd.f32 0.0, %v1760
    %v1762 = vpop.f32.mrb[0].mxu0
    %v1763 = vpop.f32.mrb[0].mxu0
    %v1764 = vpop.f32.mrb[0].mxu0
    %1765 = vdwg.mxu0
    %1766 = vrot.lane.b32.xlu0 %v1544, 120
    %v1767 = vpop.permute.xlu0 %1766
    %1768 = vrot.lane.b32.xlu0 %v1544, 88
    %v1769 = vpop.permute.xlu0 %1768
    %v1771 = vsel %vm228, %v1767, 0
    %v1774 = vsel %vm228, %v1769, 0
    %1776 = vmatprep.subr.bf16.mxu0 0
    %1777 = vmatpush1.bf16.xpose.msra.mxu0 %v1774
    %1778 = vmatprep.subr.bf16.mxu0 0
    %1779 = vmatpush1.bf16.xpose.msra.mxu0 0
    %1780 = vmatprep.subr.bf16.mxu0 0
    %1781 = vmatpush1.bf16.xpose.msra.mxu0 0
    %1782 = vmatprep.subr.bf16.mxu0 0
    %1783 = vmatpush1.bf16.xpose.msra.mxu0 0
    %1784 = vmatprep.subr.bf16.mxu0 0
    %1785 = vmatpush1.bf16.xpose.msra.mxu0 0
    %1786 = vmatprep.subr.bf16.mxu0 0
    %1787 = vmatpush1.bf16.xpose.msra.mxu0 0
    %1788 = vmatprep.subr.bf16.mxu0 0
    %1789 = vmatpush1.bf16.xpose.msra.mxu0 0
    %1790 = vmatprep.subr.bf16.mxu0 0
    %1791 = vmatpush1.bf16.xpose.msra.mxu0 0
    %1792 = vmatprep.subr.bf16.mxu0 0
    %1793 = vmatpush1.bf16.xpose.msra.mxu0 0
    %1794 = vmatprep.subr.bf16.mxu0 0
    %1795 = vmatpush1.bf16.xpose.msra.mxu0 0
    %1796 = vmatprep.subr.bf16.mxu0 0
    %1797 = vmatpush1.bf16.xpose.msra.mxu0 0
    %1798 = vmatprep.subr.bf16.mxu0 0
    %1799 = vmatpush1.bf16.xpose.msra.mxu0 0
    %1800 = vmatprep.subr.bf16.mxu0 0
    %1801 = vmatpush1.bf16.xpose.msra.mxu0 0
    %1802 = vmatprep.subr.bf16.mxu0 0
    %1803 = vmatpush1.bf16.xpose.msra.mxu0 0
    %1804 = vmatprep.subr.bf16.mxu0 0
    %1805 = vmatpush1.bf16.xpose.msra.mxu0 0
    %1806 = vmatprep.subr.bf16.mxu0 0
    %1807 = vmatpush1.bf16.xpose.msra.mxu0 0
    %1808 = vmatprep.mubr.bf16.mxu0 0
    %1809 = vmatmul.mubr.bf16.gmra.mrb[0].mxu0 %v1771
    %v1810 = vpop.f32.mrb[0].mxu0
    %v1811 = vadd.f32 0.0, %v1810
    %v1812 = vpop.f32.mrb[0].mxu0
    %v1813 = vpop.f32.mrb[0].mxu0
    %v1814 = vpop.f32.mrb[0].mxu0
    %1815 = vdwg.mxu0
    %1816 = vrot.lane.b32.xlu0 %v1545, 120
    %v1817 = vpop.permute.xlu0 %1816
    %1818 = vrot.lane.b32.xlu0 %v1545, 88
    %v1819 = vpop.permute.xlu0 %1818
    %v1821 = vsel %vm228, %v1817, 0
    %v1824 = vsel %vm228, %v1819, 0
    %1826 = vmatprep.subr.bf16.mxu0 0
    %1827 = vmatpush1.bf16.xpose.msra.mxu0 %v1824
    %1828 = vmatprep.subr.bf16.mxu0 0
    %1829 = vmatpush1.bf16.xpose.msra.mxu0 0
    %1830 = vmatprep.subr.bf16.mxu0 0
    %1831 = vmatpush1.bf16.xpose.msra.mxu0 0
    %1832 = vmatprep.subr.bf16.mxu0 0
    %1833 = vmatpush1.bf16.xpose.msra.mxu0 0
    %1834 = vmatprep.subr.bf16.mxu0 0
    %1835 = vmatpush1.bf16.xpose.msra.mxu0 0
    %1836 = vmatprep.subr.bf16.mxu0 0
    %1837 = vmatpush1.bf16.xpose.msra.mxu0 0
    %1838 = vmatprep.subr.bf16.mxu0 0
    %1839 = vmatpush1.bf16.xpose.msra.mxu0 0
    %1840 = vmatprep.subr.bf16.mxu0 0
    %1841 = vmatpush1.bf16.xpose.msra.mxu0 0
    %1842 = vmatprep.subr.bf16.mxu0 0
    %1843 = vmatpush1.bf16.xpose.msra.mxu0 0
    %1844 = vmatprep.subr.bf16.mxu0 0
    %1845 = vmatpush1.bf16.xpose.msra.mxu0 0
    %1846 = vmatprep.subr.bf16.mxu0 0
    %1847 = vmatpush1.bf16.xpose.msra.mxu0 0
    %1848 = vmatprep.subr.bf16.mxu0 0
    %1849 = vmatpush1.bf16.xpose.msra.mxu0 0
    %1850 = vmatprep.subr.bf16.mxu0 0
    %1851 = vmatpush1.bf16.xpose.msra.mxu0 0
    %1852 = vmatprep.subr.bf16.mxu0 0
    %1853 = vmatpush1.bf16.xpose.msra.mxu0 0
    %1854 = vmatprep.subr.bf16.mxu0 0
    %1855 = vmatpush1.bf16.xpose.msra.mxu0 0
    %1856 = vmatprep.subr.bf16.mxu0 0
    %1857 = vmatpush1.bf16.xpose.msra.mxu0 0
    %1858 = vmatprep.mubr.bf16.mxu0 0
    %1859 = vmatmul.mubr.bf16.gmra.mrb[0].mxu0 %v1821
    %v1860 = vpop.f32.mrb[0].mxu0
    %v1861 = vadd.f32 0.0, %v1860
    %v1862 = vpop.f32.mrb[0].mxu0
    %v1863 = vpop.f32.mrb[0].mxu0
    %v1864 = vpop.f32.mrb[0].mxu0
    %1865 = vdwg.mxu0
    %v1866 = vmul.f32 %v1811, 0.35355338
    %v1867 = vmul.f32 %v1861, 0.35355338
    %v1868 = vadd.f32 %v1866, %v328
    %v1869 = vadd.f32 %v1867, %v332
    %v1870 = vsel %vm228, %v1868, -inf
    %1871 = vmax.xlane.f32.xlu0 %v1870
    %v1872 = vpop.xlane.xlu0 %1871
    %v1873 = vsel %vm228, %v1869, -inf
    %1874 = vmax.xlane.f32.xlu0 %v1873
    %v1875 = vpop.xlane.xlu0 %1874
    %v1876 = vsub.f32 %v1868, %v1872
    %v1877 = vsub.f32 %v1869, %v1875
    %v1878 = vmul.f32 %v1876, 1.442695
    %v1879 = vpow.pop %v1878
    %v1880 = vmul.f32 %v1877, 1.442695
    %v1881 = vpow.pop %v1880
    %v1882 = vsel %vm228, %v1879, 0.0
    %1883 = vadd.xlane.f32.xlu0 %v1882
    %v1884 = vpop.xlane.xlu0 %1883
    %v1885 = vsel %vm228, %v1881, 0.0
    %1886 = vadd.xlane.f32.xlu0 %v1885
    %v1887 = vpop.xlane.xlu0 %1886
    %v1888 = vrcp.pop %v1884
    %v1889 = vmul.f32 %v1879, %v1888
    %v1890 = vrcp.pop %v1887
    %v1891 = vmul.f32 %v1881, %v1890
    %v1892 = vpack.c.bf16 %v1889, %v1889
    %v1893 = vpack.c.bf16 %v1891, %v1891
    %1894 = vrot.lane.b32.xlu0 %v1544, 56
    %v1895 = vpop.permute.xlu0 %1894
    %v1897 = vsel %vm228, %v1892, 0
    %v1900 = vsel %vm366, %v1895, 0
    %1902 = vmatprep.subr.bf16.mxu0 0
    %1903 = vmatpush1.bf16.msra.mxu0 %v1900
    %1904 = vmatprep.subr.bf16.mxu0 0
    %1905 = vmatpush1.bf16.msra.mxu0 0
    %1906 = vmatprep.subr.bf16.mxu0 0
    %1907 = vmatpush1.bf16.msra.mxu0 0
    %1908 = vmatprep.subr.bf16.mxu0 0
    %1909 = vmatpush1.bf16.msra.mxu0 0
    %1910 = vmatprep.subr.bf16.mxu0 0
    %1911 = vmatpush1.bf16.msra.mxu0 0
    %1912 = vmatprep.subr.bf16.mxu0 0
    %1913 = vmatpush1.bf16.msra.mxu0 0
    %1914 = vmatprep.subr.bf16.mxu0 0
    %1915 = vmatpush1.bf16.msra.mxu0 0
    %1916 = vmatprep.subr.bf16.mxu0 0
    %1917 = vmatpush1.bf16.msra.mxu0 0
    %1918 = vmatprep.subr.bf16.mxu0 0
    %1919 = vmatpush1.bf16.msra.mxu0 0
    %1920 = vmatprep.subr.bf16.mxu0 0
    %1921 = vmatpush1.bf16.msra.mxu0 0
    %1922 = vmatprep.subr.bf16.mxu0 0
    %1923 = vmatpush1.bf16.msra.mxu0 0
    %1924 = vmatprep.subr.bf16.mxu0 0
    %1925 = vmatpush1.bf16.msra.mxu0 0
    %1926 = vmatprep.subr.bf16.mxu0 0
    %1927 = vmatpush1.bf16.msra.mxu0 0
    %1928 = vmatprep.subr.bf16.mxu0 0
    %1929 = vmatpush1.bf16.msra.mxu0 0
    %1930 = vmatprep.subr.bf16.mxu0 0
    %1931 = vmatpush1.bf16.msra.mxu0 0
    %1932 = vmatprep.subr.bf16.mxu0 0
    %1933 = vmatpush1.bf16.msra.mxu0 0
    %1934 = vmatprep.mubr.bf16.mxu0 0
    %1935 = vmatmul.mubr.bf16.gmra.mrb[0].mxu0 %v1897
    %v1936 = vpop.f32.mrb[0].mxu0
    %v1937 = vadd.f32 0.0, %v1936
    %v1938 = vpop.f32.mrb[0].mxu0
    %v1939 = vpop.f32.mrb[0].mxu0
    %v1940 = vpop.f32.mrb[0].mxu0
    %1941 = vdwg.mxu0
    %1942 = vrot.lane.b32.xlu0 %v1545, 56
    %v1943 = vpop.permute.xlu0 %1942
    %v1945 = vsel %vm228, %v1893, 0
    %v1948 = vsel %vm366, %v1943, 0
    %1950 = vmatprep.subr.bf16.mxu0 0
    %1951 = vmatpush1.bf16.msra.mxu0 %v1948
    %1952 = vmatprep.subr.bf16.mxu0 0
    %1953 = vmatpush1.bf16.msra.mxu0 0
    %1954 = vmatprep.subr.bf16.mxu0 0
    %1955 = vmatpush1.bf16.msra.mxu0 0
    %1956 = vmatprep.subr.bf16.mxu0 0
    %1957 = vmatpush1.bf16.msra.mxu0 0
    %1958 = vmatprep.subr.bf16.mxu0 0
    %1959 = vmatpush1.bf16.msra.mxu0 0
    %1960 = vmatprep.subr.bf16.mxu0 0
    %1961 = vmatpush1.bf16.msra.mxu0 0
    %1962 = vmatprep.subr.bf16.mxu0 0
    %1963 = vmatpush1.bf16.msra.mxu0 0
    %1964 = vmatprep.subr.bf16.mxu0 0
    %1965 = vmatpush1.bf16.msra.mxu0 0
    %1966 = vmatprep.subr.bf16.mxu0 0
    %1967 = vmatpush1.bf16.msra.mxu0 0
    %1968 = vmatprep.subr.bf16.mxu0 0
    %1969 = vmatpush1.bf16.msra.mxu0 0
    %1970 = vmatprep.subr.bf16.mxu0 0
    %1971 = vmatpush1.bf16.msra.mxu0 0
    %1972 = vmatprep.subr.bf16.mxu0 0
    %1973 = vmatpush1.bf16.msra.mxu0 0
    %1974 = vmatprep.subr.bf16.mxu0 0
    %1975 = vmatpush1.bf16.msra.mxu0 0
    %1976 = vmatprep.subr.bf16.mxu0 0
    %1977 = vmatpush1.bf16.msra.mxu0 0
    %1978 = vmatprep.subr.bf16.mxu0 0
    %1979 = vmatpush1.bf16.msra.mxu0 0
    %1980 = vmatprep.subr.bf16.mxu0 0
    %1981 = vmatpush1.bf16.msra.mxu0 0
    %1982 = vmatprep.mubr.bf16.mxu0 0
    %1983 = vmatmul.mubr.bf16.gmra.mrb[0].mxu0 %v1945
    %v1984 = vpop.f32.mrb[0].mxu0
    %v1985 = vadd.f32 0.0, %v1984
    %v1986 = vpop.f32.mrb[0].mxu0
    %v1987 = vpop.f32.mrb[0].mxu0
    %v1988 = vpop.f32.mrb[0].mxu0
    %1989 = vdwg.mxu0
    %1990 = vrot.lane.b32.xlu0 %v1544, 112
    %v1991 = vpop.permute.xlu0 %1990
    %1992 = vrot.lane.b32.xlu0 %v1544, 80
    %v1993 = vpop.permute.xlu0 %1992
    %v1995 = vsel %vm228, %v1991, 0
    %v1998 = vsel %vm228, %v1993, 0
    %2000 = vmatprep.subr.bf16.mxu0 0
    %2001 = vmatpush1.bf16.xpose.msra.mxu0 %v1998
    %2002 = vmatprep.subr.bf16.mxu0 0
    %2003 = vmatpush1.bf16.xpose.msra.mxu0 0
    %2004 = vmatprep.subr.bf16.mxu0 0
    %2005 = vmatpush1.bf16.xpose.msra.mxu0 0
    %2006 = vmatprep.subr.bf16.mxu0 0
    %2007 = vmatpush1.bf16.xpose.msra.mxu0 0
    %2008 = vmatprep.subr.bf16.mxu0 0
    %2009 = vmatpush1.bf16.xpose.msra.mxu0 0
    %2010 = vmatprep.subr.bf16.mxu0 0
    %2011 = vmatpush1.bf16.xpose.msra.mxu0 0
    %2012 = vmatprep.subr.bf16.mxu0 0
    %2013 = vmatpush1.bf16.xpose.msra.mxu0 0
    %2014 = vmatprep.subr.bf16.mxu0 0
    %2015 = vmatpush1.bf16.xpose.msra.mxu0 0
    %2016 = vmatprep.subr.bf16.mxu0 0
    %2017 = vmatpush1.bf16.xpose.msra.mxu0 0
    %2018 = vmatprep.subr.bf16.mxu0 0
    %2019 = vmatpush1.bf16.xpose.msra.mxu0 0
    %2020 = vmatprep.subr.bf16.mxu0 0
    %2021 = vmatpush1.bf16.xpose.msra.mxu0 0
    %2022 = vmatprep.subr.bf16.mxu0 0
    %2023 = vmatpush1.bf16.xpose.msra.mxu0 0
    %2024 = vmatprep.subr.bf16.mxu0 0
    %2025 = vmatpush1.bf16.xpose.msra.mxu0 0
    %2026 = vmatprep.subr.bf16.mxu0 0
    %2027 = vmatpush1.bf16.xpose.msra.mxu0 0
    %2028 = vmatprep.subr.bf16.mxu0 0
    %2029 = vmatpush1.bf16.xpose.msra.mxu0 0
    %2030 = vmatprep.subr.bf16.mxu0 0
    %2031 = vmatpush1.bf16.xpose.msra.mxu0 0
    %2032 = vmatprep.mubr.bf16.mxu0 0
    %2033 = vmatmul.mubr.bf16.gmra.mrb[0].mxu0 %v1995
    %v2034 = vpop.f32.mrb[0].mxu0
    %v2035 = vadd.f32 0.0, %v2034
    %v2036 = vpop.f32.mrb[0].mxu0
    %v2037 = vpop.f32.mrb[0].mxu0
    %v2038 = vpop.f32.mrb[0].mxu0
    %2039 = vdwg.mxu0
    %2040 = vrot.lane.b32.xlu0 %v1545, 112
    %v2041 = vpop.permute.xlu0 %2040
    %2042 = vrot.lane.b32.xlu0 %v1545, 80
    %v2043 = vpop.permute.xlu0 %2042
    %v2045 = vsel %vm228, %v2041, 0
    %v2048 = vsel %vm228, %v2043, 0
    %2050 = vmatprep.subr.bf16.mxu0 0
    %2051 = vmatpush1.bf16.xpose.msra.mxu0 %v2048
    %2052 = vmatprep.subr.bf16.mxu0 0
    %2053 = vmatpush1.bf16.xpose.msra.mxu0 0
    %2054 = vmatprep.subr.bf16.mxu0 0
    %2055 = vmatpush1.bf16.xpose.msra.mxu0 0
    %2056 = vmatprep.subr.bf16.mxu0 0
    %2057 = vmatpush1.bf16.xpose.msra.mxu0 0
    %2058 = vmatprep.subr.bf16.mxu0 0
    %2059 = vmatpush1.bf16.xpose.msra.mxu0 0
    %2060 = vmatprep.subr.bf16.mxu0 0
    %2061 = vmatpush1.bf16.xpose.msra.mxu0 0
    %2062 = vmatprep.subr.bf16.mxu0 0
    %2063 = vmatpush1.bf16.xpose.msra.mxu0 0
    %2064 = vmatprep.subr.bf16.mxu0 0
    %2065 = vmatpush1.bf16.xpose.msra.mxu0 0
    %2066 = vmatprep.subr.bf16.mxu0 0
    %2067 = vmatpush1.bf16.xpose.msra.mxu0 0
    %2068 = vmatprep.subr.bf16.mxu0 0
    %2069 = vmatpush1.bf16.xpose.msra.mxu0 0
    %2070 = vmatprep.subr.bf16.mxu0 0
    %2071 = vmatpush1.bf16.xpose.msra.mxu0 0
    %2072 = vmatprep.subr.bf16.mxu0 0
    %2073 = vmatpush1.bf16.xpose.msra.mxu0 0
    %2074 = vmatprep.subr.bf16.mxu0 0
    %2075 = vmatpush1.bf16.xpose.msra.mxu0 0
    %2076 = vmatprep.subr.bf16.mxu0 0
    %2077 = vmatpush1.bf16.xpose.msra.mxu0 0
    %2078 = vmatprep.subr.bf16.mxu0 0
    %2079 = vmatpush1.bf16.xpose.msra.mxu0 0
    %2080 = vmatprep.subr.bf16.mxu0 0
    %2081 = vmatpush1.bf16.xpose.msra.mxu0 0
    %2082 = vmatprep.mubr.bf16.mxu0 0
    %2083 = vmatmul.mubr.bf16.gmra.mrb[0].mxu0 %v2045
    %v2084 = vpop.f32.mrb[0].mxu0
    %v2085 = vadd.f32 0.0, %v2084
    %v2086 = vpop.f32.mrb[0].mxu0
    %v2087 = vpop.f32.mrb[0].mxu0
    %v2088 = vpop.f32.mrb[0].mxu0
    %2089 = vdwg.mxu0
    %v2090 = vmul.f32 %v2035, 0.35355338
    %v2091 = vmul.f32 %v2085, 0.35355338
    %v2092 = vadd.f32 %v2090, %v328
    %v2093 = vadd.f32 %v2091, %v332
    %v2094 = vsel %vm228, %v2092, -inf
    %2095 = vmax.xlane.f32.xlu0 %v2094
    %v2096 = vpop.xlane.xlu0 %2095
    %v2097 = vsel %vm228, %v2093, -inf
    %2098 = vmax.xlane.f32.xlu0 %v2097
    %v2099 = vpop.xlane.xlu0 %2098
    %v2100 = vsub.f32 %v2092, %v2096
    %v2101 = vsub.f32 %v2093, %v2099
    %v2102 = vmul.f32 %v2100, 1.442695
    %v2103 = vpow.pop %v2102
    %v2104 = vmul.f32 %v2101, 1.442695
    %v2105 = vpow.pop %v2104
    %v2106 = vsel %vm228, %v2103, 0.0
    %2107 = vadd.xlane.f32.xlu0 %v2106
    %v2108 = vpop.xlane.xlu0 %2107
    %v2109 = vsel %vm228, %v2105, 0.0
    %2110 = vadd.xlane.f32.xlu0 %v2109
    %v2111 = vpop.xlane.xlu0 %2110
    %v2112 = vrcp.pop %v2108
    %v2113 = vmul.f32 %v2103, %v2112
    %v2114 = vrcp.pop %v2111
    %v2115 = vmul.f32 %v2105, %v2114
    %v2116 = vpack.c.bf16 %v2113, %v2113
    %v2117 = vpack.c.bf16 %v2115, %v2115
    %2118 = vrot.lane.b32.xlu0 %v1544, 48
    %v2119 = vpop.permute.xlu0 %2118
    %v2121 = vsel %vm228, %v2116, 0
    %v2124 = vsel %vm366, %v2119, 0
    %2126 = vmatprep.subr.bf16.mxu0 0
    %2127 = vmatpush1.bf16.msra.mxu0 %v2124
    %2128 = vmatprep.subr.bf16.mxu0 0
    %2129 = vmatpush1.bf16.msra.mxu0 0
    %2130 = vmatprep.subr.bf16.mxu0 0
    %2131 = vmatpush1.bf16.msra.mxu0 0
    %2132 = vmatprep.subr.bf16.mxu0 0
    %2133 = vmatpush1.bf16.msra.mxu0 0
    %2134 = vmatprep.subr.bf16.mxu0 0
    %2135 = vmatpush1.bf16.msra.mxu0 0
    %2136 = vmatprep.subr.bf16.mxu0 0
    %2137 = vmatpush1.bf16.msra.mxu0 0
    %2138 = vmatprep.subr.bf16.mxu0 0
    %2139 = vmatpush1.bf16.msra.mxu0 0
    %2140 = vmatprep.subr.bf16.mxu0 0
    %2141 = vmatpush1.bf16.msra.mxu0 0
    %2142 = vmatprep.subr.bf16.mxu0 0
    %2143 = vmatpush1.bf16.msra.mxu0 0
    %2144 = vmatprep.subr.bf16.mxu0 0
    %2145 = vmatpush1.bf16.msra.mxu0 0
    %2146 = vmatprep.subr.bf16.mxu0 0
    %2147 = vmatpush1.bf16.msra.mxu0 0
    %2148 = vmatprep.subr.bf16.mxu0 0
    %2149 = vmatpush1.bf16.msra.mxu0 0
    %2150 = vmatprep.subr.bf16.mxu0 0
    %2151 = vmatpush1.bf16.msra.mxu0 0
    %2152 = vmatprep.subr.bf16.mxu0 0
    %2153 = vmatpush1.bf16.msra.mxu0 0
    %2154 = vmatprep.subr.bf16.mxu0 0
    %2155 = vmatpush1.bf16.msra.mxu0 0
    %2156 = vmatprep.subr.bf16.mxu0 0
    %2157 = vmatpush1.bf16.msra.mxu0 0
    %2158 = vmatprep.mubr.bf16.mxu0 0
    %2159 = vmatmul.mubr.bf16.gmra.mrb[0].mxu0 %v2121
    %v2160 = vpop.f32.mrb[0].mxu0
    %v2161 = vadd.f32 0.0, %v2160
    %v2162 = vpop.f32.mrb[0].mxu0
    %v2163 = vpop.f32.mrb[0].mxu0
    %v2164 = vpop.f32.mrb[0].mxu0
    %2165 = vdwg.mxu0
    %2166 = vrot.lane.b32.xlu0 %v1545, 48
    %v2167 = vpop.permute.xlu0 %2166
    %v2169 = vsel %vm228, %v2117, 0
    %v2172 = vsel %vm366, %v2167, 0
    %2174 = vmatprep.subr.bf16.mxu0 0
    %2175 = vmatpush1.bf16.msra.mxu0 %v2172
    %2176 = vmatprep.subr.bf16.mxu0 0
    %2177 = vmatpush1.bf16.msra.mxu0 0
    %2178 = vmatprep.subr.bf16.mxu0 0
    %2179 = vmatpush1.bf16.msra.mxu0 0
    %2180 = vmatprep.subr.bf16.mxu0 0
    %2181 = vmatpush1.bf16.msra.mxu0 0
    %2182 = vmatprep.subr.bf16.mxu0 0
    %2183 = vmatpush1.bf16.msra.mxu0 0
    %2184 = vmatprep.subr.bf16.mxu0 0
    %2185 = vmatpush1.bf16.msra.mxu0 0
    %2186 = vmatprep.subr.bf16.mxu0 0
    %2187 = vmatpush1.bf16.msra.mxu0 0
    %2188 = vmatprep.subr.bf16.mxu0 0
    %2189 = vmatpush1.bf16.msra.mxu0 0
    %2190 = vmatprep.subr.bf16.mxu0 0
    %2191 = vmatpush1.bf16.msra.mxu0 0
    %2192 = vmatprep.subr.bf16.mxu0 0
    %2193 = vmatpush1.bf16.msra.mxu0 0
    %2194 = vmatprep.subr.bf16.mxu0 0
    %2195 = vmatpush1.bf16.msra.mxu0 0
    %2196 = vmatprep.subr.bf16.mxu0 0
    %2197 = vmatpush1.bf16.msra.mxu0 0
    %2198 = vmatprep.subr.bf16.mxu0 0
    %2199 = vmatpush1.bf16.msra.mxu0 0
    %2200 = vmatprep.subr.bf16.mxu0 0
    %2201 = vmatpush1.bf16.msra.mxu0 0
    %2202 = vmatprep.subr.bf16.mxu0 0
    %2203 = vmatpush1.bf16.msra.mxu0 0
    %2204 = vmatprep.subr.bf16.mxu0 0
    %2205 = vmatpush1.bf16.msra.mxu0 0
    %2206 = vmatprep.mubr.bf16.mxu0 0
    %2207 = vmatmul.mubr.bf16.gmra.mrb[0].mxu0 %v2169
    %v2208 = vpop.f32.mrb[0].mxu0
    %v2209 = vadd.f32 0.0, %v2208
    %v2210 = vpop.f32.mrb[0].mxu0
    %v2211 = vpop.f32.mrb[0].mxu0
    %v2212 = vpop.f32.mrb[0].mxu0
    %2213 = vdwg.mxu0
    %2214 = vrot.lane.b32.xlu0 %v1544, 104
    %v2215 = vpop.permute.xlu0 %2214
    %2216 = vrot.lane.b32.xlu0 %v1544, 72
    %v2217 = vpop.permute.xlu0 %2216
    %v2219 = vsel %vm228, %v2215, 0
    %v2222 = vsel %vm228, %v2217, 0
    %2224 = vmatprep.subr.bf16.mxu0 0
    %2225 = vmatpush1.bf16.xpose.msra.mxu0 %v2222
    %2226 = vmatprep.subr.bf16.mxu0 0
    %2227 = vmatpush1.bf16.xpose.msra.mxu0 0
    %2228 = vmatprep.subr.bf16.mxu0 0
    %2229 = vmatpush1.bf16.xpose.msra.mxu0 0
    %2230 = vmatprep.subr.bf16.mxu0 0
    %2231 = vmatpush1.bf16.xpose.msra.mxu0 0
    %2232 = vmatprep.subr.bf16.mxu0 0
    %2233 = vmatpush1.bf16.xpose.msra.mxu0 0
    %2234 = vmatprep.subr.bf16.mxu0 0
    %2235 = vmatpush1.bf16.xpose.msra.mxu0 0
    %2236 = vmatprep.subr.bf16.mxu0 0
    %2237 = vmatpush1.bf16.xpose.msra.mxu0 0
    %2238 = vmatprep.subr.bf16.mxu0 0
    %2239 = vmatpush1.bf16.xpose.msra.mxu0 0
    %2240 = vmatprep.subr.bf16.mxu0 0
    %2241 = vmatpush1.bf16.xpose.msra.mxu0 0
    %2242 = vmatprep.subr.bf16.mxu0 0
    %2243 = vmatpush1.bf16.xpose.msra.mxu0 0
    %2244 = vmatprep.subr.bf16.mxu0 0
    %2245 = vmatpush1.bf16.xpose.msra.mxu0 0
    %2246 = vmatprep.subr.bf16.mxu0 0
    %2247 = vmatpush1.bf16.xpose.msra.mxu0 0
    %2248 = vmatprep.subr.bf16.mxu0 0
    %2249 = vmatpush1.bf16.xpose.msra.mxu0 0
    %2250 = vmatprep.subr.bf16.mxu0 0
    %2251 = vmatpush1.bf16.xpose.msra.mxu0 0
    %2252 = vmatprep.subr.bf16.mxu0 0
    %2253 = vmatpush1.bf16.xpose.msra.mxu0 0
    %2254 = vmatprep.subr.bf16.mxu0 0
    %2255 = vmatpush1.bf16.xpose.msra.mxu0 0
    %2256 = vmatprep.mubr.bf16.mxu0 0
    %2257 = vmatmul.mubr.bf16.gmra.mrb[0].mxu0 %v2219
    %v2258 = vpop.f32.mrb[0].mxu0
    %v2259 = vadd.f32 0.0, %v2258
    %v2260 = vpop.f32.mrb[0].mxu0
    %v2261 = vpop.f32.mrb[0].mxu0
    %v2262 = vpop.f32.mrb[0].mxu0
    %2263 = vdwg.mxu0
    %2264 = vrot.lane.b32.xlu0 %v1545, 104
    %v2265 = vpop.permute.xlu0 %2264
    %2266 = vrot.lane.b32.xlu0 %v1545, 72
    %v2267 = vpop.permute.xlu0 %2266
    %v2269 = vsel %vm228, %v2265, 0
    %v2272 = vsel %vm228, %v2267, 0
    %2274 = vmatprep.subr.bf16.mxu0 0
    %2275 = vmatpush1.bf16.xpose.msra.mxu0 %v2272
    %2276 = vmatprep.subr.bf16.mxu0 0
    %2277 = vmatpush1.bf16.xpose.msra.mxu0 0
    %2278 = vmatprep.subr.bf16.mxu0 0
    %2279 = vmatpush1.bf16.xpose.msra.mxu0 0
    %2280 = vmatprep.subr.bf16.mxu0 0
    %2281 = vmatpush1.bf16.xpose.msra.mxu0 0
    %2282 = vmatprep.subr.bf16.mxu0 0
    %2283 = vmatpush1.bf16.xpose.msra.mxu0 0
    %2284 = vmatprep.subr.bf16.mxu0 0
    %2285 = vmatpush1.bf16.xpose.msra.mxu0 0
    %2286 = vmatprep.subr.bf16.mxu0 0
    %2287 = vmatpush1.bf16.xpose.msra.mxu0 0
    %2288 = vmatprep.subr.bf16.mxu0 0
    %2289 = vmatpush1.bf16.xpose.msra.mxu0 0
    %2290 = vmatprep.subr.bf16.mxu0 0
    %2291 = vmatpush1.bf16.xpose.msra.mxu0 0
    %2292 = vmatprep.subr.bf16.mxu0 0
    %2293 = vmatpush1.bf16.xpose.msra.mxu0 0
    %2294 = vmatprep.subr.bf16.mxu0 0
    %2295 = vmatpush1.bf16.xpose.msra.mxu0 0
    %2296 = vmatprep.subr.bf16.mxu0 0
    %2297 = vmatpush1.bf16.xpose.msra.mxu0 0
    %2298 = vmatprep.subr.bf16.mxu0 0
    %2299 = vmatpush1.bf16.xpose.msra.mxu0 0
    %2300 = vmatprep.subr.bf16.mxu0 0
    %2301 = vmatpush1.bf16.xpose.msra.mxu0 0
    %2302 = vmatprep.subr.bf16.mxu0 0
    %2303 = vmatpush1.bf16.xpose.msra.mxu0 0
    %2304 = vmatprep.subr.bf16.mxu0 0
    %2305 = vmatpush1.bf16.xpose.msra.mxu0 0
    %2306 = vmatprep.mubr.bf16.mxu0 0
    %2307 = vmatmul.mubr.bf16.gmra.mrb[0].mxu0 %v2269
    %v2308 = vpop.f32.mrb[0].mxu0
    %v2309 = vadd.f32 0.0, %v2308
    %v2310 = vpop.f32.mrb[0].mxu0
    %v2311 = vpop.f32.mrb[0].mxu0
    %v2312 = vpop.f32.mrb[0].mxu0
    %2313 = vdwg.mxu0
    %v2314 = vmul.f32 %v2259, 0.35355338
    %v2315 = vmul.f32 %v2309, 0.35355338
    %v2316 = vadd.f32 %v2314, %v328
    %v2317 = vadd.f32 %v2315, %v332
    %v2318 = vsel %vm228, %v2316, -inf
    %2319 = vmax.xlane.f32.xlu0 %v2318
    %v2320 = vpop.xlane.xlu0 %2319
    %v2321 = vsel %vm228, %v2317, -inf
    %2322 = vmax.xlane.f32.xlu0 %v2321
    %v2323 = vpop.xlane.xlu0 %2322
    %v2324 = vsub.f32 %v2316, %v2320
    %v2325 = vsub.f32 %v2317, %v2323
    %v2326 = vmul.f32 %v2324, 1.442695
    %v2327 = vpow.pop %v2326
    %v2328 = vmul.f32 %v2325, 1.442695
    %v2329 = vpow.pop %v2328
    %v2330 = vsel %vm228, %v2327, 0.0
    %2331 = vadd.xlane.f32.xlu0 %v2330
    %v2332 = vpop.xlane.xlu0 %2331
    %v2333 = vsel %vm228, %v2329, 0.0
    %2334 = vadd.xlane.f32.xlu0 %v2333
    %v2335 = vpop.xlane.xlu0 %2334
    %v2336 = vrcp.pop %v2332
    %v2337 = vmul.f32 %v2327, %v2336
    %v2338 = vrcp.pop %v2335
    %v2339 = vmul.f32 %v2329, %v2338
    %v2340 = vpack.c.bf16 %v2337, %v2337
    %v2341 = vpack.c.bf16 %v2339, %v2339
    %2342 = vrot.lane.b32.xlu0 %v1544, 40
    %v2343 = vpop.permute.xlu0 %2342
    %v2345 = vsel %vm228, %v2340, 0
    %v2348 = vsel %vm366, %v2343, 0
    %2350 = vmatprep.subr.bf16.mxu0 0
    %2351 = vmatpush1.bf16.msra.mxu0 %v2348
    %2352 = vmatprep.subr.bf16.mxu0 0
    %2353 = vmatpush1.bf16.msra.mxu0 0
    %2354 = vmatprep.subr.bf16.mxu0 0
    %2355 = vmatpush1.bf16.msra.mxu0 0
    %2356 = vmatprep.subr.bf16.mxu0 0
    %2357 = vmatpush1.bf16.msra.mxu0 0
    %2358 = vmatprep.subr.bf16.mxu0 0
    %2359 = vmatpush1.bf16.msra.mxu0 0
    %2360 = vmatprep.subr.bf16.mxu0 0
    %2361 = vmatpush1.bf16.msra.mxu0 0
    %2362 = vmatprep.subr.bf16.mxu0 0
    %2363 = vmatpush1.bf16.msra.mxu0 0
    %2364 = vmatprep.subr.bf16.mxu0 0
    %2365 = vmatpush1.bf16.msra.mxu0 0
    %2366 = vmatprep.subr.bf16.mxu0 0
    %2367 = vmatpush1.bf16.msra.mxu0 0
    %2368 = vmatprep.subr.bf16.mxu0 0
    %2369 = vmatpush1.bf16.msra.mxu0 0
    %2370 = vmatprep.subr.bf16.mxu0 0
    %2371 = vmatpush1.bf16.msra.mxu0 0
    %2372 = vmatprep.subr.bf16.mxu0 0
    %2373 = vmatpush1.bf16.msra.mxu0 0
    %2374 = vmatprep.subr.bf16.mxu0 0
    %2375 = vmatpush1.bf16.msra.mxu0 0
    %2376 = vmatprep.subr.bf16.mxu0 0
    %2377 = vmatpush1.bf16.msra.mxu0 0
    %2378 = vmatprep.subr.bf16.mxu0 0
    %2379 = vmatpush1.bf16.msra.mxu0 0
    %2380 = vmatprep.subr.bf16.mxu0 0
    %2381 = vmatpush1.bf16.msra.mxu0 0
    %2382 = vmatprep.mubr.bf16.mxu0 0
    %2383 = vmatmul.mubr.bf16.gmra.mrb[0].mxu0 %v2345
    %v2384 = vpop.f32.mrb[0].mxu0
    %v2385 = vadd.f32 0.0, %v2384
    %v2386 = vpop.f32.mrb[0].mxu0
    %v2387 = vpop.f32.mrb[0].mxu0
    %v2388 = vpop.f32.mrb[0].mxu0
    %2389 = vdwg.mxu0
    %2390 = vrot.lane.b32.xlu0 %v1545, 40
    %v2391 = vpop.permute.xlu0 %2390
    %v2393 = vsel %vm228, %v2341, 0
    %v2396 = vsel %vm366, %v2391, 0
    %2398 = vmatprep.subr.bf16.mxu0 0
    %2399 = vmatpush1.bf16.msra.mxu0 %v2396
    %2400 = vmatprep.subr.bf16.mxu0 0
    %2401 = vmatpush1.bf16.msra.mxu0 0
    %2402 = vmatprep.subr.bf16.mxu0 0
    %2403 = vmatpush1.bf16.msra.mxu0 0
    %2404 = vmatprep.subr.bf16.mxu0 0
    %2405 = vmatpush1.bf16.msra.mxu0 0
    %2406 = vmatprep.subr.bf16.mxu0 0
    %2407 = vmatpush1.bf16.msra.mxu0 0
    %2408 = vmatprep.subr.bf16.mxu0 0
    %2409 = vmatpush1.bf16.msra.mxu0 0
    %2410 = vmatprep.subr.bf16.mxu0 0
    %2411 = vmatpush1.bf16.msra.mxu0 0
    %2412 = vmatprep.subr.bf16.mxu0 0
    %2413 = vmatpush1.bf16.msra.mxu0 0
    %2414 = vmatprep.subr.bf16.mxu0 0
    %2415 = vmatpush1.bf16.msra.mxu0 0
    %2416 = vmatprep.subr.bf16.mxu0 0
    %2417 = vmatpush1.bf16.msra.mxu0 0
    %2418 = vmatprep.subr.bf16.mxu0 0
    %2419 = vmatpush1.bf16.msra.mxu0 0
    %2420 = vmatprep.subr.bf16.mxu0 0
    %2421 = vmatpush1.bf16.msra.mxu0 0
    %2422 = vmatprep.subr.bf16.mxu0 0
    %2423 = vmatpush1.bf16.msra.mxu0 0
    %2424 = vmatprep.subr.bf16.mxu0 0
    %2425 = vmatpush1.bf16.msra.mxu0 0
    %2426 = vmatprep.subr.bf16.mxu0 0
    %2427 = vmatpush1.bf16.msra.mxu0 0
    %2428 = vmatprep.subr.bf16.mxu0 0
    %2429 = vmatpush1.bf16.msra.mxu0 0
    %2430 = vmatprep.mubr.bf16.mxu0 0
    %2431 = vmatmul.mubr.bf16.gmra.mrb[0].mxu0 %v2393
    %v2432 = vpop.f32.mrb[0].mxu0
    %v2433 = vadd.f32 0.0, %v2432
    %v2434 = vpop.f32.mrb[0].mxu0
    %v2435 = vpop.f32.mrb[0].mxu0
    %v2436 = vpop.f32.mrb[0].mxu0
    %2437 = vdwg.mxu0
    %2440 = vrot.lane.b32.xlu0 %v1937, 8
    %v2441 = vpop.permute.xlu0 %2440
    %2442 = vrot.lane.b32.xlu0 %v1985, 8
    %v2443 = vpop.permute.xlu0 %2442
    %2448 = vrot.lane.b32.xlu0 %v2161, 16
    %v2449 = vpop.permute.xlu0 %2448
    %2450 = vrot.lane.b32.xlu0 %v2209, 16
    %v2451 = vpop.permute.xlu0 %2450
    %2456 = vrot.lane.b32.xlu0 %v2385, 24
    %v2457 = vpop.permute.xlu0 %2456
    %2458 = vrot.lane.b32.xlu0 %v2433, 24
    %v2459 = vpop.permute.xlu0 %2458
    %v2462 = vsel %vm228, %v1713, %v2441
    %v2463 = vsel %vm228, %v1761, %v2443
    %v2464 = vsel %vm1156, %v2462, %v2449
    %v2465 = vsel %vm1156, %v2463, %v2451
    %v2466 = vsel %vm1159, %v2464, %v2457
    %v2467 = vsel %vm1159, %v2465, %v2459
    %v2468 = vpack.c.bf16 %v2467, %v2466
    %s2469 = scalar_lea.vmem %s4, 16
    %v2470 = vld [vmem:[%s2469] sm:$0xf]
    %v2471 = vld [vmem:[%s2469 + $0x4] sm:$0xf]
    %v2472 = vld [vmem:[%s2469 + $0x8] sm:$0xf]
    %v2473 = vld [vmem:[%s2469 + $0xc] sm:$0xf]
    %v2474 = vlaneseq
    %v2475 = vshrl.u32 %v2474, 7
    %v2476 = vsub.s32 1, %v2475
    %v2477 = vrot.slane %v1473, %v2476
    %v2482 = vunpack.c.l.b16 %v2470
    %v2483 = vunpack.c.l.b16 %v2471
    %v2484 = vunpack.c.l.b16 %v2472
    %v2485 = vunpack.c.l.b16 %v2473
    %v2486 = vpack.c.b16 %v2483, %v2482
    %v2487 = vpack.c.b16 %v2485, %v2484
    %v2491 = vsel %vm91, %v2468, 0
    %2493 = vmatprep.subr.bf16.mxu0 0
    %2494 = vmatpush1.bf16.msra.mxu0 %v2486
    %2495 = vmatprep.subr.bf16.mxu0 0
    %2496 = vmatpush1.bf16.msra.mxu0 %v2487
    %2497 = vmatprep.subr.bf16.mxu0 0
    %2498 = vmatpush1.bf16.msra.mxu0 0
    %2499 = vmatprep.subr.bf16.mxu0 0
    %2500 = vmatpush1.bf16.msra.mxu0 0
    %2501 = vmatprep.subr.bf16.mxu0 0
    %2502 = vmatpush1.bf16.msra.mxu0 0
    %2503 = vmatprep.subr.bf16.mxu0 0
    %2504 = vmatpush1.bf16.msra.mxu0 0
    %2505 = vmatprep.subr.bf16.mxu0 0
    %2506 = vmatpush1.bf16.msra.mxu0 0
    %2507 = vmatprep.subr.bf16.mxu0 0
    %2508 = vmatpush1.bf16.msra.mxu0 0
    %2509 = vmatprep.subr.bf16.mxu0 0
    %2510 = vmatpush1.bf16.msra.mxu0 0
    %2511 = vmatprep.subr.bf16.mxu0 0
    %2512 = vmatpush1.bf16.msra.mxu0 0
    %2513 = vmatprep.subr.bf16.mxu0 0
    %2514 = vmatpush1.bf16.msra.mxu0 0
    %2515 = vmatprep.subr.bf16.mxu0 0
    %2516 = vmatpush1.bf16.msra.mxu0 0
    %2517 = vmatprep.subr.bf16.mxu0 0
    %2518 = vmatpush1.bf16.msra.mxu0 0
    %2519 = vmatprep.subr.bf16.mxu0 0
    %2520 = vmatpush1.bf16.msra.mxu0 0
    %2521 = vmatprep.subr.bf16.mxu0 0
    %2522 = vmatpush1.bf16.msra.mxu0 0
    %2523 = vmatprep.subr.bf16.mxu0 0
    %2524 = vmatpush1.bf16.msra.mxu0 0
    %2525 = vmatprep.mubr.bf16.mxu0 0
    %2526 = vmatmul.mubr.bf16.gmra.mrb[0].mxu0 %v2491
    %v2527 = vpop.f32.mrb[0].mxu0
    %v2528 = vadd.f32 %v2477, %v2527
    %v2529 = vpop.f32.mrb[0].mxu0
    %v2530 = vpop.f32.mrb[0].mxu0
    %v2531 = vadd.f32 %v2477, %v2530
    %v2532 = vpop.f32.mrb[0].mxu0
    %2533 = vdwg.mxu0
    %v2534 = vadd.f32 %v1470, %v2528
    %v2535 = vadd.f32 %v1471, %v2531
    %v2536 = vsel %vm91, %v2534, 0.0
    %2537 = vadd.xlane.f32.xlu0 %v2536
    %v2538 = vpop.xlane.xlu0 %2537
    %v2539 = vsel %vm91, %v2535, 0.0
    %2540 = vadd.xlane.f32.xlu0 %v2539
    %v2541 = vpop.xlane.xlu0 %2540
    %v2542 = vmul.f32 %v2538, %v98
    %v2543 = vmul.f32 %v2541, %v98
    %v2544 = vsub.f32 %v2534, %v2542
    %v2545 = vsub.f32 %v2535, %v2543
    %v2546 = vmul.f32 %v2544, %v2544
    %v2547 = vmul.f32 %v2545, %v2545
    %v2548 = vsel %vm91, %v2546, 0.0
    %2549 = vadd.xlane.f32.xlu0 %v2548
    %v2550 = vpop.xlane.xlu0 %2549
    %v2551 = vsel %vm91, %v2547, 0.0
    %2552 = vadd.xlane.f32.xlu0 %v2551
    %v2553 = vpop.xlane.xlu0 %2552
    %v2554 = vmul.f32 %v2550, %v98
    %v2555 = vmul.f32 %v2553, %v98
    %v2556 = vadd.f32 %v2554, 1e-12
    %v2557 = vadd.f32 %v2555, 1e-12
    %v2558 = vrsqrt.pop %v2556
    %v2559 = vrsqrt.pop %v2557
    %v2560 = vmul.f32 %v2544, %v2558
    %v2561 = vmul.f32 %v2545, %v2559
    %v2562 = vlaneseq
    %v2563 = vshrl.u32 %v2562, 7
    %v2564 = vsub.s32 2, %v2563
    %v2565 = vrot.slane %v1473, %v2564
    %v2566 = vmul.f32 %v2560, %v2565
    %v2567 = vmul.f32 %v2561, %v2565
    %v2568 = vlaneseq
    %v2569 = vshrl.u32 %v2568, 7
    %v2570 = vsub.s32 3, %v2569
    %v2571 = vrot.slane %v1473, %v2570
    %v2572 = vadd.f32 %v2566, %v2571
    %v2573 = vadd.f32 %v2567, %v2571
    %v2574 = vpack.c.bf16 %v2573, %v2572
    %s2575 = scalar_lea.vmem %s5, 16
    %v2576 = vld [vmem:[%s2575] sm:$0xf]
    %v2577 = vld [vmem:[%s2575 + $0x4] sm:$0xf]
    %v2578 = vld [vmem:[%s2575 + $0x8] sm:$0xf]
    %v2579 = vld [vmem:[%s2575 + $0xc] sm:$0xf]
    %v2580 = vlaneseq
    %v2581 = vshrl.u32 %v2580, 7
    %v2582 = vsub.s32 4, %v2581
    %v2583 = vrot.slane %v1473, %v2582
    %v2588 = vunpack.c.l.b16 %v2576
    %v2589 = vunpack.c.l.b16 %v2577
    %v2590 = vunpack.c.l.b16 %v2578
    %v2591 = vunpack.c.l.b16 %v2579
    %v2592 = vpack.c.b16 %v2589, %v2588
    %v2593 = vpack.c.b16 %v2591, %v2590
    %v2597 = vsel %vm91, %v2574, 0
    %2599 = vmatprep.subr.bf16.mxu0 0
    %2600 = vmatpush1.bf16.msra.mxu0 %v2592
    %2601 = vmatprep.subr.bf16.mxu0 0
    %2602 = vmatpush1.bf16.msra.mxu0 %v2593
    %2603 = vmatprep.subr.bf16.mxu0 0
    %2604 = vmatpush1.bf16.msra.mxu0 0
    %2605 = vmatprep.subr.bf16.mxu0 0
    %2606 = vmatpush1.bf16.msra.mxu0 0
    %2607 = vmatprep.subr.bf16.mxu0 0
    %2608 = vmatpush1.bf16.msra.mxu0 0
    %2609 = vmatprep.subr.bf16.mxu0 0
    %2610 = vmatpush1.bf16.msra.mxu0 0
    %2611 = vmatprep.subr.bf16.mxu0 0
    %2612 = vmatpush1.bf16.msra.mxu0 0
    %2613 = vmatprep.subr.bf16.mxu0 0
    %2614 = vmatpush1.bf16.msra.mxu0 0
    %2615 = vmatprep.subr.bf16.mxu0 0
    %2616 = vmatpush1.bf16.msra.mxu0 0
    %2617 = vmatprep.subr.bf16.mxu0 0
    %2618 = vmatpush1.bf16.msra.mxu0 0
    %2619 = vmatprep.subr.bf16.mxu0 0
    %2620 = vmatpush1.bf16.msra.mxu0 0
    %2621 = vmatprep.subr.bf16.mxu0 0
    %2622 = vmatpush1.bf16.msra.mxu0 0
    %2623 = vmatprep.subr.bf16.mxu0 0
    %2624 = vmatpush1.bf16.msra.mxu0 0
    %2625 = vmatprep.subr.bf16.mxu0 0
    %2626 = vmatpush1.bf16.msra.mxu0 0
    %2627 = vmatprep.subr.bf16.mxu0 0
    %2628 = vmatpush1.bf16.msra.mxu0 0
    %2629 = vmatprep.subr.bf16.mxu0 0
    %2630 = vmatpush1.bf16.msra.mxu0 0
    %2631 = vmatprep.mubr.bf16.mxu0 0
    %2632 = vmatmul.mubr.bf16.gmra.mrb[0].mxu0 %v2597
    %v2633 = vpop.f32.mrb[0].mxu0
    %v2634 = vadd.f32 %v2583, %v2633
    %v2635 = vpop.f32.mrb[0].mxu0
    %v2636 = vpop.f32.mrb[0].mxu0
    %v2637 = vadd.f32 %v2583, %v2636
    %v2638 = vpop.f32.mrb[0].mxu0
    %2639 = vdwg.mxu0
    %v2640 = vmul.f32 %v2634, 0.5
    %v2641 = vmul.f32 %v2637, 0.5
    %v2642 = vmul.f32 %v2634, 0.044715
    %v2643 = vmul.f32 %v2637, 0.044715
    %v2644 = vmul.f32 %v2642, %v2634
    %v2645 = vmul.f32 %v2643, %v2637
    %v2646 = vmul.f32 %v2644, %v2634
    %v2647 = vmul.f32 %v2645, %v2637
    %v2648 = vadd.f32 %v2634, %v2646
    %v2649 = vadd.f32 %v2637, %v2647
    %v2650 = vmul.f32 %v2648, 0.7978846
    %v2651 = vmul.f32 %v2649, 0.7978846
    %v2652 = vtanh.pop %v2650
    %v2653 = vtanh.pop %v2651
    %v2654 = vadd.f32 %v2652, 1.0
    %v2655 = vadd.f32 %v2653, 1.0
    %v2656 = vmul.f32 %v2640, %v2654
    %v2657 = vmul.f32 %v2641, %v2655
    %v2658 = vpack.c.bf16 %v2657, %v2656
    %s2659 = scalar_lea.vmem %s6, 32
    %v2660 = vld [vmem:[%s2659] sm:$0xf]
    %v2661 = vld [vmem:[%s2659 + $0x4] sm:$0xf]
    %v2662 = vld [vmem:[%s2659 + $0x8] sm:$0xf]
    %v2663 = vld [vmem:[%s2659 + $0xc] sm:$0xf]
    %v2664 = vld [vmem:[%s2659 + $0x10] sm:$0xf]
    %v2665 = vld [vmem:[%s2659 + $0x14] sm:$0xf]
    %v2666 = vld [vmem:[%s2659 + $0x18] sm:$0xf]
    %v2667 = vld [vmem:[%s2659 + $0x1c] sm:$0xf]
    %v2668 = vlaneseq
    %v2669 = vshrl.u32 %v2668, 7
    %v2670 = vsub.s32 5, %v2669
    %v2671 = vrot.slane %v1473, %v2670
    %v2680 = vunpack.c.l.b16 %v2660
    %v2681 = vunpack.c.l.b16 %v2661
    %v2682 = vunpack.c.l.b16 %v2662
    %v2683 = vunpack.c.l.b16 %v2663
    %v2684 = vunpack.c.l.b16 %v2664
    %v2685 = vunpack.c.l.b16 %v2665
    %v2686 = vunpack.c.l.b16 %v2666
    %v2687 = vunpack.c.l.b16 %v2667
    %v2688 = vpack.c.b16 %v2681, %v2680
    %v2689 = vpack.c.b16 %v2683, %v2682
    %v2690 = vpack.c.b16 %v2685, %v2684
    %v2691 = vpack.c.b16 %v2687, %v2686
    %v2697 = vsel %vm1387, %v2658, 0
    %2699 = vmatprep.subr.bf16.mxu0 0
    %2700 = vmatpush1.bf16.msra.mxu0 %v2688
    %2701 = vmatprep.subr.bf16.mxu0 0
    %2702 = vmatpush1.bf16.msra.mxu0 %v2689
    %2703 = vmatprep.subr.bf16.mxu0 0
    %2704 = vmatpush1.bf16.msra.mxu0 %v2690
    %2705 = vmatprep.subr.bf16.mxu0 0
    %2706 = vmatpush1.bf16.msra.mxu0 %v2691
    %2707 = vmatprep.subr.bf16.mxu0 0
    %2708 = vmatpush1.bf16.msra.mxu0 0
    %2709 = vmatprep.subr.bf16.mxu0 0
    %2710 = vmatpush1.bf16.msra.mxu0 0
    %2711 = vmatprep.subr.bf16.mxu0 0
    %2712 = vmatpush1.bf16.msra.mxu0 0
    %2713 = vmatprep.subr.bf16.mxu0 0
    %2714 = vmatpush1.bf16.msra.mxu0 0
    %2715 = vmatprep.subr.bf16.mxu0 0
    %2716 = vmatpush1.bf16.msra.mxu0 0
    %2717 = vmatprep.subr.bf16.mxu0 0
    %2718 = vmatpush1.bf16.msra.mxu0 0
    %2719 = vmatprep.subr.bf16.mxu0 0
    %2720 = vmatpush1.bf16.msra.mxu0 0
    %2721 = vmatprep.subr.bf16.mxu0 0
    %2722 = vmatpush1.bf16.msra.mxu0 0
    %2723 = vmatprep.subr.bf16.mxu0 0
    %2724 = vmatpush1.bf16.msra.mxu0 0
    %2725 = vmatprep.subr.bf16.mxu0 0
    %2726 = vmatpush1.bf16.msra.mxu0 0
    %2727 = vmatprep.subr.bf16.mxu0 0
    %2728 = vmatpush1.bf16.msra.mxu0 0
    %2729 = vmatprep.subr.bf16.mxu0 0
    %2730 = vmatpush1.bf16.msra.mxu0 0
    %2731 = vmatprep.mubr.bf16.mxu0 0
    %2732 = vmatmul.mubr.bf16.gmra.mrb[0].mxu0 %v2697
    %v2733 = vpop.f32.mrb[0].mxu0
    %v2734 = vadd.f32 %v2671, %v2733
    %v2735 = vpop.f32.mrb[0].mxu0
    %v2736 = vpop.f32.mrb[0].mxu0
    %v2737 = vadd.f32 %v2671, %v2736
    %v2738 = vpop.f32.mrb[0].mxu0
    %2739 = vdwg.mxu0
    %v2740 = vadd.f32 %v2572, %v2734
    %v2741 = vadd.f32 %v2573, %v2737
    %v2742 = vsel %vm91, %v2740, 0.0
    %2743 = vadd.xlane.f32.xlu0 %v2742
    %v2744 = vpop.xlane.xlu0 %2743
    %v2745 = vsel %vm91, %v2741, 0.0
    %2746 = vadd.xlane.f32.xlu0 %v2745
    %v2747 = vpop.xlane.xlu0 %2746
    %v2748 = vmul.f32 %v2744, %v98
    %v2749 = vmul.f32 %v2747, %v98
    %v2750 = vsub.f32 %v2740, %v2748
    %v2751 = vsub.f32 %v2741, %v2749
    %v2752 = vmul.f32 %v2750, %v2750
    %v2753 = vmul.f32 %v2751, %v2751
    %v2754 = vsel %vm91, %v2752, 0.0
    %2755 = vadd.xlane.f32.xlu0 %v2754
    %v2756 = vpop.xlane.xlu0 %2755
    %v2757 = vsel %vm91, %v2753, 0.0
    %2758 = vadd.xlane.f32.xlu0 %v2757
    %v2759 = vpop.xlane.xlu0 %2758
    %v2760 = vmul.f32 %v2756, %v98
    %v2761 = vmul.f32 %v2759, %v98
    %v2762 = vadd.f32 %v2760, 1e-12
    %v2763 = vadd.f32 %v2761, 1e-12
    %v2764 = vrsqrt.pop %v2762
    %v2765 = vrsqrt.pop %v2763
    %v2766 = vmul.f32 %v2750, %v2764
    %v2767 = vmul.f32 %v2751, %v2765
    %v2768 = vlaneseq
    %v2769 = vshrl.u32 %v2768, 7
    %v2770 = vsub.s32 6, %v2769
    %v2771 = vrot.slane %v1473, %v2770
    %v2772 = vmul.f32 %v2766, %v2771
    %v2773 = vmul.f32 %v2767, %v2771
    %v2774 = vlaneseq
    %v2775 = vshrl.u32 %v2774, 7
    %v2776 = vsub.s32 7, %v2775
    %v2777 = vrot.slane %v1473, %v2776
    %v2778 = vadd.f32 %v2772, %v2777
    %v2779 = vadd.f32 %v2773, %v2777
    %v2780 = vpack.c.bf16 %v2778, %v2778
    %v2781 = vpack.c.bf16 %v2779, %v2779
    %v2782 = vld [vmem:[%s7] sm:$0xf]
    %v2783 = vld [vmem:[%s7 + $0x4] sm:$0xf]
    %v2784 = vld [vmem:[%s7 + $0x8] sm:$0xf]
    %v2785 = vld [vmem:[%s7 + $0xc] sm:$0xf]
    %v2786 = vlaneseq
    %v2787 = vshrl.u32 %v2786, 7
    %v2788 = vsub.s32 2, %v2787
    %v2789 = vrot.slane %v87, %v2788
    %v2792 = vunpack.c.l.b16 %v2780
    %v2793 = vunpack.c.l.b16 %v2781
    %v2794 = vrot.slane %v2793, 7
    %vm2795 = vcmask 1041409
    %v2796 = vsel %vm2795, %v2794, %v2792
    %v2797 = vpack.c.b16 %v2796, %v2796
    %v2802 = vunpack.c.l.b16 %v2782
    %v2803 = vunpack.c.l.b16 %v2783
    %v2804 = vunpack.c.l.b16 %v2784
    %v2805 = vunpack.c.l.b16 %v2785
    %v2806 = vpack.c.b16 %v2803, %v2802
    %v2807 = vpack.c.b16 %v2805, %v2804
    %v2811 = vsel %vm91, %v2797, 0
    %2813 = vmatprep.subr.bf16.mxu0 0
    %2814 = vmatpush1.bf16.msra.mxu0 %v2806
    %2815 = vmatprep.subr.bf16.mxu0 0
    %2816 = vmatpush1.bf16.msra.mxu0 %v2807
    %2817 = vmatprep.subr.bf16.mxu0 0
    %2818 = vmatpush1.bf16.msra.mxu0 0
    %2819 = vmatprep.subr.bf16.mxu0 0
    %2820 = vmatpush1.bf16.msra.mxu0 0
    %2821 = vmatprep.subr.bf16.mxu0 0
    %2822 = vmatpush1.bf16.msra.mxu0 0
    %2823 = vmatprep.subr.bf16.mxu0 0
    %2824 = vmatpush1.bf16.msra.mxu0 0
    %2825 = vmatprep.subr.bf16.mxu0 0
    %2826 = vmatpush1.bf16.msra.mxu0 0
    %2827 = vmatprep.subr.bf16.mxu0 0
    %2828 = vmatpush1.bf16.msra.mxu0 0
    %2829 = vmatprep.subr.bf16.mxu0 0
    %2830 = vmatpush1.bf16.msra.mxu0 0
    %2831 = vmatprep.subr.bf16.mxu0 0
    %2832 = vmatpush1.bf16.msra.mxu0 0
    %2833 = vmatprep.subr.bf16.mxu0 0
    %2834 = vmatpush1.bf16.msra.mxu0 0
    %2835 = vmatprep.subr.bf16.mxu0 0
    %2836 = vmatpush1.bf16.msra.mxu0 0
    %2837 = vmatprep.subr.bf16.mxu0 0
    %2838 = vmatpush1.bf16.msra.mxu0 0
    %2839 = vmatprep.subr.bf16.mxu0 0
    %2840 = vmatpush1.bf16.msra.mxu0 0
    %2841 = vmatprep.subr.bf16.mxu0 0
    %2842 = vmatpush1.bf16.msra.mxu0 0
    %2843 = vmatprep.subr.bf16.mxu0 0
    %2844 = vmatpush1.bf16.msra.mxu0 0
    %2845 = vmatprep.mubr.bf16.mxu0 0
    %2846 = vmatmul.mubr.bf16.gmra.mrb[0].mxu0 %v2811
    %v2847 = vpop.f32.mrb[0].mxu0
    %v2848 = vadd.f32 %v2789, %v2847
    %v2849 = vpop.f32.mrb[0].mxu0
    %v2850 = vpop.f32.mrb[0].mxu0
    %v2851 = vpop.f32.mrb[0].mxu0
    %2852 = vdwg.mxu0
    %v2853 = vtanh.pop %v2848
    %v2854 = vpack.c.bf16 %v2853, %v2853
    %v2855 = vld [vmem:[#allocation8] sm:$0xf]
    %v2856 = vld [vmem:[#allocation8 + $0x4] sm:$0xf]
    %v2857 = vld [vmem:[#allocation8 + $0x8] sm:$0xf]
    %v2858 = vld [vmem:[#allocation8 + $0xc] sm:$0xf]
    %v2859 = vlaneseq
    %v2860 = vshrl.u32 %v2859, 7
    %v2861 = vsub.s32 3, %v2860
    %v2862 = vrot.slane %v87, %v2861
    %v2867 = vunpack.c.l.b16 %v2855
    %v2868 = vunpack.c.l.b16 %v2856
    %v2869 = vunpack.c.l.b16 %v2857
    %v2870 = vunpack.c.l.b16 %v2858
    %v2871 = vpack.c.b16 %v2868, %v2867
    %v2872 = vpack.c.b16 %v2870, %v2869
    %v2876 = vsel %vm91, %v2854, 0
    %2878 = vmatprep.subr.bf16.mxu0 0
    %2879 = vmatpush1.bf16.msra.mxu0 %v2871
    %2880 = vmatprep.subr.bf16.mxu0 0
    %2881 = vmatpush1.bf16.msra.mxu0 %v2872
    %2882 = vmatprep.subr.bf16.mxu0 0
    %2883 = vmatpush1.bf16.msra.mxu0 0
    %2884 = vmatprep.subr.bf16.mxu0 0
    %2885 = vmatpush1.bf16.msra.mxu0 0
    %2886 = vmatprep.subr.bf16.mxu0 0
    %2887 = vmatpush1.bf16.msra.mxu0 0
    %2888 = vmatprep.subr.bf16.mxu0 0
    %2889 = vmatpush1.bf16.msra.mxu0 0
    %2890 = vmatprep.subr.bf16.mxu0 0
    %2891 = vmatpush1.bf16.msra.mxu0 0
    %2892 = vmatprep.subr.bf16.mxu0 0
    %2893 = vmatpush1.bf16.msra.mxu0 0
    %2894 = vmatprep.subr.bf16.mxu0 0
    %2895 = vmatpush1.bf16.msra.mxu0 0
    %2896 = vmatprep.subr.bf16.mxu0 0
    %2897 = vmatpush1.bf16.msra.mxu0 0
    %2898 = vmatprep.subr.bf16.mxu0 0
    %2899 = vmatpush1.bf16.msra.mxu0 0
    %2900 = vmatprep.subr.bf16.mxu0 0
    %2901 = vmatpush1.bf16.msra.mxu0 0
    %2902 = vmatprep.subr.bf16.mxu0 0
    %2903 = vmatpush1.bf16.msra.mxu0 0
    %2904 = vmatprep.subr.bf16.mxu0 0
    %2905 = vmatpush1.bf16.msra.mxu0 0
    %2906 = vmatprep.subr.bf16.mxu0 0
    %2907 = vmatpush1.bf16.msra.mxu0 0
    %2908 = vmatprep.subr.bf16.mxu0 0
    %2909 = vmatpush1.bf16.msra.mxu0 0
    %2910 = vmatprep.mubr.bf16.mxu0 0
    %2911 = vmatmul.mubr.bf16.gmra.mrb[0].mxu0 %v2876
    %v2912 = vpop.f32.mrb[0].mxu0
    %v2913 = vadd.f32 %v2862, %v2912
    %v2914 = vpop.f32.mrb[0].mxu0
    %v2915 = vpop.f32.mrb[0].mxu0
    %v2916 = vpop.f32.mrb[0].mxu0
    %2917 = vdwg.mxu0
    %2918 = vst [vmem:[#allocation10] sm:$0x3] %v2913
    // Predicated region
    $region54: #{tpu_custom_call.1} parent=1 // pred_check
      _
    $region55: #{tpu_custom_call.1} parent=1 // pred_check_branch
      %2920 = sbr.rel (0) target = $region57
    $region56: #{tpu_custom_call.1} parent=1 // pred_region
      %s2922 = ssub.s32 32, 32
      %2923 = vsyncadd [#allocation4], %s2922
      %s2925 = sshll.u32 [#allocation10], 4
      %s2926 = int_to_ptr.vmem [resolvable:$true] %s2925
      %2928 = dma.vmem_to_hbm [thread:$0]  %s2926, 32, %s9, [#allocation4]
    $region57: #{tpu_custom_call.1} parent=1 // pred_fallthru
      _
    // Predicated region
    $region58: #{tpu_custom_call.1} parent=1 // pred_check
      _
    $region59: #{tpu_custom_call.1} parent=1 // pred_check_branch
      %2930 = sbr.rel (0) target = $region61
    $region60: #{tpu_custom_call.1} parent=1 // pred_region
      %2931 = dma.done [#allocation4], 32
    $region61: #{tpu_custom_call.1} parent=1 // pred_fallthru
      _
    %2932 = vsyncpa [#allocation3], 1
    %2933 = vsyncpa [#allocation6], 1
    %2934 = vsyncpa [#allocation9], 1
    %2935 = vsyncpa [#allocation4], 1

</llo_original>
